<compile_context>
chip_gen: v5e
topology: v5e:2x2
jax: 0.10.0
libtpu: 0.0.40
codegen_flags: <defaults>
</compile_context>

<pallas_src>
import functools
from typing import NamedTuple

import numpy as np
import jax
import jax.numpy as jnp
from jax import lax
from jax.experimental import pallas as pl
from jax.experimental.pallas import tpu as pltpu

BN_EPS = 1e-5
_VMEM_LIMIT = 40 * 1024 * 1024


def _round_up(x, m):
    return -(-x // m) * m


def _cpad(c):
    # lane-pad small channel tails (16, 3) to 128 so every store is lane-dense;
    # padded channels are zero-weighted and stay exactly 0 end-to-end.
    return max(c, 128)


def _choose_tck(k):
    # Largest lane-legal (multiple-of-128) K tile that still gives >= 2
    # pipelined reduction steps.  K values in this net:
    #   1920 -> 384 (5 steps), 1024 -> 256 (4), 512 -> 256 (2), 384 -> 128 (3)
    for t in (384, 256, 128):
        if k % t == 0 and k // t >= 2:
            return t
    return k


# ----------------------------------------------------------------------------
# Flat activation layout (kept end-to-end between conv layers)
# ----------------------------------------------------------------------------
# data[(n*Hp + y + 1)*Wp + (x + 1), c] = pixel (n, y, x, c)   and 0 elsewhere,
# with Hp = H + 2 and Wp = round_up(W + 2, 8).  The zero border doubles as the
# conv "same" padding, so a layer's masked output feeds the next layer (and
# residual adds) directly with no reshape / slice / re-pad in between.
class FlatAct(NamedTuple):
    data: jax.Array          # (N*Hp*Wp, C) bf16
    n: int
    h: int
    w: int


def _hp_wp(h, w):
    return h + 2, _round_up(w + 2, 8)


def to_flat(x):
    n, h, w, c = x.shape
    hp, wp = _hp_wp(h, w)
    xp = jnp.pad(x.astype(jnp.bfloat16),
                 ((0, 0), (1, 1), (1, wp - w - 1), (0, 0)))
    return FlatAct(xp.reshape(n * hp * wp, c), n, h, w)


def from_flat(a):
    hp, wp = _hp_wp(a.h, a.w)
    c = a.data.shape[1]
    return a.data.reshape(a.n, hp, wp, c)[:, 1:1 + a.h, 1:1 + a.w, :]


def upsample_flat(a, s):
    # TODO(synk): fold the 2x nearest upsample into the LHS construction.
    if s == 1:
        return a
    x = from_flat(a)
    x = jnp.repeat(jnp.repeat(x, s, axis=1), s, axis=2)
    return to_flat(x)


# ----------------------------------------------------------------------------
# Fused conv3x3 + [bias | train-BN] + residual + activation kernel
# ----------------------------------------------------------------------------
def _flat_mask(m_out, n_img, hp, wp, h_img, w_img):
    """Validity mask over the flat row index (1 = real pixel, 0 = padding).

    Built from a row iota using only multiply / shift / compare ops (the
    division by Wp uses an exact magic multiply for this value range), so it
    costs a handful of VPU ops - no DMA, no VMEM slab, no vector div/rem.
    """
    r = lax.broadcasted_iota(jnp.int32, (m_out, 1), 0)
    shift = 20
    magic = (1 << shift) // wp + 1        # exact: r * (magic*wp - 2^20) < 2^20
    q = (r * magic) >> shift              # q = r // wp  (global row index)
    col = r - q * wp                      # r % wp       (column index)
    col_ok = (col >= 1) & (col <= w_img)
    row_ok = jnp.zeros_like(col_ok)
    for i in range(n_img):                # n_img is tiny and static
        row_ok = row_ok | ((q >= i * hp + 1) & (q <= i * hp + h_img))
    return (col_ok & row_ok).astype(jnp.float32)


def _conv_bn_act_kernel(x_ref, w_ref, *rest, n_img, hp, wp, h_img, w_img,
                        count, act, apply_bn, has_res):
    """One K-chunk of: 3x3 conv (3 full-width MXU matmuls) + epilogue.

    x_ref : (Mi, tck)        bf16  column-pre-shifted LHS K-chunk
    w_ref : (3, tck, Coutp)  bf16  per-ky packed weight K-chunk
    rest  : (gamma, beta) if BN else (bias,), optional residual (M_out,Coutp),
            output (M_out, Coutp) bf16, f32 accumulator scratch.
    Grid axis 0 = K reduction chunks ("arbitrary"); epilogue on the last step.
    """
    if apply_bn:
        g_ref, bt_ref = rest[0], rest[1]
        nxt = 2
    else:
        b_ref = rest[0]
        nxt = 1
    if has_res:
        r_ref = rest[nxt]
        nxt += 1
    o_ref, acc_ref = rest[nxt], rest[nxt + 1]

    k = pl.program_id(0)
    m_out = o_ref.shape[0]

    xv = x_ref[...]                                    # (Mi, tck) bf16
    part = None
    for ky in range(3):                                # 3 full-N-width matmuls
        p = jnp.dot(xv, w_ref[ky], preferred_element_type=jnp.float32)
        ps = p[ky * wp:ky * wp + m_out, :]             # aligned (x8) row shift
        part = ps if part is None else part + ps

    @pl.when(k == 0)
    def _():
        acc_ref[...] = part

    @pl.when(k > 0)
    def _():
        acc_ref[...] += part

    @pl.when(k == pl.num_programs(0) - 1)
    def _():
        y = acc_ref[...]
        mask = _flat_mask(m_out, n_img, hp, wp, h_img, w_img)
        if apply_bn:
            # Training-mode BatchNorm over the N*H*W valid pixels.  The conv
            # bias (if any) is skipped: mean subtraction cancels it exactly.
            inv = 1.0 / count
            mean = jnp.sum(y * mask, axis=0, keepdims=True) * inv
            cen = (y - mean) * mask                    # two-pass variance
            var = jnp.sum(cen * cen, axis=0, keepdims=True) * inv
            scale = g_ref[...] * lax.rsqrt(var + BN_EPS)
            y = y * scale + (bt_ref[...] - mean * scale)
        else:
            y = y + b_ref[...]
        if has_res:
            y = y + r_ref[...].astype(jnp.float32)
        if act == "relu":
            y = jnp.maximum(y, 0.0)
        elif act == "sigmoid":
            y = jax.nn.sigmoid(y)
        o_ref[...] = (y * mask).astype(o_ref.dtype)    # keep pad exactly 0


def conv_bn_act(xa, conv, bn, *, act, residual=None):
    """Fused 3x3/s1/p1 conv + bias|(train)BN + residual + activation.

    xa / residual / return value all use the flat padded layout (FlatAct).
    conv = {"w": (3, K, Coutp) bf16 packed weights, "b": (1, Coutp) f32}.
    """
    n, h, w = xa.n, xa.h, xa.w
    hp, wp = _hp_wp(h, w)
    m_out = n * hp * wp
    mi = m_out + 2 * wp
    cinp = xa.data.shape[1]

    wgt = conv["w"].astype(jnp.bfloat16)
    kdim, coutp = wgt.shape[1], wgt.shape[2]
    assert kdim == _round_up(3 * cinp, 128), (kdim, cinp)

    # Column-pre-shifted LHS (one XLA fusion):
    #   lhs[s, kx*Cin + c] = x_flat[s - Wp - 1 + kx, c]
    # so every remaining in-kernel tap offset is ky*Wp (a multiple of 8).
    xpad = jnp.pad(xa.data, ((wp + 1, wp + 1), (0, 0)))
    lhs = jnp.concatenate([xpad[kx:kx + mi] for kx in range(3)], axis=1)
    if kdim > 3 * cinp:
        lhs = jnp.pad(lhs, ((0, 0), (0, kdim - 3 * cinp)))

    tck = _choose_tck(kdim)
    nk = kdim // tck
    apply_bn = bn is not None
    has_res = residual is not None

    in_specs = [pl.BlockSpec((mi, tck), lambda k: (0, k)),         # LHS chunks
                pl.BlockSpec((3, tck, coutp), lambda k: (0, k, 0))]  # W chunks
    args = [lhs, wgt]
    if apply_bn:
        in_specs += [pl.BlockSpec((1, coutp), lambda k: (0, 0)),
                     pl.BlockSpec((1, coutp), lambda k: (0, 0))]
        args += [bn["gamma"].astype(jnp.float32),
                 bn["beta"].astype(jnp.float32)]
    else:
        in_specs.append(pl.BlockSpec((1, coutp), lambda k: (0, 0)))
        args.append(conv["b"].astype(jnp.float32))
    if has_res:
        in_specs.append(pl.BlockSpec((m_out, coutp), lambda k: (0, 0)))
        args.append(residual.data.astype(jnp.bfloat16))

    kern = functools.partial(
        _conv_bn_act_kernel, n_img=n, hp=hp, wp=wp, h_img=h, w_img=w,
        count=float(n * h * w), act=act, apply_bn=apply_bn, has_res=has_res)

    out = pl.pallas_call(
        kern,
        out_shape=jax.ShapeDtypeStruct((m_out, coutp), jnp.bfloat16),
        grid=(nk,),
        in_specs=in_specs,
        out_specs=pl.BlockSpec((m_out, coutp), lambda k: (0, 0)),
        scratch_shapes=[pltpu.VMEM((m_out, coutp), jnp.float32)],
        compiler_params=pltpu.CompilerParams(
            dimension_semantics=("arbitrary",),
            vmem_limit_bytes=_VMEM_LIMIT),
    )(*args)

    return FlatAct(out, n, h, w)


# ----------------------------------------------------------------------------
# Parameter packing / construction (deterministic, synthetic)
# ----------------------------------------------------------------------------
def pack_conv(raw_w, bias_vec):
    """raw_w: (3,3,Cin,Cout) f32 HWIO -> packed (3, K, Coutp) bf16 weights."""
    cin, cout = raw_w.shape[2], raw_w.shape[3]
    cinp, coutp = _cpad(cin), _cpad(cout)
    kdim = _round_up(3 * cinp, 128)
    w = jnp.zeros((3, 3, cinp, coutp), jnp.float32).at[:, :, :cin, :cout].set(raw_w)
    w = w.reshape(3, 3 * cinp, coutp)
    w = jnp.pad(w, ((0, 0), (0, kdim - 3 * cinp), (0, 0))).astype(jnp.bfloat16)
    b = jnp.zeros((1, coutp), jnp.float32)
    if bias_vec is not None:
        b = b.at[:, :cout].set(bias_vec)
    return {"w": w, "b": b}


def init_conv(key, cin, cout, bias):
    kw, kb = jax.random.split(key)
    raw = (jax.random.normal(kw, (3, 3, cin, cout), jnp.float32)
           * np.sqrt(2.0 / (9 * cin)))
    bvec = (0.01 * jax.random.normal(kb, (cout,), jnp.float32)) if bias else None
    return pack_conv(raw, bvec)


def init_bn(c):
    cp = _cpad(c)
    return {"gamma": jnp.ones((1, cp), jnp.float32),
            "beta": jnp.zeros((1, cp), jnp.float32)}


def wrn_dec_plan(depth=28, widen_factor=10):
    assert (depth - 4) % 6 == 0, "Wide-resnet depth should be 6n+4"
    n = (depth - 4) // 6
    k = widen_factor
    nstages = [16, 16 * k, 32 * k, 64 * k]
    in_planes = 64 * k
    plan = []
    for name, planes, outn, stride in (("layer3", nstages[3], nstages[2], 2),
                                       ("layer2", nstages[2], nstages[1], 2),
                                       ("layer1", nstages[1], nstages[0], 1)):
        strides = [stride] + [1] * (n - 1)
        blocks = []
        for i, s in enumerate(reversed(strides)):
            if i == 3:
                planes = outn
            blocks.append((in_planes, planes, s))
            in_planes = planes
        plan.append((name, tuple(blocks)))
    return tuple(plan), in_planes, nstages[0]


def init_block(key, cin, cout, stride):
    proj = (stride != 1) or (cin != cout)
    ks = jax.random.split(key, 3)
    p = {"conv2": init_conv(ks[0], cin, cin, bias=False),
         "bn2": init_bn(cin),
         # conv1 is ResizeConv2d (bias=True) when proj, bias-free conv otherwise
         "conv1": init_conv(ks[1], cin, cout, bias=proj),
         "bn1": init_bn(cout)}
    if proj:
        p["sc_conv"] = init_conv(ks[2], cin, cout, bias=True)
        p["sc_bn"] = init_bn(cout)
    return p


def init_params(key, plan, nc=3, n0=16):
    params = {}
    keys = jax.random.split(key, len(plan) + 1)
    for (name, blocks), lk in zip(plan, keys[:-1]):
        bkeys = jax.random.split(lk, len(blocks))
        params[name] = [init_block(bk, cin, cout, s)
                        for bk, (cin, cout, s) in zip(bkeys, blocks)]
    params["conv1"] = init_conv(keys[-1], n0, nc, bias=True)
    return params


# ----------------------------------------------------------------------------
# Forward pass (mirrors BasicBlockDec / wideResNetDec.forward, train-mode BN)
# ----------------------------------------------------------------------------
def block_forward(x, p, stride):
    proj = "sc_conv" in p
    # out = relu(bn2(conv2(x)))
    h = conv_bn_act(x, p["conv2"], p["bn2"], act="relu")
    if proj:
        h_up = upsample_flat(h, stride)
        sc = conv_bn_act(upsample_flat(x, stride), p["sc_conv"], p["sc_bn"],
                         act="none")
        out = conv_bn_act(h_up, p["conv1"], p["bn1"], act="relu", residual=sc)
    else:
        out = conv_bn_act(h, p["conv1"], p["bn1"], act="relu", residual=x)
    # out = relu(bn1(conv1(out)) + shortcut(x))
    return out


def wide_resnet_dec_forward(z, params, plan):
    b = z.shape[0]
    # x = z.view(B, 640, 1, 1); F.interpolate(scale_factor=8, mode='nearest')
    x = jnp.broadcast_to(z.reshape(b, 1, 1, z.shape[1]), (b, 8, 8, z.shape[1]))
    xa = to_flat(x)
    for name, blocks in plan:
        for (_, _, stride), p in zip(blocks, params[name]):
            xa = block_forward(xa, p, stride)
    # x = sigmoid(conv1(x)); conv1 = ResizeConv2d(16, 3, 3, scale_factor=1)
    ya = conv_bn_act(xa, params["conv1"], None, act="sigmoid")
    y = from_flat(ya)[..., :3].astype(jnp.float32)   # drop lane-pad channels
    return jnp.transpose(y, (0, 3, 1, 2))            # NCHW (B, 3, 32, 32)


# ----------------------------------------------------------------------------
# Pure-JAX reference (in-script self-check only)
# ----------------------------------------------------------------------------
def _reference_conv_bn_act(x, raw_w, bias_vec, bn_gb, *, act, residual=None):
    cout = raw_w.shape[-1]
    xf = x.astype(jnp.bfloat16).astype(jnp.float32)
    wf = raw_w.astype(jnp.bfloat16).astype(jnp.float32)
    y = lax.conv_general_dilated(
        xf, wf, window_strides=(1, 1), padding=((1, 1), (1, 1)),
        dimension_numbers=("NHWC", "HWIO", "NHWC"),
        precision=lax.Precision.HIGHEST)
    if bias_vec is not None:
        y = y + bias_vec.reshape(1, 1, 1, cout)
    if bn_gb is not None:
        g, bt = bn_gb
        mean = jnp.mean(y, axis=(0, 1, 2), keepdims=True)
        var = jnp.mean((y - mean) ** 2, axis=(0, 1, 2), keepdims=True)
        y = (g.reshape(1, 1, 1, cout) * (y - mean) * lax.rsqrt(var + BN_EPS)
             + bt.reshape(1, 1, 1, cout))
    if residual is not None:
        y = y + residual.astype(jnp.bfloat16).astype(jnp.float32)
    if act == "relu":
        y = jnp.maximum(y, 0.0)
    elif act == "sigmoid":
        y = jax.nn.sigmoid(y)
    return y


def _self_check():
    key = jax.random.PRNGKey(123)
    cases = (
        # n, h,  w,  cin, cout, act,       bn,    res,   bias
        (2, 8, 8, 128, 256, "relu", True, True, False),     # BN + residual
        (2, 8, 8, 128, 128, "none", True, False, False),    # shortcut path
        (2, 16, 16, 160, 160, "sigmoid", False, False, True),  # K-pad + bias
    )
    for (n, h, w, cin, cout, act, use_bn, use_res, use_bias) in cases:
        key, k1, k2, k3, k4, k5, k6 = jax.random.split(key, 7)
        coutp = _cpad(cout)
        x = jax.random.normal(k1, (n, h, w, cin), jnp.float32)
        raw_w = (jax.random.normal(k2, (3, 3, cin, cout), jnp.float32)
                 * np.sqrt(2.0 / (9 * cin)))
        bvec = (0.1 * jax.random.normal(k3, (cout,), jnp.float32)
                if use_bias else None)
        conv = pack_conv(raw_w, bvec)
        bn = bn_gb = None
        if use_bn:
            g = 1.0 + 0.1 * jax.random.normal(k4, (cout,), jnp.float32)
            bt = 0.1 * jax.random.normal(k5, (cout,), jnp.float32)
            bn = {"gamma": jnp.ones((1, coutp), jnp.float32).at[:, :cout].set(g),
                  "beta": jnp.zeros((1, coutp), jnp.float32).at[:, :cout].set(bt)}
            bn_gb = (g, bt)
        res_nhwc = (jax.random.normal(k6, (n, h, w, cout), jnp.float32)
                    if use_res else None)
        res_fa = None
        if use_res:
            res_fa = to_flat(jnp.pad(
                res_nhwc, ((0, 0), (0, 0), (0, 0), (0, coutp - cout))))
        got_fa = conv_bn_act(to_flat(x), conv, bn, act=act, residual=res_fa)
        got = from_flat(got_fa)[..., :cout].astype(jnp.float32)
        want = _reference_conv_bn_act(x, raw_w, bvec, bn_gb, act=act,
                                      residual=res_nhwc)
        np.testing.assert_allclose(np.asarray(got), np.asarray(want),
                                   rtol=3e-2, atol=3e-2)


# ----------------------------------------------------------------------------
if __name__ == "__main__":
    # Validate the fused kernel against a pure-JAX reference at small shapes.
    _self_check()

    key = jax.random.PRNGKey(0)
    pkey, zkey = jax.random.split(key)

    # WRN-28-10 decoder (the only configuration consistent with the hard-coded
    # 640-channel latent and 3x32x32 output of the reference forward()).
    plan, _, n0 = wrn_dec_plan(depth=28, widen_factor=10)
    params = init_params(pkey, plan, nc=3, n0=n0)

    B = 2
    z = jax.random.normal(zkey, (B, 640), jnp.float32)

    fwd = jax.jit(functools.partial(wide_resnet_dec_forward, plan=plan))
    out = jax.block_until_ready(fwd(z, params))

    assert out.shape == (B, 3, 32, 32), out.shape
    assert bool(jnp.all(jnp.isfinite(out)))
    assert bool(jnp.all((out >= 0.0) & (out <= 1.0)))   # post-sigmoid range
    print("KERNEL_OK")
</pallas_src>

<mosaic_0001>
module attributes {stable_mosaic.version = 11 : i64} {
  func.func @_conv_bn_act_kernel(%arg0: i32, %arg1: memref<352x128xbf16, #tpu.memory_space<vmem>>, %arg2: memref<3x128x256xbf16, #tpu.memory_space<vmem>>, %arg3: memref<1x256xf32, #tpu.memory_space<vmem>>, %arg4: memref<1x256xf32, #tpu.memory_space<vmem>>, %arg5: memref<320x256xbf16, #tpu.memory_space<vmem>>, %arg6: memref<320x256xbf16, #tpu.memory_space<vmem>>, %arg7: memref<320x256xf32, #tpu.memory_space<vmem>>) attributes {dimension_semantics = [#tpu.dimension_semantics<arbitrary>], iteration_bounds = array<i64: 3>, scalar_prefetch = 0 : i64, scratch_operands = 1 : i64, tpu.core_type = #tpu.core_type<tc>, window_params = [{transform_indices = @transform_0, window_bounds = array<i64: 352, 128>}, {transform_indices = @transform_1, window_bounds = array<i64: 3, 128, 256>}, {pipeline_mode = #tpu.pipeline_mode<synchronous>, transform_indices = @transform_2, window_bounds = array<i64: 1, 256>}, {pipeline_mode = #tpu.pipeline_mode<synchronous>, transform_indices = @transform_3, window_bounds = array<i64: 1, 256>}, {pipeline_mode = #tpu.pipeline_mode<synchronous>, transform_indices = @transform_4, window_bounds = array<i64: 320, 256>}, {pipeline_mode = #tpu.pipeline_mode<synchronous>, transform_indices = @transform_5, window_bounds = array<i64: 320, 256>}]} {
    %c0 = arith.constant 0 : index
    %c0_0 = arith.constant 0 : index
    %0 = vector.load %arg1[%c0, %c0_0] : memref<352x128xbf16, #tpu.memory_space<vmem>>, vector<352x128xbf16>
    %c0_1 = arith.constant 0 : index
    %c0_2 = arith.constant 0 : index
    %c0_3 = arith.constant 0 : index
    %1 = vector.load %arg2[%c0_1, %c0_2, %c0_3] : memref<3x128x256xbf16, #tpu.memory_space<vmem>>, vector<1x128x256xbf16>
    %2 = vector.shape_cast %1 : vector<1x128x256xbf16> to vector<128x256xbf16>
    %cst = arith.constant dense<0.000000e+00> : vector<352x256xf32>
    %3 = tpu.matmul %0, %2, %cst {dimension_numbers = #tpu.dot_dimension_numbers<[1], [0], [0], [1], [0, 0, 1, 1], [], []>} : vector<352x128xbf16>, vector<128x256xbf16>, vector<352x256xf32> -> vector<352x256xf32>
    %4 = vector.extract_strided_slice %3 {offsets = [0, 0], sizes = [320, 256], strides = [1, 1]} : vector<352x256xf32> to vector<320x256xf32>
    %c1 = arith.constant 1 : index
    %c0_4 = arith.constant 0 : index
    %c0_5 = arith.constant 0 : index
    %5 = vector.load %arg2[%c1, %c0_4, %c0_5] : memref<3x128x256xbf16, #tpu.memory_space<vmem>>, vector<1x128x256xbf16>
    %6 = vector.shape_cast %5 : vector<1x128x256xbf16> to vector<128x256xbf16>
    %cst_6 = arith.constant dense<0.000000e+00> : vector<352x256xf32>
    %7 = tpu.matmul %0, %6, %cst_6 {dimension_numbers = #tpu.dot_dimension_numbers<[1], [0], [0], [1], [0, 0, 1, 1], [], []>} : vector<352x128xbf16>, vector<128x256xbf16>, vector<352x256xf32> -> vector<352x256xf32>
    %8 = vector.extract_strided_slice %7 {offsets = [16, 0], sizes = [320, 256], strides = [1, 1]} : vector<352x256xf32> to vector<320x256xf32>
    %9 = arith.addf %4, %8 : vector<320x256xf32>
    %c2 = arith.constant 2 : index
    %c0_7 = arith.constant 0 : index
    %c0_8 = arith.constant 0 : index
    %10 = vector.load %arg2[%c2, %c0_7, %c0_8] : memref<3x128x256xbf16, #tpu.memory_space<vmem>>, vector<1x128x256xbf16>
    %11 = vector.shape_cast %10 : vector<1x128x256xbf16> to vector<128x256xbf16>
    %cst_9 = arith.constant dense<0.000000e+00> : vector<352x256xf32>
    %12 = tpu.matmul %0, %11, %cst_9 {dimension_numbers = #tpu.dot_dimension_numbers<[1], [0], [0], [1], [0, 0, 1, 1], [], []>} : vector<352x128xbf16>, vector<128x256xbf16>, vector<352x256xf32> -> vector<352x256xf32>
    %13 = vector.extract_strided_slice %12 {offsets = [32, 0], sizes = [320, 256], strides = [1, 1]} : vector<352x256xf32> to vector<320x256xf32>
    %14 = arith.addf %9, %13 : vector<320x256xf32>
    %c0_i32 = arith.constant 0 : i32
    %15 = arith.cmpi eq, %arg0, %c0_i32 : i32
    %16 = arith.extui %15 : i1 to i32
    %c0_i32_10 = arith.constant 0 : i32
    %17 = arith.cmpi ne, %16, %c0_i32_10 : i32
    scf.if %17 {
      %c0_14 = arith.constant 0 : index
      %c0_15 = arith.constant 0 : index
      %24 = vector.load %arg7[%c0_14, %c0_15] : memref<320x256xf32, #tpu.memory_space<vmem>>, vector<320x256xf32>
      tpu.vector_store %arg7[%c0_14, %c0_15], %14 {strides = array<i32>} : memref<320x256xf32, #tpu.memory_space<vmem>>, vector<320x256xf32>,
    } else {
    }
    %c0_i32_11 = arith.constant 0 : i32
    %18 = arith.cmpi sgt, %arg0, %c0_i32_11 : i32
    %19 = arith.extui %18 : i1 to i32
    %c0_i32_12 = arith.constant 0 : i32
    %20 = arith.cmpi ne, %19, %c0_i32_12 : i32
    scf.if %20 {
      %c0_14 = arith.constant 0 : index
      %c0_15 = arith.constant 0 : index
      %24 = vector.load %arg7[%c0_14, %c0_15] : memref<320x256xf32, #tpu.memory_space<vmem>>, vector<320x256xf32>
      %25 = arith.addf %24, %14 : vector<320x256xf32>
      %c0_16 = arith.constant 0 : index
      %c0_17 = arith.constant 0 : index
      %26 = vector.load %arg7[%c0_16, %c0_17] : memref<320x256xf32, #tpu.memory_space<vmem>>, vector<320x256xf32>
      tpu.vector_store %arg7[%c0_16, %c0_17], %25 {strides = array<i32>} : memref<320x256xf32, #tpu.memory_space<vmem>>, vector<320x256xf32>,
    } else {
    }
    %c2_i32 = arith.constant 2 : i32
    %21 = arith.cmpi eq, %arg0, %c2_i32 : i32
    %22 = arith.extui %21 : i1 to i32
    %c0_i32_13 = arith.constant 0 : i32
    %23 = arith.cmpi ne, %22, %c0_i32_13 : i32
    scf.if %23 {
      %c0_14 = arith.constant 0 : index
      %c0_15 = arith.constant 0 : index
      %24 = vector.load %arg7[%c0_14, %c0_15] : memref<320x256xf32, #tpu.memory_space<vmem>>, vector<320x256xf32>
      %25 = tpu.iota {dimensions = array<i32: 0>} : vector<320x1xi32>
      %c65537_i32 = arith.constant 65537 : i32
      %26 = vector.broadcast %c65537_i32 : i32 to vector<320x1xi32>
      %27 = arith.muli %25, %26 : vector<320x1xi32>
      %c20_i32 = arith.constant 20 : i32
      %28 = vector.broadcast %c20_i32 : i32 to vector<320x1xi32>
      %29 = arith.shrsi %27, %28 : vector<320x1xi32>
      %c16_i32 = arith.constant 16 : i32
      %30 = vector.broadcast %c16_i32 : i32 to vector<320x1xi32>
      %31 = arith.muli %29, %30 : vector<320x1xi32>
      %32 = arith.subi %25, %31 : vector<320x1xi32>
      %c1_i32 = arith.constant 1 : i32
      %33 = vector.broadcast %c1_i32 : i32 to vector<320x1xi32>
      %34 = arith.cmpi sge, %32, %33 : vector<320x1xi32>
      %c8_i32 = arith.constant 8 : i32
      %35 = vector.broadcast %c8_i32 : i32 to vector<320x1xi32>
      %36 = arith.cmpi sle, %32, %35 : vector<320x1xi32>
      %37 = arith.andi %34, %36 : vector<320x1xi1>
      %false = arith.constant false
      %38 = vector.broadcast %false : i1 to vector<320x1xi1>
      %c1_i32_16 = arith.constant 1 : i32
      %39 = vector.broadcast %c1_i32_16 : i32 to vector<320x1xi32>
      %40 = arith.cmpi sge, %29, %39 : vector<320x1xi32>
      %c8_i32_17 = arith.constant 8 : i32
      %41 = vector.broadcast %c8_i32_17 : i32 to vector<320x1xi32>
      %42 = arith.cmpi sle, %29, %41 : vector<320x1xi32>
      %43 = arith.andi %40, %42 : vector<320x1xi1>
      %44 = arith.ori %38, %43 : vector<320x1xi1>
      %c11_i32 = arith.constant 11 : i32
      %45 = vector.broadcast %c11_i32 : i32 to vector<320x1xi32>
      %46 = arith.cmpi sge, %29, %45 : vector<320x1xi32>
      %c18_i32 = arith.constant 18 : i32
      %47 = vector.broadcast %c18_i32 : i32 to vector<320x1xi32>
      %48 = arith.cmpi sle, %29, %47 : vector<320x1xi32>
      %49 = arith.andi %46, %48 : vector<320x1xi1>
      %50 = arith.ori %44, %49 : vector<320x1xi1>
      %51 = arith.andi %37, %50 : vector<320x1xi1>
      %52 = arith.extui %51 : vector<320x1xi1> to vector<320x1xi32>
      %53 = arith.sitofp %52 : vector<320x1xi32> to vector<320x1xf32>
      %54 = vector.broadcast %53 : vector<320x1xf32> to vector<320x256xf32>
      %55 = arith.mulf %24, %54 : vector<320x256xf32>
      %cst_18 = arith.constant dense<0.000000e+00> : vector<256xf32>
      %56 = vector.multi_reduction <add>, %55, %cst_18 [0] : vector<320x256xf32> to vector<256xf32>
      %57 = vector.shape_cast %56 : vector<256xf32> to vector<1x256xf32>
      %cst_19 = arith.constant 7.812500e-03 : f32
      %58 = vector.broadcast %cst_19 : f32 to vector<1x256xf32>
      %59 = arith.mulf %57, %58 : vector<1x256xf32>
      %60 = vector.broadcast %59 : vector<1x256xf32> to vector<320x256xf32>
      %61 = arith.subf %24, %60 : vector<320x256xf32>
      %62 = vector.broadcast %53 : vector<320x1xf32> to vector<320x256xf32>
      %63 = arith.mulf %61, %62 : vector<320x256xf32>
      %64 = arith.mulf %63, %63 : vector<320x256xf32>
      %cst_20 = arith.constant dense<0.000000e+00> : vector<256xf32>
      %65 = vector.multi_reduction <add>, %64, %cst_20 [0] : vector<320x256xf32> to vector<256xf32>
      %66 = vector.shape_cast %65 : vector<256xf32> to vector<1x256xf32>
      %cst_21 = arith.constant 7.812500e-03 : f32
      %67 = vector.broadcast %cst_21 : f32 to vector<1x256xf32>
      %68 = arith.mulf %66, %67 : vector<1x256xf32>
      %c0_22 = arith.constant 0 : index
      %c0_23 = arith.constant 0 : index
      %69 = vector.load %arg3[%c0_22, %c0_23] : memref<1x256xf32, #tpu.memory_space<vmem>>, vector<1x256xf32>
      %cst_24 = arith.constant 9.99999974E-6 : f32
      %70 = vector.broadcast %cst_24 : f32 to vector<1x256xf32>
      %71 = arith.addf %68, %70 : vector<1x256xf32>
      %72 = math.rsqrt %71 : vector<1x256xf32>
      %73 = arith.mulf %69, %72 : vector<1x256xf32>
      %74 = vector.broadcast %73 : vector<1x256xf32> to vector<320x256xf32>
      %75 = arith.mulf %24, %74 : vector<320x256xf32>
      %c0_25 = arith.constant 0 : index
      %c0_26 = arith.constant 0 : index
      %76 = vector.load %arg4[%c0_25, %c0_26] : memref<1x256xf32, #tpu.memory_space<vmem>>, vector<1x256xf32>
      %77 = arith.mulf %59, %73 : vector<1x256xf32>
      %78 = arith.subf %76, %77 : vector<1x256xf32>
      %79 = vector.broadcast %78 : vector<1x256xf32> to vector<320x256xf32>
      %80 = arith.addf %75, %79 : vector<320x256xf32>
      %c0_27 = arith.constant 0 : index
      %c0_28 = arith.constant 0 : index
      %81 = vector.load %arg5[%c0_27, %c0_28] : memref<320x256xbf16, #tpu.memory_space<vmem>>, vector<320x256xbf16>
      %82 = arith.extf %81 : vector<320x256xbf16> to vector<320x256xf32>
      %83 = arith.addf %80, %82 : vector<320x256xf32>
      %cst_29 = arith.constant 0.000000e+00 : f32
      %84 = vector.broadcast %cst_29 : f32 to vector<320x256xf32>
      %85 = arith.maximumf %83, %84 : vector<320x256xf32>
      %86 = vector.broadcast %53 : vector<320x1xf32> to vector<320x256xf32>
      %87 = arith.mulf %85, %86 : vector<320x256xf32>
      %88 = arith.truncf %87 : vector<320x256xf32> to vector<320x256xbf16>
      %c0_30 = arith.constant 0 : index
      %c0_31 = arith.constant 0 : index
      %89 = vector.load %arg6[%c0_30, %c0_31] : memref<320x256xbf16, #tpu.memory_space<vmem>>, vector<320x256xbf16>
      tpu.vector_store %arg6[%c0_30, %c0_31], %88 {strides = array<i32>} : memref<320x256xbf16, #tpu.memory_space<vmem>>, vector<320x256xbf16>,
    } else {
    }
    return
  }
  func.func @transform_0(%arg0: i32) -> (i32, i32) {
    %c0_i32 = arith.constant 0 : i32
    %c0_i32_0 = arith.constant 0 : i32
    return %c0_i32, %arg0 : i32, i32
  }
  func.func @transform_1(%arg0: i32) -> (i32, i32, i32) {
    %c0_i32 = arith.constant 0 : i32
    %c0_i32_0 = arith.constant 0 : i32
    %c0_i32_1 = arith.constant 0 : i32
    return %c0_i32, %arg0, %c0_i32_0 : i32, i32, i32
  }
  func.func @transform_2(%arg0: i32) -> (i32, i32) {
    %c0_i32 = arith.constant 0 : i32
    %c0_i32_0 = arith.constant 0 : i32
    %c0_i32_1 = arith.constant 0 : i32
    return %c0_i32, %c0_i32_0 : i32, i32
  }
  func.func @transform_3(%arg0: i32) -> (i32, i32) {
    %c0_i32 = arith.constant 0 : i32
    %c0_i32_0 = arith.constant 0 : i32
    %c0_i32_1 = arith.constant 0 : i32
    return %c0_i32, %c0_i32_0 : i32, i32
  }
  func.func @transform_4(%arg0: i32) -> (i32, i32) {
    %c0_i32 = arith.constant 0 : i32
    %c0_i32_0 = arith.constant 0 : i32
    %c0_i32_1 = arith.constant 0 : i32
    return %c0_i32, %c0_i32_0 : i32, i32
  }
  func.func @transform_5(%arg0: i32) -> (i32, i32) {
    %c0_i32 = arith.constant 0 : i32
    %c0_i32_0 = arith.constant 0 : i32
    %c0_i32_1 = arith.constant 0 : i32
    return %c0_i32, %c0_i32_0 : i32, i32
  }
}

</mosaic_0001>

<llo_original>
// kernel: tpu_custom_call.1
$region0: #{tpu_custom_call.1}
  #allocation0 [shape = 'u32[]', space=smem, size = 0x4, offset = 0x4, fixed_abs, tag = 'smem constant byte address 0x4 - core index']
  #allocation1 [shape = 'u32[72,128]{1,0:T(1,128)}', space=vmem, size = 0x9000, scoped, tag = 'internal scratch']
  #allocation2 [shape = 'f32[320,256]{1,0:T(8,128)}', space=vmem, size = 0x50000, scoped, tag = 'scratch operand']
  #allocation12 [shape = 's32[]', space=sflag, size = 0x4, offset = 0, fixed_abs, tag = 'sflag constant byte address 0x0 - dummy sync flag']
  %s0 = inlined_call_operand.hbm [shape: bf16[352,384], index: 0, kind: input, shape index: {}]
  %s1 = inlined_call_operand.hbm [shape: bf16[3,384,256], index: 1, kind: input, shape index: {}]
  %s2 = inlined_call_operand.hbm [shape: f32[1,256], index: 2, kind: input, shape index: {}]
  %s3 = inlined_call_operand.vmem [shape: f32[1,256], index: 3, kind: input, shape index: {}]
  %s4 = inlined_call_operand.hbm [shape: bf16[320,256], index: 4, kind: input, shape index: {}]
  %s5 = inlined_call_operand.hbm [shape: bf16[320,256], index: 5, kind: output, shape index: {}]
  %s6 = sld [smem:[#allocation0]]
  $region81: #{tpu_custom_call.1} parent=0
    _
  %s8 = ssub.s32 1, %s6
  %s9 = scalar_select 0, %s8, %s6
  $region1: #{tpu_custom_call.1} parent=0
    #allocation3 [shape = 'u8[180224]{0}', space=vmem, size = 0x2c000, scoped, tag = 'input window, operand 0']
    #allocation4 [shape = 's32[2]{0}', space=sflag, size = 0x8, scoped, tag = 'scoped memory for tpu_custom_call.1']
    #allocation5 [shape = 's32[2]{0}', space=sflag, size = 0x8, scoped, tag = 'scoped memory for tpu_custom_call.1']
    #allocation6 [shape = 'u8[393216]{0}', space=vmem, size = 0x60000, scoped, tag = 'input window, operand 1']
    #allocation7 [shape = 's32[2]{0}', space=sflag, size = 0x8, scoped, tag = 'scoped memory for tpu_custom_call.1']
    #allocation8 [shape = 'u8[1024]{0}', space=vmem, size = 0x400, scoped, tag = 'input window, operand 2, single buffered']
    #allocation9 [shape = 'u8[163840]{0}', space=vmem, size = 0x28000, scoped, tag = 'input window, operand 4, single buffered']
    #allocation10 [shape = 's32[1]{0}', space=sflag, size = 0x4, scoped, tag = 'scoped memory for tpu_custom_call.1']
    #allocation11 [shape = 'u8[163840]{0}', space=vmem, size = 0x28000, scoped, tag = 'output window, operand 0, single buffered']
    %10 = vsyncpa [#allocation4], 0
    %s11 = scalar_lea.sflag [#allocation4], 1
    %12 = vsyncpa %s11, 0
    %13 = vsyncpa [#allocation7], 0
    %s14 = scalar_lea.sflag [#allocation7], 1
    %15 = vsyncpa %s14, 0
    %16 = vsyncpa [#allocation10], 0
    %17 = vsyncpa [#allocation5], 0
    loop: start=0, step=1, limit=5
    $region2: #{tpu_custom_call.1} parent=1 // loop_pre_header
      _
    $region3: #{tpu_custom_call.1} parent=1 // loop_header
      %s19 = sphi 0, %s23
      %p20 = scmp.ge.s32.totalorder %s19, 5
      %s29 = sphi 0, %s31
      %s32 = sphi 0, %s29
      %s33 = sphi 0, %s32
      %s49 = sphi 0, %s33
      %s55 = sphi 0, %s57
      %s58 = sphi 0, %s55
      %s59 = sphi 0, %s58
      %s75 = sphi 0, %s59
      %s79 = sphi 0, %s79
      %s81 = sphi 0, %s79
      %s82 = sphi 0, %s81
      %s96 = sphi 0, %s82
      %s100 = sphi 0, %s100
      %s102 = sphi 0, %s100
      %s103 = sphi 0, %s102
      %s117 = sphi 0, %s103
      %s121 = sphi 0, %s121
      %s123 = sphi 0, %s121
      %s124 = sphi 0, %s123
      %s138 = sphi 0, %s124
      %s142 = sphi 0, %s142
      %s144 = sphi 0, %s142
      %s145 = sphi 0, %s144
      %s159 = sphi 0, %s145
    $region4: #{tpu_custom_call.1} parent=1 // loop_header_branch
      %22 = sbr.rel (%p20) target = $region8
    $region5: #{tpu_custom_call.1} parent=1 // loop_body
      %s24 = ssub.s32 %s19, 1
      %s25 = ssub.s32 %s19, 2
      %s26 = sadd.s32 %s19, 1
      %s27 = ssub.s32 %s19, %s26
      %p28 = scmp.eq.s32.totalorder %s27, 0
      %s30 = sadd.s32 %s29, 1
      %s31 = scalar_select %p28, %s29, %s30
      %p34 = pneg %p28
      %p35 = scmp.eq.s32.totalorder %s19, 2
      %p36 = por %p34, %p35
      %p37 = scmp.ne.s32.totalorder %s29, %s32
      %p38 = scmp.eq.s32.totalorder %s19, 0
      %p39 = por %p37, %p38
      %p40 = scmp.ne.s32.totalorder %s29, %s32
      %p41 = scmp.eq.s32.totalorder %s24, 2
      %p42 = por %p40, %p41
      %p43 = scmp.ne.s32.totalorder %s32, %s33
      %p44 = scmp.eq.s32.totalorder %s24, 0
      %p45 = por %p43, %p44
      %p46 = scmp.ne.s32.totalorder %s32, %s33
      %p47 = scmp.eq.s32.totalorder %s25, 2
      %p48 = por %p46, %p47
      %p50 = scmp.ne.s32.totalorder %s33, %s49
      %p51 = scmp.eq.s32.totalorder %s25, 0
      %p52 = por %p50, %p51
      %s53 = ssub.s32 %s19, %s26
      %p54 = scmp.eq.s32.totalorder %s53, 0
      %s56 = sadd.s32 %s55, 1
      %s57 = scalar_select %p54, %s55, %s56
      %p60 = pneg %p54
      %p61 = scmp.eq.s32.totalorder %s19, 2
      %p62 = por %p60, %p61
      %p63 = scmp.ne.s32.totalorder %s55, %s58
      %p64 = scmp.eq.s32.totalorder %s19, 0
      %p65 = por %p63, %p64
      %p66 = scmp.ne.s32.totalorder %s55, %s58
      %p67 = scmp.eq.s32.totalorder %s24, 2
      %p68 = por %p66, %p67
      %p69 = scmp.ne.s32.totalorder %s58, %s59
      %p70 = scmp.eq.s32.totalorder %s24, 0
      %p71 = por %p69, %p70
      %p72 = scmp.ne.s32.totalorder %s58, %s59
      %p73 = scmp.eq.s32.totalorder %s25, 2
      %p74 = por %p72, %p73
      %p76 = scmp.ne.s32.totalorder %s59, %s75
      %p77 = scmp.eq.s32.totalorder %s25, 0
      %p78 = por %p76, %p77
      %s80 = sadd.s32 %s79, 1
      %p83 = scmp.eq.s32.totalorder %s19, 2
      %p84 = scmp.ne.s32.totalorder %s79, %s81
      %p85 = scmp.eq.s32.totalorder %s19, 0
      %p86 = por %p84, %p85
      %p87 = scmp.ne.s32.totalorder %s79, %s81
      %p88 = scmp.eq.s32.totalorder %s24, 2
      %p89 = por %p87, %p88
      %p90 = scmp.ne.s32.totalorder %s81, %s82
      %p91 = scmp.eq.s32.totalorder %s24, 0
      %p92 = por %p90, %p91
      %p93 = scmp.ne.s32.totalorder %s81, %s82
      %p94 = scmp.eq.s32.totalorder %s25, 2
      %p95 = por %p93, %p94
      %p97 = scmp.ne.s32.totalorder %s82, %s96
      %p98 = scmp.eq.s32.totalorder %s25, 0
      %p99 = por %p97, %p98
      %s101 = sadd.s32 %s100, 1
      %p104 = scmp.eq.s32.totalorder %s19, 2
      %p105 = scmp.ne.s32.totalorder %s100, %s102
      %p106 = scmp.eq.s32.totalorder %s19, 0
      %p107 = por %p105, %p106
      %p108 = scmp.ne.s32.totalorder %s100, %s102
      %p109 = scmp.eq.s32.totalorder %s24, 2
      %p110 = por %p108, %p109
      %p111 = scmp.ne.s32.totalorder %s102, %s103
      %p112 = scmp.eq.s32.totalorder %s24, 0
      %p113 = por %p111, %p112
      %p114 = scmp.ne.s32.totalorder %s102, %s103
      %p115 = scmp.eq.s32.totalorder %s25, 2
      %p116 = por %p114, %p115
      %p118 = scmp.ne.s32.totalorder %s103, %s117
      %p119 = scmp.eq.s32.totalorder %s25, 0
      %p120 = por %p118, %p119
      %s122 = sadd.s32 %s121, 1
      %p125 = scmp.eq.s32.totalorder %s19, 2
      %p126 = scmp.ne.s32.totalorder %s121, %s123
      %p127 = scmp.eq.s32.totalorder %s19, 0
      %p128 = por %p126, %p127
      %p129 = scmp.ne.s32.totalorder %s121, %s123
      %p130 = scmp.eq.s32.totalorder %s24, 2
      %p131 = por %p129, %p130
      %p132 = scmp.ne.s32.totalorder %s123, %s124
      %p133 = scmp.eq.s32.totalorder %s24, 0
      %p134 = por %p132, %p133
      %p135 = scmp.ne.s32.totalorder %s123, %s124
      %p136 = scmp.eq.s32.totalorder %s25, 2
      %p137 = por %p135, %p136
      %p139 = scmp.ne.s32.totalorder %s124, %s138
      %p140 = scmp.eq.s32.totalorder %s25, 0
      %p141 = por %p139, %p140
      %s143 = sadd.s32 %s142, 1
      %p146 = scmp.eq.s32.totalorder %s19, 2
      %p147 = scmp.ne.s32.totalorder %s142, %s144
      %p148 = scmp.eq.s32.totalorder %s19, 0
      %p149 = por %p147, %p148
      %p150 = scmp.ne.s32.totalorder %s142, %s144
      %p151 = scmp.eq.s32.totalorder %s24, 2
      %p152 = por %p150, %p151
      %p153 = scmp.ne.s32.totalorder %s144, %s145
      %p154 = scmp.eq.s32.totalorder %s24, 0
      %p155 = por %p153, %p154
      %p156 = scmp.ne.s32.totalorder %s144, %s145
      %p157 = scmp.eq.s32.totalorder %s25, 2
      %p158 = por %p156, %p157
      %p160 = scmp.ne.s32.totalorder %s145, %s159
      %p161 = scmp.eq.s32.totalorder %s25, 0
      %p162 = por %p160, %p161
      %p163 = scmp.le.s32.totalorder 1, %s19
      %p164 = scmp.lt.s32.totalorder %s19, 4
      %p165 = pnand %p163, %p164
      %p166 = pneg %p165
      // Predicated region
      $region9: #{tpu_custom_call.1} parent=5 // pred_check
        _
      $region10: #{tpu_custom_call.1} parent=5 // pred_check_branch
        %168 = sbr.rel (%p165) target = $region12
      $region11: #{tpu_custom_call.1} parent=5 // pred_region
        %s169 = ssub.s32 %s19, 1
        // Predicated region
        $region13: #{tpu_custom_call.1} parent=11 // pred_check
          %p170 = pneg %p92
        $region14: #{tpu_custom_call.1} parent=11 // pred_check_branch
          %172 = sbr.rel (%p170) target = $region16
        $region15: #{tpu_custom_call.1} parent=11 // pred_region
          %174 = vsyncadd [#allocation7], 0
          %s176 = sshll.u32 %s2, 4
          %s177 = int_to_ptr.hbm [resolvable:$true] %s176
          %s178 = sshll.u32 [#allocation8], 4
          %s179 = int_to_ptr.vmem [resolvable:$true] %s178
          %181 = dma.hbm_to_vmem [thread:$0]  %s177, 32, %s179, [#allocation7]
        $region16: #{tpu_custom_call.1} parent=11 // pred_fallthru
          _
        // Predicated region
        $region17: #{tpu_custom_call.1} parent=11 // pred_check
          %p182 = pneg %p113
        $region18: #{tpu_custom_call.1} parent=11 // pred_check_branch
          %184 = sbr.rel (%p182) target = $region20
        $region19: #{tpu_custom_call.1} parent=11 // pred_region
          _
        $region20: #{tpu_custom_call.1} parent=11 // pred_fallthru
          _
        // Predicated region
        $region21: #{tpu_custom_call.1} parent=11 // pred_check
          %p185 = pneg %p134
        $region22: #{tpu_custom_call.1} parent=11 // pred_check_branch
          %187 = sbr.rel (%p185) target = $region24
        $region23: #{tpu_custom_call.1} parent=11 // pred_region
          %189 = vsyncadd [#allocation10], 0
          %s190 = sshll.u32 %s4, 4
          %s191 = int_to_ptr.hbm [resolvable:$true] %s190
          %s192 = sshll.u32 [#allocation9], 4
          %s193 = int_to_ptr.vmem [resolvable:$true] %s192
          %198 = dma.hbm_to_vmem [thread:$0]  %s191, 5120, %s193, [#allocation10], 128, 128, 8
        $region24: #{tpu_custom_call.1} parent=11 // pred_fallthru
          _
      $region12: #{tpu_custom_call.1} parent=5 // pred_fallthru
        _
      %p199 = scmp.lt.s32.totalorder %s19, 3
      // Predicated region
      $region25: #{tpu_custom_call.1} parent=5 // pred_check
        %p200 = pneg %p199
      $region26: #{tpu_custom_call.1} parent=5 // pred_check_branch
        %202 = sbr.rel (%p200) target = $region28
      $region27: #{tpu_custom_call.1} parent=5 // pred_region
        // Predicated region
        $region29: #{tpu_custom_call.1} parent=27 // pred_check
          %p203 = pneg %p39
        $region30: #{tpu_custom_call.1} parent=27 // pred_check_branch
          %205 = sbr.rel (%p203) target = $region32
        $region31: #{tpu_custom_call.1} parent=27 // pred_region
          %s206 = sand.u32 %s29, 1
          %s207 = scalar_lea.sflag [#allocation4], %s206
          %s208 = sand.u32 %s29, 1
          %s209 = smul.addr %s208, 176
          %s210 = scalar_lea.vmem [#allocation3], %s209
          %212 = vsyncadd %s207, 0
          %s213 = smul.addr %s19, 4
          %s214 = scalar_lea.hbm %s0, %s213
          %s215 = sshll.u32 %s214, 4
          %s216 = int_to_ptr.hbm [resolvable:$true] %s215
          %s217 = sshll.u32 %s210, 4
          %s218 = int_to_ptr.vmem [resolvable:$true] %s217
          %223 = dma.hbm_to_vmem [thread:$0]  %s216, 2816, %s218, %s207, 192, 64, 4
        $region32: #{tpu_custom_call.1} parent=27 // pred_fallthru
          _
        // Predicated region
        $region33: #{tpu_custom_call.1} parent=27 // pred_check
          %p224 = pneg %p65
        $region34: #{tpu_custom_call.1} parent=27 // pred_check_branch
          %226 = sbr.rel (%p224) target = $region36
        $region35: #{tpu_custom_call.1} parent=27 // pred_region
          #allocation13 [shape = 'u32[6]{0}', space=smem, size = 0x18, scoped, tag = 'DMA stride descriptor']
          %s227 = sand.u32 %s19, 1
          %s228 = scalar_lea.sflag [#allocation7], %s227
          %s229 = sand.u32 %s55, 1
          %s230 = smul.addr %s229, 384
          %s231 = scalar_lea.vmem [#allocation6], %s230
          %s232 = smul.u32 16, %s19
          %234 = vsyncadd %s228, 0
          %s235 = smul.addr %s232, 2
          %s236 = smul.addr %s235, 4
          %s237 = scalar_lea.hbm %s1, %s236
          %s239 = sshll.u32 1, 14
          %s240 = sxor.u32 4294967295, %s239
          %s242 = sld [smem:[#allocation0]]
          %s243 = sadd.s32 2, %s242
          %s245 = sshll.u32 7, 26
          %s246 = sxor.u32 4294967295, %s245
          %s247 = sand.u32 0, %s246
          %s248 = sshll.u32 %s243, 26
          %s249 = sor.u32 %s247, %s248
          %s250 = sshll.u32 %s237, 4
          %s251 = int_to_ptr.hbm [resolvable:$true] %s250
          %s252 = sshll.u32 %s231, 4
          %s253 = int_to_ptr.vmem [resolvable:$true] %s252
          %259 = sst [smem:[#allocation13]] 6144
          %s260 = scalar_lea.smem [#allocation13], 1
          %261 = sst [smem:[%s260]] 2048
          %s262 = scalar_lea.smem [#allocation13], 2
          %263 = sst [smem:[%s262]] 16
          %s264 = scalar_lea.smem [#allocation13], 3
          %265 = sst [smem:[%s264]] 128
          %s266 = scalar_lea.smem [#allocation13], 4
          %267 = sst [smem:[%s266]] 128
          %s268 = scalar_lea.smem [#allocation13], 5
          %269 = sst [smem:[%s268]] 8
          %271 = dma.general %s251, 6144, %s253, %s228, [#allocation12], [#allocation13], %s249, 0
        $region36: #{tpu_custom_call.1} parent=27 // pred_fallthru
          _
      $region28: #{tpu_custom_call.1} parent=5 // pred_fallthru
        _
      %p272 = scmp.le.s32.totalorder 1, %s19
      %p273 = scmp.lt.s32.totalorder %s19, 4
      %p274 = pnand %p272, %p273
      %p275 = pneg %p274
      // Predicated region
      $region37: #{tpu_custom_call.1} parent=5 // pred_check
        _
      $region38: #{tpu_custom_call.1} parent=5 // pred_check_branch
        %277 = sbr.rel (%p274) target = $region40
      $region39: #{tpu_custom_call.1} parent=5 // pred_region
        %s278 = ssub.s32 %s19, 1
        %s279 = sand.u32 %s32, 1
        %s280 = scalar_lea.sflag [#allocation4], %s279
        %s281 = sand.u32 %s32, 1
        %s282 = smul.addr %s281, 176
        %s283 = scalar_lea.vmem [#allocation3], %s282
        // Predicated region
        $region41: #{tpu_custom_call.1} parent=39 // pred_check
          %p284 = pneg %p45
        $region42: #{tpu_custom_call.1} parent=39 // pred_check_branch
          %286 = sbr.rel (%p284) target = $region44
        $region43: #{tpu_custom_call.1} parent=39 // pred_region
          %288 = dma.done %s280, 2816
        $region44: #{tpu_custom_call.1} parent=39 // pred_fallthru
          _
        %s289 = sand.u32 %s24, 1
        %s290 = scalar_lea.sflag [#allocation7], %s289
        %s291 = sand.u32 %s58, 1
        %s292 = smul.addr %s291, 384
        %s293 = scalar_lea.vmem [#allocation6], %s292
        // Predicated region
        $region45: #{tpu_custom_call.1} parent=39 // pred_check
          %p294 = pneg %p71
        $region46: #{tpu_custom_call.1} parent=39 // pred_check_branch
          %296 = sbr.rel (%p294) target = $region48
        $region47: #{tpu_custom_call.1} parent=39 // pred_region
          %298 = dma.done %s290, 6144
        $region48: #{tpu_custom_call.1} parent=39 // pred_fallthru
          _
        // Predicated region
        $region49: #{tpu_custom_call.1} parent=39 // pred_check
          %p299 = pneg %p92
        $region50: #{tpu_custom_call.1} parent=39 // pred_check_branch
          %301 = sbr.rel (%p299) target = $region52
        $region51: #{tpu_custom_call.1} parent=39 // pred_region
          %303 = dma.done [#allocation7], 32
        $region52: #{tpu_custom_call.1} parent=39 // pred_fallthru
          _
        // Predicated region
        $region53: #{tpu_custom_call.1} parent=39 // pred_check
          %p304 = pneg %p134
        $region54: #{tpu_custom_call.1} parent=39 // pred_check_branch
          %306 = sbr.rel (%p304) target = $region56
        $region55: #{tpu_custom_call.1} parent=39 // pred_region
          %308 = dma.done [#allocation10], 5120
        $region56: #{tpu_custom_call.1} parent=39 // pred_fallthru
          _
        %s309 = sand.u32 %s32, 1
        %s310 = scalar_lea.sflag [#allocation4], %s309
        %s311 = sand.u32 %s32, 1
        %s312 = smul.addr %s311, 176
        %s313 = scalar_lea.vmem [#allocation3], %s312
        %p314 = pneg %p45
        %p315 = pneg %p42
        %s316 = sand.u32 %s24, 1
        %s317 = scalar_lea.sflag [#allocation7], %s316
        %s318 = sand.u32 %s58, 1
        %s319 = smul.addr %s318, 384
        %s320 = scalar_lea.vmem [#allocation6], %s319
        %p321 = pneg %p71
        %p322 = pneg %p68
        %p323 = pneg %p92
        %p324 = pneg %p89
        %p325 = pneg %p113
        %p326 = pneg %p110
        %p327 = pneg %p134
        %p328 = pneg %p131
        %p329 = pneg %p155
        %p330 = pneg %p152
        %s331 = smul.u32 16, %s24
        %v332 = vld [vmem:[%s283] sm:$0xf]
        %v333 = vld [vmem:[%s283 + $0x4] sm:$0xf]
        %v334 = vld [vmem:[%s283 + $0x8] sm:$0xf]
        %v335 = vld [vmem:[%s283 + $0xc] sm:$0xf]
        %v336 = vld [vmem:[%s283 + $0x10] sm:$0xf]
        %v337 = vld [vmem:[%s283 + $0x14] sm:$0xf]
        %v338 = vld [vmem:[%s283 + $0x18] sm:$0xf]
        %v339 = vld [vmem:[%s283 + $0x1c] sm:$0xf]
        %v340 = vld [vmem:[%s283 + $0x20] sm:$0xf]
        %v341 = vld [vmem:[%s283 + $0x24] sm:$0xf]
        %v342 = vld [vmem:[%s283 + $0x28] sm:$0xf]
        %v343 = vld [vmem:[%s283 + $0x2c] sm:$0xf]
        %v344 = vld [vmem:[%s283 + $0x30] sm:$0xf]
        %v345 = vld [vmem:[%s283 + $0x34] sm:$0xf]
        %v346 = vld [vmem:[%s283 + $0x38] sm:$0xf]
        %v347 = vld [vmem:[%s283 + $0x3c] sm:$0xf]
        %v348 = vld [vmem:[%s283 + $0x40] sm:$0xf]
        %v349 = vld [vmem:[%s283 + $0x44] sm:$0xf]
        %v350 = vld [vmem:[%s283 + $0x48] sm:$0xf]
        %v351 = vld [vmem:[%s283 + $0x4c] sm:$0xf]
        %v352 = vld [vmem:[%s283 + $0x50] sm:$0xf]
        %v353 = vld [vmem:[%s283 + $0x54] sm:$0xf]
        %v354 = vld [vmem:[%s283 + $0x58] sm:$0xf]
        %v355 = vld [vmem:[%s283 + $0x5c] sm:$0xf]
        %v356 = vld [vmem:[%s283 + $0x60] sm:$0xf]
        %v357 = vld [vmem:[%s283 + $0x64] sm:$0xf]
        %v358 = vld [vmem:[%s283 + $0x68] sm:$0xf]
        %v359 = vld [vmem:[%s283 + $0x6c] sm:$0xf]
        %v360 = vld [vmem:[%s283 + $0x70] sm:$0xf]
        %v361 = vld [vmem:[%s283 + $0x74] sm:$0xf]
        %v362 = vld [vmem:[%s283 + $0x78] sm:$0xf]
        %v363 = vld [vmem:[%s283 + $0x7c] sm:$0xf]
        %v364 = vld [vmem:[%s283 + $0x80] sm:$0xf]
        %v365 = vld [vmem:[%s283 + $0x84] sm:$0xf]
        %v366 = vld [vmem:[%s283 + $0x88] sm:$0xf]
        %v367 = vld [vmem:[%s283 + $0x8c] sm:$0xf]
        %v368 = vld [vmem:[%s283 + $0x90] sm:$0xf]
        %v369 = vld [vmem:[%s283 + $0x94] sm:$0xf]
        %v370 = vld [vmem:[%s283 + $0x98] sm:$0xf]
        %v371 = vld [vmem:[%s283 + $0x9c] sm:$0xf]
        %v372 = vld [vmem:[%s283 + $0xa0] sm:$0xf]
        %v373 = vld [vmem:[%s283 + $0xa4] sm:$0xf]
        %v374 = vld [vmem:[%s283 + $0xa8] sm:$0xf]
        %v375 = vld [vmem:[%s283 + $0xac] sm:$0xf]
        %v376 = vld [vmem:[%s293] sm:$0xff]
        %v377 = vld [vmem:[%s293 + $0x8] sm:$0xff]
        %v378 = vld [vmem:[%s293 + $0x10] sm:$0xff]
        %v379 = vld [vmem:[%s293 + $0x18] sm:$0xff]
        %v380 = vld [vmem:[%s293 + $0x20] sm:$0xff]
        %v381 = vld [vmem:[%s293 + $0x28] sm:$0xff]
        %v382 = vld [vmem:[%s293 + $0x30] sm:$0xff]
        %v383 = vld [vmem:[%s293 + $0x38] sm:$0xff]
        %v384 = vld [vmem:[%s293 + $0x40] sm:$0xff]
        %v385 = vld [vmem:[%s293 + $0x48] sm:$0xff]
        %v386 = vld [vmem:[%s293 + $0x50] sm:$0xff]
        %v387 = vld [vmem:[%s293 + $0x58] sm:$0xff]
        %v388 = vld [vmem:[%s293 + $0x60] sm:$0xff]
        %v389 = vld [vmem:[%s293 + $0x68] sm:$0xff]
        %v390 = vld [vmem:[%s293 + $0x70] sm:$0xff]
        %v391 = vld [vmem:[%s293 + $0x78] sm:$0xff]
        %v436 = vunpack.c.l.b16 %v332
        %v437 = vunpack.c.l.b16 %v333
        %v438 = vunpack.c.l.b16 %v334
        %v439 = vunpack.c.l.b16 %v335
        %v440 = vunpack.c.l.b16 %v336
        %v441 = vunpack.c.l.b16 %v337
        %v442 = vunpack.c.l.b16 %v338
        %v443 = vunpack.c.l.b16 %v339
        %v444 = vunpack.c.l.b16 %v340
        %v445 = vunpack.c.l.b16 %v341
        %v446 = vunpack.c.l.b16 %v342
        %v447 = vunpack.c.l.b16 %v343
        %v448 = vunpack.c.l.b16 %v344
        %v449 = vunpack.c.l.b16 %v345
        %v450 = vunpack.c.l.b16 %v346
        %v451 = vunpack.c.l.b16 %v347
        %v452 = vunpack.c.l.b16 %v348
        %v453 = vunpack.c.l.b16 %v349
        %v454 = vunpack.c.l.b16 %v350
        %v455 = vunpack.c.l.b16 %v351
        %v456 = vunpack.c.l.b16 %v352
        %v457 = vunpack.c.l.b16 %v353
        %v458 = vunpack.c.l.b16 %v354
        %v459 = vunpack.c.l.b16 %v355
        %v460 = vunpack.c.l.b16 %v356
        %v461 = vunpack.c.l.b16 %v357
        %v462 = vunpack.c.l.b16 %v358
        %v463 = vunpack.c.l.b16 %v359
        %v464 = vunpack.c.l.b16 %v360
        %v465 = vunpack.c.l.b16 %v361
        %v466 = vunpack.c.l.b16 %v362
        %v467 = vunpack.c.l.b16 %v363
        %v468 = vunpack.c.l.b16 %v364
        %v469 = vunpack.c.l.b16 %v365
        %v470 = vunpack.c.l.b16 %v366
        %v471 = vunpack.c.l.b16 %v367
        %v472 = vunpack.c.l.b16 %v368
        %v473 = vunpack.c.l.b16 %v369
        %v474 = vunpack.c.l.b16 %v370
        %v475 = vunpack.c.l.b16 %v371
        %v476 = vunpack.c.l.b16 %v372
        %v477 = vunpack.c.l.b16 %v373
        %v478 = vunpack.c.l.b16 %v374
        %v479 = vunpack.c.l.b16 %v375
        %v480 = vpack.c.b16 %v437, %v436
        %v481 = vpack.c.b16 %v439, %v438
        %v482 = vpack.c.b16 %v441, %v440
        %v483 = vpack.c.b16 %v443, %v442
        %v484 = vpack.c.b16 %v445, %v444
        %v485 = vpack.c.b16 %v447, %v446
        %v486 = vpack.c.b16 %v449, %v448
        %v487 = vpack.c.b16 %v451, %v450
        %v488 = vpack.c.b16 %v453, %v452
        %v489 = vpack.c.b16 %v455, %v454
        %v490 = vpack.c.b16 %v457, %v456
        %v491 = vpack.c.b16 %v459, %v458
        %v492 = vpack.c.b16 %v461, %v460
        %v493 = vpack.c.b16 %v463, %v462
        %v494 = vpack.c.b16 %v465, %v464
        %v495 = vpack.c.b16 %v467, %v466
        %v496 = vpack.c.b16 %v469, %v468
        %v497 = vpack.c.b16 %v471, %v470
        %v498 = vpack.c.b16 %v473, %v472
        %v499 = vpack.c.b16 %v475, %v474
        %v500 = vpack.c.b16 %v477, %v476
        %v501 = vpack.c.b16 %v479, %v478
        %v540 = vunpack.c.l.b16 %v376
        %v541 = vunpack.c.h.b16 %v376
        %v542 = vunpack.c.l.b16 %v377
        %v543 = vunpack.c.h.b16 %v377
        %v544 = vunpack.c.l.b16 %v378
        %v545 = vunpack.c.h.b16 %v378
        %v546 = vunpack.c.l.b16 %v379
        %v547 = vunpack.c.h.b16 %v379
        %v548 = vunpack.c.l.b16 %v380
        %v549 = vunpack.c.h.b16 %v380
        %v550 = vunpack.c.l.b16 %v381
        %v551 = vunpack.c.h.b16 %v381
        %v552 = vunpack.c.l.b16 %v382
        %v553 = vunpack.c.h.b16 %v382
        %v554 = vunpack.c.l.b16 %v383
        %v555 = vunpack.c.h.b16 %v383
        %v556 = vunpack.c.l.b16 %v384
        %v557 = vunpack.c.h.b16 %v384
        %v558 = vunpack.c.l.b16 %v385
        %v559 = vunpack.c.h.b16 %v385
        %v560 = vunpack.c.l.b16 %v386
        %v561 = vunpack.c.h.b16 %v386
        %v562 = vunpack.c.l.b16 %v387
        %v563 = vunpack.c.h.b16 %v387
        %v564 = vunpack.c.l.b16 %v388
        %v565 = vunpack.c.h.b16 %v388
        %v566 = vunpack.c.l.b16 %v389
        %v567 = vunpack.c.h.b16 %v389
        %v568 = vunpack.c.l.b16 %v390
        %v569 = vunpack.c.h.b16 %v390
        %v570 = vunpack.c.l.b16 %v391
        %v571 = vunpack.c.h.b16 %v391
        %v572 = vpack.c.b16 %v542, %v540
        %v573 = vpack.c.b16 %v543, %v541
        %v574 = vpack.c.b16 %v546, %v544
        %v575 = vpack.c.b16 %v547, %v545
        %v576 = vpack.c.b16 %v550, %v548
        %v577 = vpack.c.b16 %v551, %v549
        %v578 = vpack.c.b16 %v554, %v552
        %v579 = vpack.c.b16 %v555, %v553
        %v580 = vpack.c.b16 %v558, %v556
        %v581 = vpack.c.b16 %v559, %v557
        %v582 = vpack.c.b16 %v562, %v560
        %v583 = vpack.c.b16 %v563, %v561
        %v584 = vpack.c.b16 %v566, %v564
        %v585 = vpack.c.b16 %v567, %v565
        %v586 = vpack.c.b16 %v570, %v568
        %v587 = vpack.c.b16 %v571, %v569
        %604 = vmatpush.bf16.msra.mxu0 %v586
        %605 = vmatpush.bf16.msra.mxu0 %v584
        %606 = vmatpush.bf16.msra.mxu0 %v582
        %607 = vmatpush.bf16.msra.mxu0 %v580
        %608 = vmatpush.bf16.msra.mxu0 %v578
        %609 = vmatpush.bf16.msra.mxu0 %v576
        %610 = vmatpush.bf16.msra.mxu0 %v574
        %611 = vmatpush.bf16.msra.mxu0 %v572
        %612 = vmatmul.bf16.gmra.mxu0 %v480
        %v613 = vpop.f32.mrf.mxu0
        %v614 = vadd.f32 0.0, %v613
        %v615 = vpop.f32.mrf.mxu0
        %v616 = vadd.f32 0.0, %v615
        %617 = vmatmul.bf16.gmra.mxu0 %v481
        %v618 = vpop.f32.mrf.mxu0
        %v619 = vadd.f32 0.0, %v618
        %v620 = vpop.f32.mrf.mxu0
        %v621 = vadd.f32 0.0, %v620
        %622 = vmatmul.bf16.gmra.mxu0 %v482
        %v623 = vpop.f32.mrf.mxu0
        %v624 = vadd.f32 0.0, %v623
        %v625 = vpop.f32.mrf.mxu0
        %v626 = vadd.f32 0.0, %v625
        %627 = vmatmul.bf16.gmra.mxu0 %v483
        %v628 = vpop.f32.mrf.mxu0
        %v629 = vadd.f32 0.0, %v628
        %v630 = vpop.f32.mrf.mxu0
        %v631 = vadd.f32 0.0, %v630
        %632 = vmatmul.bf16.gmra.mxu0 %v484
        %v633 = vpop.f32.mrf.mxu0
        %v634 = vadd.f32 0.0, %v633
        %v635 = vpop.f32.mrf.mxu0
        %v636 = vadd.f32 0.0, %v635
        %637 = vmatmul.bf16.gmra.mxu0 %v485
        %v638 = vpop.f32.mrf.mxu0
        %v639 = vadd.f32 0.0, %v638
        %v640 = vpop.f32.mrf.mxu0
        %v641 = vadd.f32 0.0, %v640
        %642 = vmatmul.bf16.gmra.mxu0 %v486
        %v643 = vpop.f32.mrf.mxu0
        %v644 = vadd.f32 0.0, %v643
        %v645 = vpop.f32.mrf.mxu0
        %v646 = vadd.f32 0.0, %v645
        %647 = vmatmul.bf16.gmra.mxu0 %v487
        %v648 = vpop.f32.mrf.mxu0
        %v649 = vadd.f32 0.0, %v648
        %v650 = vpop.f32.mrf.mxu0
        %v651 = vadd.f32 0.0, %v650
        %652 = vmatmul.bf16.gmra.mxu0 %v488
        %v653 = vpop.f32.mrf.mxu0
        %v654 = vadd.f32 0.0, %v653
        %v655 = vpop.f32.mrf.mxu0
        %v656 = vadd.f32 0.0, %v655
        %657 = vmatmul.bf16.gmra.mxu0 %v489
        %v658 = vpop.f32.mrf.mxu0
        %v659 = vadd.f32 0.0, %v658
        %v660 = vpop.f32.mrf.mxu0
        %v661 = vadd.f32 0.0, %v660
        %662 = vmatmul.bf16.gmra.mxu0 %v490
        %v663 = vpop.f32.mrf.mxu0
        %v664 = vadd.f32 0.0, %v663
        %v665 = vpop.f32.mrf.mxu0
        %v666 = vadd.f32 0.0, %v665
        %667 = vmatmul.bf16.gmra.mxu0 %v491
        %v668 = vpop.f32.mrf.mxu0
        %v669 = vadd.f32 0.0, %v668
        %v670 = vpop.f32.mrf.mxu0
        %v671 = vadd.f32 0.0, %v670
        %672 = vmatmul.bf16.gmra.mxu0 %v492
        %v673 = vpop.f32.mrf.mxu0
        %v674 = vadd.f32 0.0, %v673
        %v675 = vpop.f32.mrf.mxu0
        %v676 = vadd.f32 0.0, %v675
        %677 = vmatmul.bf16.gmra.mxu0 %v493
        %v678 = vpop.f32.mrf.mxu0
        %v679 = vadd.f32 0.0, %v678
        %v680 = vpop.f32.mrf.mxu0
        %v681 = vadd.f32 0.0, %v680
        %682 = vmatmul.bf16.gmra.mxu0 %v494
        %v683 = vpop.f32.mrf.mxu0
        %v684 = vadd.f32 0.0, %v683
        %v685 = vpop.f32.mrf.mxu0
        %v686 = vadd.f32 0.0, %v685
        %687 = vmatmul.bf16.gmra.mxu0 %v495
        %v688 = vpop.f32.mrf.mxu0
        %v689 = vadd.f32 0.0, %v688
        %v690 = vpop.f32.mrf.mxu0
        %v691 = vadd.f32 0.0, %v690
        %692 = vmatmul.bf16.gmra.mxu0 %v496
        %v693 = vpop.f32.mrf.mxu0
        %v694 = vadd.f32 0.0, %v693
        %v695 = vpop.f32.mrf.mxu0
        %v696 = vadd.f32 0.0, %v695
        %697 = vmatmul.bf16.gmra.mxu0 %v497
        %v698 = vpop.f32.mrf.mxu0
        %v699 = vadd.f32 0.0, %v698
        %v700 = vpop.f32.mrf.mxu0
        %v701 = vadd.f32 0.0, %v700
        %702 = vmatmul.bf16.gmra.mxu0 %v498
        %v703 = vpop.f32.mrf.mxu0
        %v704 = vadd.f32 0.0, %v703
        %v705 = vpop.f32.mrf.mxu0
        %v706 = vadd.f32 0.0, %v705
        %707 = vmatmul.bf16.gmra.mxu0 %v499
        %v708 = vpop.f32.mrf.mxu0
        %v709 = vadd.f32 0.0, %v708
        %v710 = vpop.f32.mrf.mxu0
        %v711 = vadd.f32 0.0, %v710
        %712 = vmatmul.bf16.gmra.mxu0 %v500
        %v713 = vpop.f32.mrf.mxu0
        %v714 = vpop.f32.mrf.mxu0
        %715 = vmatmul.bf16.gmra.mxu0 %v501
        %v716 = vpop.f32.mrf.mxu0
        %v717 = vpop.f32.mrf.mxu0
        %718 = vdwg.mxu0
        %719 = vmatpush.bf16.msra.mxu0 %v587
        %720 = vmatpush.bf16.msra.mxu0 %v585
        %721 = vmatpush.bf16.msra.mxu0 %v583
        %722 = vmatpush.bf16.msra.mxu0 %v581
        %723 = vmatpush.bf16.msra.mxu0 %v579
        %724 = vmatpush.bf16.msra.mxu0 %v577
        %725 = vmatpush.bf16.msra.mxu0 %v575
        %726 = vmatpush.bf16.msra.mxu0 %v573
        %727 = vmatmul.bf16.gmra.mxu0 %v480
        %v728 = vpop.f32.mrf.mxu0
        %v729 = vadd.f32 0.0, %v728
        %v730 = vpop.f32.mrf.mxu0
        %v731 = vadd.f32 0.0, %v730
        %732 = vmatmul.bf16.gmra.mxu0 %v481
        %v733 = vpop.f32.mrf.mxu0
        %v734 = vadd.f32 0.0, %v733
        %v735 = vpop.f32.mrf.mxu0
        %v736 = vadd.f32 0.0, %v735
        %737 = vmatmul.bf16.gmra.mxu0 %v482
        %v738 = vpop.f32.mrf.mxu0
        %v739 = vadd.f32 0.0, %v738
        %v740 = vpop.f32.mrf.mxu0
        %v741 = vadd.f32 0.0, %v740
        %742 = vmatmul.bf16.gmra.mxu0 %v483
        %v743 = vpop.f32.mrf.mxu0
        %v744 = vadd.f32 0.0, %v743
        %v745 = vpop.f32.mrf.mxu0
        %v746 = vadd.f32 0.0, %v745
        %747 = vmatmul.bf16.gmra.mxu0 %v484
        %v748 = vpop.f32.mrf.mxu0
        %v749 = vadd.f32 0.0, %v748
        %v750 = vpop.f32.mrf.mxu0
        %v751 = vadd.f32 0.0, %v750
        %752 = vmatmul.bf16.gmra.mxu0 %v485
        %v753 = vpop.f32.mrf.mxu0
        %v754 = vadd.f32 0.0, %v753
        %v755 = vpop.f32.mrf.mxu0
        %v756 = vadd.f32 0.0, %v755
        %757 = vmatmul.bf16.gmra.mxu0 %v486
        %v758 = vpop.f32.mrf.mxu0
        %v759 = vadd.f32 0.0, %v758
        %v760 = vpop.f32.mrf.mxu0
        %v761 = vadd.f32 0.0, %v760
        %762 = vmatmul.bf16.gmra.mxu0 %v487
        %v763 = vpop.f32.mrf.mxu0
        %v764 = vadd.f32 0.0, %v763
        %v765 = vpop.f32.mrf.mxu0
        %v766 = vadd.f32 0.0, %v765
        %767 = vmatmul.bf16.gmra.mxu0 %v488
        %v768 = vpop.f32.mrf.mxu0
        %v769 = vadd.f32 0.0, %v768
        %v770 = vpop.f32.mrf.mxu0
        %v771 = vadd.f32 0.0, %v770
        %772 = vmatmul.bf16.gmra.mxu0 %v489
        %v773 = vpop.f32.mrf.mxu0
        %v774 = vadd.f32 0.0, %v773
        %v775 = vpop.f32.mrf.mxu0
        %v776 = vadd.f32 0.0, %v775
        %777 = vmatmul.bf16.gmra.mxu0 %v490
        %v778 = vpop.f32.mrf.mxu0
        %v779 = vadd.f32 0.0, %v778
        %v780 = vpop.f32.mrf.mxu0
        %v781 = vadd.f32 0.0, %v780
        %782 = vmatmul.bf16.gmra.mxu0 %v491
        %v783 = vpop.f32.mrf.mxu0
        %v784 = vadd.f32 0.0, %v783
        %v785 = vpop.f32.mrf.mxu0
        %v786 = vadd.f32 0.0, %v785
        %787 = vmatmul.bf16.gmra.mxu0 %v492
        %v788 = vpop.f32.mrf.mxu0
        %v789 = vadd.f32 0.0, %v788
        %v790 = vpop.f32.mrf.mxu0
        %v791 = vadd.f32 0.0, %v790
        %792 = vmatmul.bf16.gmra.mxu0 %v493
        %v793 = vpop.f32.mrf.mxu0
        %v794 = vadd.f32 0.0, %v793
        %v795 = vpop.f32.mrf.mxu0
        %v796 = vadd.f32 0.0, %v795
        %797 = vmatmul.bf16.gmra.mxu0 %v494
        %v798 = vpop.f32.mrf.mxu0
        %v799 = vadd.f32 0.0, %v798
        %v800 = vpop.f32.mrf.mxu0
        %v801 = vadd.f32 0.0, %v800
        %802 = vmatmul.bf16.gmra.mxu0 %v495
        %v803 = vpop.f32.mrf.mxu0
        %v804 = vadd.f32 0.0, %v803
        %v805 = vpop.f32.mrf.mxu0
        %v806 = vadd.f32 0.0, %v805
        %807 = vmatmul.bf16.gmra.mxu0 %v496
        %v808 = vpop.f32.mrf.mxu0
        %v809 = vadd.f32 0.0, %v808
        %v810 = vpop.f32.mrf.mxu0
        %v811 = vadd.f32 0.0, %v810
        %812 = vmatmul.bf16.gmra.mxu0 %v497
        %v813 = vpop.f32.mrf.mxu0
        %v814 = vadd.f32 0.0, %v813
        %v815 = vpop.f32.mrf.mxu0
        %v816 = vadd.f32 0.0, %v815
        %817 = vmatmul.bf16.gmra.mxu0 %v498
        %v818 = vpop.f32.mrf.mxu0
        %v819 = vadd.f32 0.0, %v818
        %v820 = vpop.f32.mrf.mxu0
        %v821 = vadd.f32 0.0, %v820
        %822 = vmatmul.bf16.gmra.mxu0 %v499
        %v823 = vpop.f32.mrf.mxu0
        %v824 = vadd.f32 0.0, %v823
        %v825 = vpop.f32.mrf.mxu0
        %v826 = vadd.f32 0.0, %v825
        %827 = vmatmul.bf16.gmra.mxu0 %v500
        %v828 = vpop.f32.mrf.mxu0
        %v829 = vpop.f32.mrf.mxu0
        %830 = vmatmul.bf16.gmra.mxu0 %v501
        %v831 = vpop.f32.mrf.mxu0
        %v832 = vpop.f32.mrf.mxu0
        %833 = vdwg.mxu0
        %s834 = scalar_lea.vmem %s293, 128 [#allocation6]
        %v835 = vld [vmem:[%s834] sm:$0xff]
        %v836 = vld [vmem:[%s834 + $0x8] sm:$0xff]
        %v837 = vld [vmem:[%s834 + $0x10] sm:$0xff]
        %v838 = vld [vmem:[%s834 + $0x18] sm:$0xff]
        %v839 = vld [vmem:[%s834 + $0x20] sm:$0xff]
        %v840 = vld [vmem:[%s834 + $0x28] sm:$0xff]
        %v841 = vld [vmem:[%s834 + $0x30] sm:$0xff]
        %v842 = vld [vmem:[%s834 + $0x38] sm:$0xff]
        %v843 = vld [vmem:[%s834 + $0x40] sm:$0xff]
        %v844 = vld [vmem:[%s834 + $0x48] sm:$0xff]
        %v845 = vld [vmem:[%s834 + $0x50] sm:$0xff]
        %v846 = vld [vmem:[%s834 + $0x58] sm:$0xff]
        %v847 = vld [vmem:[%s834 + $0x60] sm:$0xff]
        %v848 = vld [vmem:[%s834 + $0x68] sm:$0xff]
        %v849 = vld [vmem:[%s834 + $0x70] sm:$0xff]
        %v850 = vld [vmem:[%s834 + $0x78] sm:$0xff]
        %v867 = vunpack.c.l.b16 %v835
        %v868 = vunpack.c.h.b16 %v835
        %v869 = vunpack.c.l.b16 %v836
        %v870 = vunpack.c.h.b16 %v836
        %v871 = vunpack.c.l.b16 %v837
        %v872 = vunpack.c.h.b16 %v837
        %v873 = vunpack.c.l.b16 %v838
        %v874 = vunpack.c.h.b16 %v838
        %v875 = vunpack.c.l.b16 %v839
        %v876 = vunpack.c.h.b16 %v839
        %v877 = vunpack.c.l.b16 %v840
        %v878 = vunpack.c.h.b16 %v840
        %v879 = vunpack.c.l.b16 %v841
        %v880 = vunpack.c.h.b16 %v841
        %v881 = vunpack.c.l.b16 %v842
        %v882 = vunpack.c.h.b16 %v842
        %v883 = vunpack.c.l.b16 %v843
        %v884 = vunpack.c.h.b16 %v843
        %v885 = vunpack.c.l.b16 %v844
        %v886 = vunpack.c.h.b16 %v844
        %v887 = vunpack.c.l.b16 %v845
        %v888 = vunpack.c.h.b16 %v845
        %v889 = vunpack.c.l.b16 %v846
        %v890 = vunpack.c.h.b16 %v846
        %v891 = vunpack.c.l.b16 %v847
        %v892 = vunpack.c.h.b16 %v847
        %v893 = vunpack.c.l.b16 %v848
        %v894 = vunpack.c.h.b16 %v848
        %v895 = vunpack.c.l.b16 %v849
        %v896 = vunpack.c.h.b16 %v849
        %v897 = vunpack.c.l.b16 %v850
        %v898 = vunpack.c.h.b16 %v850
        %v899 = vpack.c.b16 %v869, %v867
        %v900 = vpack.c.b16 %v870, %v868
        %v901 = vpack.c.b16 %v873, %v871
        %v902 = vpack.c.b16 %v874, %v872
        %v903 = vpack.c.b16 %v877, %v875
        %v904 = vpack.c.b16 %v878, %v876
        %v905 = vpack.c.b16 %v881, %v879
        %v906 = vpack.c.b16 %v882, %v880
        %v907 = vpack.c.b16 %v885, %v883
        %v908 = vpack.c.b16 %v886, %v884
        %v909 = vpack.c.b16 %v889, %v887
        %v910 = vpack.c.b16 %v890, %v888
        %v911 = vpack.c.b16 %v893, %v891
        %v912 = vpack.c.b16 %v894, %v892
        %v913 = vpack.c.b16 %v897, %v895
        %v914 = vpack.c.b16 %v898, %v896
        %931 = vmatpush.bf16.msra.mxu0 %v913
        %932 = vmatpush.bf16.msra.mxu0 %v911
        %933 = vmatpush.bf16.msra.mxu0 %v909
        %934 = vmatpush.bf16.msra.mxu0 %v907
        %935 = vmatpush.bf16.msra.mxu0 %v905
        %936 = vmatpush.bf16.msra.mxu0 %v903
        %937 = vmatpush.bf16.msra.mxu0 %v901
        %938 = vmatpush.bf16.msra.mxu0 %v899
        %939 = vmatmul.bf16.gmra.mxu0 %v480
        %v940 = vpop.f32.mrf.mxu0
        %v941 = vpop.f32.mrf.mxu0
        %942 = vmatmul.bf16.gmra.mxu0 %v481
        %v943 = vpop.f32.mrf.mxu0
        %v944 = vadd.f32 0.0, %v943
        %v945 = vpop.f32.mrf.mxu0
        %v946 = vadd.f32 0.0, %v945
        %947 = vmatmul.bf16.gmra.mxu0 %v482
        %v948 = vpop.f32.mrf.mxu0
        %v949 = vadd.f32 0.0, %v948
        %v950 = vpop.f32.mrf.mxu0
        %v951 = vadd.f32 0.0, %v950
        %952 = vmatmul.bf16.gmra.mxu0 %v483
        %v953 = vpop.f32.mrf.mxu0
        %v954 = vadd.f32 0.0, %v953
        %v955 = vpop.f32.mrf.mxu0
        %v956 = vadd.f32 0.0, %v955
        %957 = vmatmul.bf16.gmra.mxu0 %v484
        %v958 = vpop.f32.mrf.mxu0
        %v959 = vadd.f32 0.0, %v958
        %v960 = vpop.f32.mrf.mxu0
        %v961 = vadd.f32 0.0, %v960
        %962 = vmatmul.bf16.gmra.mxu0 %v485
        %v963 = vpop.f32.mrf.mxu0
        %v964 = vadd.f32 0.0, %v963
        %v965 = vpop.f32.mrf.mxu0
        %v966 = vadd.f32 0.0, %v965
        %967 = vmatmul.bf16.gmra.mxu0 %v486
        %v968 = vpop.f32.mrf.mxu0
        %v969 = vadd.f32 0.0, %v968
        %v970 = vpop.f32.mrf.mxu0
        %v971 = vadd.f32 0.0, %v970
        %972 = vmatmul.bf16.gmra.mxu0 %v487
        %v973 = vpop.f32.mrf.mxu0
        %v974 = vadd.f32 0.0, %v973
        %v975 = vpop.f32.mrf.mxu0
        %v976 = vadd.f32 0.0, %v975
        %977 = vmatmul.bf16.gmra.mxu0 %v488
        %v978 = vpop.f32.mrf.mxu0
        %v979 = vadd.f32 0.0, %v978
        %v980 = vpop.f32.mrf.mxu0
        %v981 = vadd.f32 0.0, %v980
        %982 = vmatmul.bf16.gmra.mxu0 %v489
        %v983 = vpop.f32.mrf.mxu0
        %v984 = vadd.f32 0.0, %v983
        %v985 = vpop.f32.mrf.mxu0
        %v986 = vadd.f32 0.0, %v985
        %987 = vmatmul.bf16.gmra.mxu0 %v490
        %v988 = vpop.f32.mrf.mxu0
        %v989 = vadd.f32 0.0, %v988
        %v990 = vpop.f32.mrf.mxu0
        %v991 = vadd.f32 0.0, %v990
        %992 = vmatmul.bf16.gmra.mxu0 %v491
        %v993 = vpop.f32.mrf.mxu0
        %v994 = vadd.f32 0.0, %v993
        %v995 = vpop.f32.mrf.mxu0
        %v996 = vadd.f32 0.0, %v995
        %997 = vmatmul.bf16.gmra.mxu0 %v492
        %v998 = vpop.f32.mrf.mxu0
        %v999 = vadd.f32 0.0, %v998
        %v1000 = vpop.f32.mrf.mxu0
        %v1001 = vadd.f32 0.0, %v1000
        %1002 = vmatmul.bf16.gmra.mxu0 %v493
        %v1003 = vpop.f32.mrf.mxu0
        %v1004 = vadd.f32 0.0, %v1003
        %v1005 = vpop.f32.mrf.mxu0
        %v1006 = vadd.f32 0.0, %v1005
        %1007 = vmatmul.bf16.gmra.mxu0 %v494
        %v1008 = vpop.f32.mrf.mxu0
        %v1009 = vadd.f32 0.0, %v1008
        %v1010 = vpop.f32.mrf.mxu0
        %v1011 = vadd.f32 0.0, %v1010
        %1012 = vmatmul.bf16.gmra.mxu0 %v495
        %v1013 = vpop.f32.mrf.mxu0
        %v1014 = vadd.f32 0.0, %v1013
        %v1015 = vpop.f32.mrf.mxu0
        %v1016 = vadd.f32 0.0, %v1015
        %1017 = vmatmul.bf16.gmra.mxu0 %v496
        %v1018 = vpop.f32.mrf.mxu0
        %v1019 = vadd.f32 0.0, %v1018
        %v1020 = vpop.f32.mrf.mxu0
        %v1021 = vadd.f32 0.0, %v1020
        %1022 = vmatmul.bf16.gmra.mxu0 %v497
        %v1023 = vpop.f32.mrf.mxu0
        %v1024 = vadd.f32 0.0, %v1023
        %v1025 = vpop.f32.mrf.mxu0
        %v1026 = vadd.f32 0.0, %v1025
        %1027 = vmatmul.bf16.gmra.mxu0 %v498
        %v1028 = vpop.f32.mrf.mxu0
        %v1029 = vadd.f32 0.0, %v1028
        %v1030 = vpop.f32.mrf.mxu0
        %v1031 = vadd.f32 0.0, %v1030
        %1032 = vmatmul.bf16.gmra.mxu0 %v499
        %v1033 = vpop.f32.mrf.mxu0
        %v1034 = vadd.f32 0.0, %v1033
        %v1035 = vpop.f32.mrf.mxu0
        %v1036 = vadd.f32 0.0, %v1035
        %1037 = vmatmul.bf16.gmra.mxu0 %v500
        %v1038 = vpop.f32.mrf.mxu0
        %v1039 = vadd.f32 0.0, %v1038
        %v1040 = vpop.f32.mrf.mxu0
        %v1041 = vadd.f32 0.0, %v1040
        %1042 = vmatmul.bf16.gmra.mxu0 %v501
        %v1043 = vpop.f32.mrf.mxu0
        %v1044 = vpop.f32.mrf.mxu0
        %1045 = vdwg.mxu0
        %1046 = vmatpush.bf16.msra.mxu0 %v914
        %1047 = vmatpush.bf16.msra.mxu0 %v912
        %1048 = vmatpush.bf16.msra.mxu0 %v910
        %1049 = vmatpush.bf16.msra.mxu0 %v908
        %1050 = vmatpush.bf16.msra.mxu0 %v906
        %1051 = vmatpush.bf16.msra.mxu0 %v904
        %1052 = vmatpush.bf16.msra.mxu0 %v902
        %1053 = vmatpush.bf16.msra.mxu0 %v900
        %1054 = vmatmul.bf16.gmra.mxu0 %v480
        %v1055 = vpop.f32.mrf.mxu0
        %v1056 = vpop.f32.mrf.mxu0
        %1057 = vmatmul.bf16.gmra.mxu0 %v481
        %v1058 = vpop.f32.mrf.mxu0
        %v1059 = vadd.f32 0.0, %v1058
        %v1060 = vpop.f32.mrf.mxu0
        %v1061 = vadd.f32 0.0, %v1060
        %1062 = vmatmul.bf16.gmra.mxu0 %v482
        %v1063 = vpop.f32.mrf.mxu0
        %v1064 = vadd.f32 0.0, %v1063
        %v1065 = vpop.f32.mrf.mxu0
        %v1066 = vadd.f32 0.0, %v1065
        %1067 = vmatmul.bf16.gmra.mxu0 %v483
        %v1068 = vpop.f32.mrf.mxu0
        %v1069 = vadd.f32 0.0, %v1068
        %v1070 = vpop.f32.mrf.mxu0
        %v1071 = vadd.f32 0.0, %v1070
        %1072 = vmatmul.bf16.gmra.mxu0 %v484
        %v1073 = vpop.f32.mrf.mxu0
        %v1074 = vadd.f32 0.0, %v1073
        %v1075 = vpop.f32.mrf.mxu0
        %v1076 = vadd.f32 0.0, %v1075
        %1077 = vmatmul.bf16.gmra.mxu0 %v485
        %v1078 = vpop.f32.mrf.mxu0
        %v1079 = vadd.f32 0.0, %v1078
        %v1080 = vpop.f32.mrf.mxu0
        %v1081 = vadd.f32 0.0, %v1080
        %1082 = vmatmul.bf16.gmra.mxu0 %v486
        %v1083 = vpop.f32.mrf.mxu0
        %v1084 = vadd.f32 0.0, %v1083
        %v1085 = vpop.f32.mrf.mxu0
        %v1086 = vadd.f32 0.0, %v1085
        %1087 = vmatmul.bf16.gmra.mxu0 %v487
        %v1088 = vpop.f32.mrf.mxu0
        %v1089 = vadd.f32 0.0, %v1088
        %v1090 = vpop.f32.mrf.mxu0
        %v1091 = vadd.f32 0.0, %v1090
        %1092 = vmatmul.bf16.gmra.mxu0 %v488
        %v1093 = vpop.f32.mrf.mxu0
        %v1094 = vadd.f32 0.0, %v1093
        %v1095 = vpop.f32.mrf.mxu0
        %v1096 = vadd.f32 0.0, %v1095
        %1097 = vmatmul.bf16.gmra.mxu0 %v489
        %v1098 = vpop.f32.mrf.mxu0
        %v1099 = vadd.f32 0.0, %v1098
        %v1100 = vpop.f32.mrf.mxu0
        %v1101 = vadd.f32 0.0, %v1100
        %1102 = vmatmul.bf16.gmra.mxu0 %v490
        %v1103 = vpop.f32.mrf.mxu0
        %v1104 = vadd.f32 0.0, %v1103
        %v1105 = vpop.f32.mrf.mxu0
        %v1106 = vadd.f32 0.0, %v1105
        %1107 = vmatmul.bf16.gmra.mxu0 %v491
        %v1108 = vpop.f32.mrf.mxu0
        %v1109 = vadd.f32 0.0, %v1108
        %v1110 = vpop.f32.mrf.mxu0
        %v1111 = vadd.f32 0.0, %v1110
        %1112 = vmatmul.bf16.gmra.mxu0 %v492
        %v1113 = vpop.f32.mrf.mxu0
        %v1114 = vadd.f32 0.0, %v1113
        %v1115 = vpop.f32.mrf.mxu0
        %v1116 = vadd.f32 0.0, %v1115
        %1117 = vmatmul.bf16.gmra.mxu0 %v493
        %v1118 = vpop.f32.mrf.mxu0
        %v1119 = vadd.f32 0.0, %v1118
        %v1120 = vpop.f32.mrf.mxu0
        %v1121 = vadd.f32 0.0, %v1120
        %1122 = vmatmul.bf16.gmra.mxu0 %v494
        %v1123 = vpop.f32.mrf.mxu0
        %v1124 = vadd.f32 0.0, %v1123
        %v1125 = vpop.f32.mrf.mxu0
        %v1126 = vadd.f32 0.0, %v1125
        %1127 = vmatmul.bf16.gmra.mxu0 %v495
        %v1128 = vpop.f32.mrf.mxu0
        %v1129 = vadd.f32 0.0, %v1128
        %v1130 = vpop.f32.mrf.mxu0
        %v1131 = vadd.f32 0.0, %v1130
        %1132 = vmatmul.bf16.gmra.mxu0 %v496
        %v1133 = vpop.f32.mrf.mxu0
        %v1134 = vadd.f32 0.0, %v1133
        %v1135 = vpop.f32.mrf.mxu0
        %v1136 = vadd.f32 0.0, %v1135
        %1137 = vmatmul.bf16.gmra.mxu0 %v497
        %v1138 = vpop.f32.mrf.mxu0
        %v1139 = vadd.f32 0.0, %v1138
        %v1140 = vpop.f32.mrf.mxu0
        %v1141 = vadd.f32 0.0, %v1140
        %1142 = vmatmul.bf16.gmra.mxu0 %v498
        %v1143 = vpop.f32.mrf.mxu0
        %v1144 = vadd.f32 0.0, %v1143
        %v1145 = vpop.f32.mrf.mxu0
        %v1146 = vadd.f32 0.0, %v1145
        %1147 = vmatmul.bf16.gmra.mxu0 %v499
        %v1148 = vpop.f32.mrf.mxu0
        %v1149 = vadd.f32 0.0, %v1148
        %v1150 = vpop.f32.mrf.mxu0
        %v1151 = vadd.f32 0.0, %v1150
        %1152 = vmatmul.bf16.gmra.mxu0 %v500
        %v1153 = vpop.f32.mrf.mxu0
        %v1154 = vadd.f32 0.0, %v1153
        %v1155 = vpop.f32.mrf.mxu0
        %v1156 = vadd.f32 0.0, %v1155
        %1157 = vmatmul.bf16.gmra.mxu0 %v501
        %v1158 = vpop.f32.mrf.mxu0
        %v1159 = vpop.f32.mrf.mxu0
        %1160 = vdwg.mxu0
        %v1161 = vadd.f32 %v614, %v944
        %v1162 = vadd.f32 %v729, %v1059
        %v1163 = vadd.f32 %v616, %v946
        %v1164 = vadd.f32 %v731, %v1061
        %v1165 = vadd.f32 %v619, %v949
        %v1166 = vadd.f32 %v734, %v1064
        %v1167 = vadd.f32 %v621, %v951
        %v1168 = vadd.f32 %v736, %v1066
        %v1169 = vadd.f32 %v624, %v954
        %v1170 = vadd.f32 %v739, %v1069
        %v1171 = vadd.f32 %v626, %v956
        %v1172 = vadd.f32 %v741, %v1071
        %v1173 = vadd.f32 %v629, %v959
        %v1174 = vadd.f32 %v744, %v1074
        %v1175 = vadd.f32 %v631, %v961
        %v1176 = vadd.f32 %v746, %v1076
        %v1177 = vadd.f32 %v634, %v964
        %v1178 = vadd.f32 %v749, %v1079
        %v1179 = vadd.f32 %v636, %v966
        %v1180 = vadd.f32 %v751, %v1081
        %v1181 = vadd.f32 %v639, %v969
        %v1182 = vadd.f32 %v754, %v1084
        %v1183 = vadd.f32 %v641, %v971
        %v1184 = vadd.f32 %v756, %v1086
        %v1185 = vadd.f32 %v644, %v974
        %v1186 = vadd.f32 %v759, %v1089
        %v1187 = vadd.f32 %v646, %v976
        %v1188 = vadd.f32 %v761, %v1091
        %v1189 = vadd.f32 %v649, %v979
        %v1190 = vadd.f32 %v764, %v1094
        %v1191 = vadd.f32 %v651, %v981
        %v1192 = vadd.f32 %v766, %v1096
        %v1193 = vadd.f32 %v654, %v984
        %v1194 = vadd.f32 %v769, %v1099
        %v1195 = vadd.f32 %v656, %v986
        %v1196 = vadd.f32 %v771, %v1101
        %v1197 = vadd.f32 %v659, %v989
        %v1198 = vadd.f32 %v774, %v1104
        %v1199 = vadd.f32 %v661, %v991
        %v1200 = vadd.f32 %v776, %v1106
        %v1201 = vadd.f32 %v664, %v994
        %v1202 = vadd.f32 %v779, %v1109
        %v1203 = vadd.f32 %v666, %v996
        %v1204 = vadd.f32 %v781, %v1111
        %v1205 = vadd.f32 %v669, %v999
        %v1206 = vadd.f32 %v784, %v1114
        %v1207 = vadd.f32 %v671, %v1001
        %v1208 = vadd.f32 %v786, %v1116
        %v1209 = vadd.f32 %v674, %v1004
        %v1210 = vadd.f32 %v789, %v1119
        %v1211 = vadd.f32 %v676, %v1006
        %v1212 = vadd.f32 %v791, %v1121
        %v1213 = vadd.f32 %v679, %v1009
        %v1214 = vadd.f32 %v794, %v1124
        %v1215 = vadd.f32 %v681, %v1011
        %v1216 = vadd.f32 %v796, %v1126
        %v1217 = vadd.f32 %v684, %v1014
        %v1218 = vadd.f32 %v799, %v1129
        %v1219 = vadd.f32 %v686, %v1016
        %v1220 = vadd.f32 %v801, %v1131
        %v1221 = vadd.f32 %v689, %v1019
        %v1222 = vadd.f32 %v804, %v1134
        %v1223 = vadd.f32 %v691, %v1021
        %v1224 = vadd.f32 %v806, %v1136
        %v1225 = vadd.f32 %v694, %v1024
        %v1226 = vadd.f32 %v809, %v1139
        %v1227 = vadd.f32 %v696, %v1026
        %v1228 = vadd.f32 %v811, %v1141
        %v1229 = vadd.f32 %v699, %v1029
        %v1230 = vadd.f32 %v814, %v1144
        %v1231 = vadd.f32 %v701, %v1031
        %v1232 = vadd.f32 %v816, %v1146
        %v1233 = vadd.f32 %v704, %v1034
        %v1234 = vadd.f32 %v819, %v1149
        %v1235 = vadd.f32 %v706, %v1036
        %v1236 = vadd.f32 %v821, %v1151
        %v1237 = vadd.f32 %v709, %v1039
        %v1238 = vadd.f32 %v824, %v1154
        %v1239 = vadd.f32 %v711, %v1041
        %v1240 = vadd.f32 %v826, %v1156
        %s1241 = scalar_lea.vmem %s293, 256 [#allocation6]
        %v1242 = vld [vmem:[%s1241] sm:$0xff]
        %v1243 = vld [vmem:[%s1241 + $0x8] sm:$0xff]
        %v1244 = vld [vmem:[%s1241 + $0x10] sm:$0xff]
        %v1245 = vld [vmem:[%s1241 + $0x18] sm:$0xff]
        %v1246 = vld [vmem:[%s1241 + $0x20] sm:$0xff]
        %v1247 = vld [vmem:[%s1241 + $0x28] sm:$0xff]
        %v1248 = vld [vmem:[%s1241 + $0x30] sm:$0xff]
        %v1249 = vld [vmem:[%s1241 + $0x38] sm:$0xff]
        %v1250 = vld [vmem:[%s1241 + $0x40] sm:$0xff]
        %v1251 = vld [vmem:[%s1241 + $0x48] sm:$0xff]
        %v1252 = vld [vmem:[%s1241 + $0x50] sm:$0xff]
        %v1253 = vld [vmem:[%s1241 + $0x58] sm:$0xff]
        %v1254 = vld [vmem:[%s1241 + $0x60] sm:$0xff]
        %v1255 = vld [vmem:[%s1241 + $0x68] sm:$0xff]
        %v1256 = vld [vmem:[%s1241 + $0x70] sm:$0xff]
        %v1257 = vld [vmem:[%s1241 + $0x78] sm:$0xff]
        %v1274 = vunpack.c.l.b16 %v1242
        %v1275 = vunpack.c.h.b16 %v1242
        %v1276 = vunpack.c.l.b16 %v1243
        %v1277 = vunpack.c.h.b16 %v1243
        %v1278 = vunpack.c.l.b16 %v1244
        %v1279 = vunpack.c.h.b16 %v1244
        %v1280 = vunpack.c.l.b16 %v1245
        %v1281 = vunpack.c.h.b16 %v1245
        %v1282 = vunpack.c.l.b16 %v1246
        %v1283 = vunpack.c.h.b16 %v1246
        %v1284 = vunpack.c.l.b16 %v1247
        %v1285 = vunpack.c.h.b16 %v1247
        %v1286 = vunpack.c.l.b16 %v1248
        %v1287 = vunpack.c.h.b16 %v1248
        %v1288 = vunpack.c.l.b16 %v1249
        %v1289 = vunpack.c.h.b16 %v1249
        %v1290 = vunpack.c.l.b16 %v1250
        %v1291 = vunpack.c.h.b16 %v1250
        %v1292 = vunpack.c.l.b16 %v1251
        %v1293 = vunpack.c.h.b16 %v1251
        %v1294 = vunpack.c.l.b16 %v1252
        %v1295 = vunpack.c.h.b16 %v1252
        %v1296 = vunpack.c.l.b16 %v1253
        %v1297 = vunpack.c.h.b16 %v1253
        %v1298 = vunpack.c.l.b16 %v1254
        %v1299 = vunpack.c.h.b16 %v1254
        %v1300 = vunpack.c.l.b16 %v1255
        %v1301 = vunpack.c.h.b16 %v1255
        %v1302 = vunpack.c.l.b16 %v1256
        %v1303 = vunpack.c.h.b16 %v1256
        %v1304 = vunpack.c.l.b16 %v1257
        %v1305 = vunpack.c.h.b16 %v1257
        %v1306 = vpack.c.b16 %v1276, %v1274
        %v1307 = vpack.c.b16 %v1277, %v1275
        %v1308 = vpack.c.b16 %v1280, %v1278
        %v1309 = vpack.c.b16 %v1281, %v1279
        %v1310 = vpack.c.b16 %v1284, %v1282
        %v1311 = vpack.c.b16 %v1285, %v1283
        %v1312 = vpack.c.b16 %v1288, %v1286
        %v1313 = vpack.c.b16 %v1289, %v1287
        %v1314 = vpack.c.b16 %v1292, %v1290
        %v1315 = vpack.c.b16 %v1293, %v1291
        %v1316 = vpack.c.b16 %v1296, %v1294
        %v1317 = vpack.c.b16 %v1297, %v1295
        %v1318 = vpack.c.b16 %v1300, %v1298
        %v1319 = vpack.c.b16 %v1301, %v1299
        %v1320 = vpack.c.b16 %v1304, %v1302
        %v1321 = vpack.c.b16 %v1305, %v1303
        %1338 = vmatpush.bf16.msra.mxu0 %v1320
        %1339 = vmatpush.bf16.msra.mxu0 %v1318
        %1340 = vmatpush.bf16.msra.mxu0 %v1316
        %1341 = vmatpush.bf16.msra.mxu0 %v1314
        %1342 = vmatpush.bf16.msra.mxu0 %v1312
        %1343 = vmatpush.bf16.msra.mxu0 %v1310
        %1344 = vmatpush.bf16.msra.mxu0 %v1308
        %1345 = vmatpush.bf16.msra.mxu0 %v1306
        %1346 = vmatmul.bf16.gmra.mxu0 %v480
        %v1347 = vpop.f32.mrf.mxu0
        %v1348 = vpop.f32.mrf.mxu0
        %1349 = vmatmul.bf16.gmra.mxu0 %v481
        %v1350 = vpop.f32.mrf.mxu0
        %v1351 = vpop.f32.mrf.mxu0
        %1352 = vmatmul.bf16.gmra.mxu0 %v482
        %v1353 = vpop.f32.mrf.mxu0
        %v1354 = vadd.f32 0.0, %v1353
        %v1355 = vpop.f32.mrf.mxu0
        %v1356 = vadd.f32 0.0, %v1355
        %1357 = vmatmul.bf16.gmra.mxu0 %v483
        %v1358 = vpop.f32.mrf.mxu0
        %v1359 = vadd.f32 0.0, %v1358
        %v1360 = vpop.f32.mrf.mxu0
        %v1361 = vadd.f32 0.0, %v1360
        %1362 = vmatmul.bf16.gmra.mxu0 %v484
        %v1363 = vpop.f32.mrf.mxu0
        %v1364 = vadd.f32 0.0, %v1363
        %v1365 = vpop.f32.mrf.mxu0
        %v1366 = vadd.f32 0.0, %v1365
        %1367 = vmatmul.bf16.gmra.mxu0 %v485
        %v1368 = vpop.f32.mrf.mxu0
        %v1369 = vadd.f32 0.0, %v1368
        %v1370 = vpop.f32.mrf.mxu0
        %v1371 = vadd.f32 0.0, %v1370
        %1372 = vmatmul.bf16.gmra.mxu0 %v486
        %v1373 = vpop.f32.mrf.mxu0
        %v1374 = vadd.f32 0.0, %v1373
        %v1375 = vpop.f32.mrf.mxu0
        %v1376 = vadd.f32 0.0, %v1375
        %1377 = vmatmul.bf16.gmra.mxu0 %v487
        %v1378 = vpop.f32.mrf.mxu0
        %v1379 = vadd.f32 0.0, %v1378
        %v1380 = vpop.f32.mrf.mxu0
        %v1381 = vadd.f32 0.0, %v1380
        %1382 = vmatmul.bf16.gmra.mxu0 %v488
        %v1383 = vpop.f32.mrf.mxu0
        %v1384 = vadd.f32 0.0, %v1383
        %v1385 = vpop.f32.mrf.mxu0
        %v1386 = vadd.f32 0.0, %v1385
        %1387 = vmatmul.bf16.gmra.mxu0 %v489
        %v1388 = vpop.f32.mrf.mxu0
        %v1389 = vadd.f32 0.0, %v1388
        %v1390 = vpop.f32.mrf.mxu0
        %v1391 = vadd.f32 0.0, %v1390
        %1392 = vmatmul.bf16.gmra.mxu0 %v490
        %v1393 = vpop.f32.mrf.mxu0
        %v1394 = vadd.f32 0.0, %v1393
        %v1395 = vpop.f32.mrf.mxu0
        %v1396 = vadd.f32 0.0, %v1395
        %1397 = vmatmul.bf16.gmra.mxu0 %v491
        %v1398 = vpop.f32.mrf.mxu0
        %v1399 = vadd.f32 0.0, %v1398
        %v1400 = vpop.f32.mrf.mxu0
        %v1401 = vadd.f32 0.0, %v1400
        %1402 = vmatmul.bf16.gmra.mxu0 %v492
        %v1403 = vpop.f32.mrf.mxu0
        %v1404 = vadd.f32 0.0, %v1403
        %v1405 = vpop.f32.mrf.mxu0
        %v1406 = vadd.f32 0.0, %v1405
        %1407 = vmatmul.bf16.gmra.mxu0 %v493
        %v1408 = vpop.f32.mrf.mxu0
        %v1409 = vadd.f32 0.0, %v1408
        %v1410 = vpop.f32.mrf.mxu0
        %v1411 = vadd.f32 0.0, %v1410
        %1412 = vmatmul.bf16.gmra.mxu0 %v494
        %v1413 = vpop.f32.mrf.mxu0
        %v1414 = vadd.f32 0.0, %v1413
        %v1415 = vpop.f32.mrf.mxu0
        %v1416 = vadd.f32 0.0, %v1415
        %1417 = vmatmul.bf16.gmra.mxu0 %v495
        %v1418 = vpop.f32.mrf.mxu0
        %v1419 = vadd.f32 0.0, %v1418
        %v1420 = vpop.f32.mrf.mxu0
        %v1421 = vadd.f32 0.0, %v1420
        %1422 = vmatmul.bf16.gmra.mxu0 %v496
        %v1423 = vpop.f32.mrf.mxu0
        %v1424 = vadd.f32 0.0, %v1423
        %v1425 = vpop.f32.mrf.mxu0
        %v1426 = vadd.f32 0.0, %v1425
        %1427 = vmatmul.bf16.gmra.mxu0 %v497
        %v1428 = vpop.f32.mrf.mxu0
        %v1429 = vadd.f32 0.0, %v1428
        %v1430 = vpop.f32.mrf.mxu0
        %v1431 = vadd.f32 0.0, %v1430
        %1432 = vmatmul.bf16.gmra.mxu0 %v498
        %v1433 = vpop.f32.mrf.mxu0
        %v1434 = vadd.f32 0.0, %v1433
        %v1435 = vpop.f32.mrf.mxu0
        %v1436 = vadd.f32 0.0, %v1435
        %1437 = vmatmul.bf16.gmra.mxu0 %v499
        %v1438 = vpop.f32.mrf.mxu0
        %v1439 = vadd.f32 0.0, %v1438
        %v1440 = vpop.f32.mrf.mxu0
        %v1441 = vadd.f32 0.0, %v1440
        %1442 = vmatmul.bf16.gmra.mxu0 %v500
        %v1443 = vpop.f32.mrf.mxu0
        %v1444 = vadd.f32 0.0, %v1443
        %v1445 = vpop.f32.mrf.mxu0
        %v1446 = vadd.f32 0.0, %v1445
        %1447 = vmatmul.bf16.gmra.mxu0 %v501
        %v1448 = vpop.f32.mrf.mxu0
        %v1449 = vadd.f32 0.0, %v1448
        %v1450 = vpop.f32.mrf.mxu0
        %v1451 = vadd.f32 0.0, %v1450
        %1452 = vdwg.mxu0
        %1453 = vmatpush.bf16.msra.mxu0 %v1321
        %1454 = vmatpush.bf16.msra.mxu0 %v1319
        %1455 = vmatpush.bf16.msra.mxu0 %v1317
        %1456 = vmatpush.bf16.msra.mxu0 %v1315
        %1457 = vmatpush.bf16.msra.mxu0 %v1313
        %1458 = vmatpush.bf16.msra.mxu0 %v1311
        %1459 = vmatpush.bf16.msra.mxu0 %v1309
        %1460 = vmatpush.bf16.msra.mxu0 %v1307
        %1461 = vmatmul.bf16.gmra.mxu0 %v480
        %v1462 = vpop.f32.mrf.mxu0
        %v1463 = vpop.f32.mrf.mxu0
        %1464 = vmatmul.bf16.gmra.mxu0 %v481
        %v1465 = vpop.f32.mrf.mxu0
        %v1466 = vpop.f32.mrf.mxu0
        %1467 = vmatmul.bf16.gmra.mxu0 %v482
        %v1468 = vpop.f32.mrf.mxu0
        %v1469 = vadd.f32 0.0, %v1468
        %v1470 = vpop.f32.mrf.mxu0
        %v1471 = vadd.f32 0.0, %v1470
        %1472 = vmatmul.bf16.gmra.mxu0 %v483
        %v1473 = vpop.f32.mrf.mxu0
        %v1474 = vadd.f32 0.0, %v1473
        %v1475 = vpop.f32.mrf.mxu0
        %v1476 = vadd.f32 0.0, %v1475
        %1477 = vmatmul.bf16.gmra.mxu0 %v484
        %v1478 = vpop.f32.mrf.mxu0
        %v1479 = vadd.f32 0.0, %v1478
        %v1480 = vpop.f32.mrf.mxu0
        %v1481 = vadd.f32 0.0, %v1480
        %1482 = vmatmul.bf16.gmra.mxu0 %v485
        %v1483 = vpop.f32.mrf.mxu0
        %v1484 = vadd.f32 0.0, %v1483
        %v1485 = vpop.f32.mrf.mxu0
        %v1486 = vadd.f32 0.0, %v1485
        %1487 = vmatmul.bf16.gmra.mxu0 %v486
        %v1488 = vpop.f32.mrf.mxu0
        %v1489 = vadd.f32 0.0, %v1488
        %v1490 = vpop.f32.mrf.mxu0
        %v1491 = vadd.f32 0.0, %v1490
        %1492 = vmatmul.bf16.gmra.mxu0 %v487
        %v1493 = vpop.f32.mrf.mxu0
        %v1494 = vadd.f32 0.0, %v1493
        %v1495 = vpop.f32.mrf.mxu0
        %v1496 = vadd.f32 0.0, %v1495
        %1497 = vmatmul.bf16.gmra.mxu0 %v488
        %v1498 = vpop.f32.mrf.mxu0
        %v1499 = vadd.f32 0.0, %v1498
        %v1500 = vpop.f32.mrf.mxu0
        %v1501 = vadd.f32 0.0, %v1500
        %1502 = vmatmul.bf16.gmra.mxu0 %v489
        %v1503 = vpop.f32.mrf.mxu0
        %v1504 = vadd.f32 0.0, %v1503
        %v1505 = vpop.f32.mrf.mxu0
        %v1506 = vadd.f32 0.0, %v1505
        %1507 = vmatmul.bf16.gmra.mxu0 %v490
        %v1508 = vpop.f32.mrf.mxu0
        %v1509 = vadd.f32 0.0, %v1508
        %v1510 = vpop.f32.mrf.mxu0
        %v1511 = vadd.f32 0.0, %v1510
        %1512 = vmatmul.bf16.gmra.mxu0 %v491
        %v1513 = vpop.f32.mrf.mxu0
        %v1514 = vadd.f32 0.0, %v1513
        %v1515 = vpop.f32.mrf.mxu0
        %v1516 = vadd.f32 0.0, %v1515
        %1517 = vmatmul.bf16.gmra.mxu0 %v492
        %v1518 = vpop.f32.mrf.mxu0
        %v1519 = vadd.f32 0.0, %v1518
        %v1520 = vpop.f32.mrf.mxu0
        %v1521 = vadd.f32 0.0, %v1520
        %1522 = vmatmul.bf16.gmra.mxu0 %v493
        %v1523 = vpop.f32.mrf.mxu0
        %v1524 = vadd.f32 0.0, %v1523
        %v1525 = vpop.f32.mrf.mxu0
        %v1526 = vadd.f32 0.0, %v1525
        %1527 = vmatmul.bf16.gmra.mxu0 %v494
        %v1528 = vpop.f32.mrf.mxu0
        %v1529 = vadd.f32 0.0, %v1528
        %v1530 = vpop.f32.mrf.mxu0
        %v1531 = vadd.f32 0.0, %v1530
        %1532 = vmatmul.bf16.gmra.mxu0 %v495
        %v1533 = vpop.f32.mrf.mxu0
        %v1534 = vadd.f32 0.0, %v1533
        %v1535 = vpop.f32.mrf.mxu0
        %v1536 = vadd.f32 0.0, %v1535
        %1537 = vmatmul.bf16.gmra.mxu0 %v496
        %v1538 = vpop.f32.mrf.mxu0
        %v1539 = vadd.f32 0.0, %v1538
        %v1540 = vpop.f32.mrf.mxu0
        %v1541 = vadd.f32 0.0, %v1540
        %1542 = vmatmul.bf16.gmra.mxu0 %v497
        %v1543 = vpop.f32.mrf.mxu0
        %v1544 = vadd.f32 0.0, %v1543
        %v1545 = vpop.f32.mrf.mxu0
        %v1546 = vadd.f32 0.0, %v1545
        %1547 = vmatmul.bf16.gmra.mxu0 %v498
        %v1548 = vpop.f32.mrf.mxu0
        %v1549 = vadd.f32 0.0, %v1548
        %v1550 = vpop.f32.mrf.mxu0
        %v1551 = vadd.f32 0.0, %v1550
        %1552 = vmatmul.bf16.gmra.mxu0 %v499
        %v1553 = vpop.f32.mrf.mxu0
        %v1554 = vadd.f32 0.0, %v1553
        %v1555 = vpop.f32.mrf.mxu0
        %v1556 = vadd.f32 0.0, %v1555
        %1557 = vmatmul.bf16.gmra.mxu0 %v500
        %v1558 = vpop.f32.mrf.mxu0
        %v1559 = vadd.f32 0.0, %v1558
        %v1560 = vpop.f32.mrf.mxu0
        %v1561 = vadd.f32 0.0, %v1560
        %1562 = vmatmul.bf16.gmra.mxu0 %v501
        %v1563 = vpop.f32.mrf.mxu0
        %v1564 = vadd.f32 0.0, %v1563
        %v1565 = vpop.f32.mrf.mxu0
        %v1566 = vadd.f32 0.0, %v1565
        %1567 = vdwg.mxu0
        %v1568 = vadd.f32 %v1161, %v1354
        %v1569 = vadd.f32 %v1162, %v1469
        %v1570 = vadd.f32 %v1163, %v1356
        %v1571 = vadd.f32 %v1164, %v1471
        %v1572 = vadd.f32 %v1165, %v1359
        %v1573 = vadd.f32 %v1166, %v1474
        %v1574 = vadd.f32 %v1167, %v1361
        %v1575 = vadd.f32 %v1168, %v1476
        %v1576 = vadd.f32 %v1169, %v1364
        %v1577 = vadd.f32 %v1170, %v1479
        %v1578 = vadd.f32 %v1171, %v1366
        %v1579 = vadd.f32 %v1172, %v1481
        %v1580 = vadd.f32 %v1173, %v1369
        %v1581 = vadd.f32 %v1174, %v1484
        %v1582 = vadd.f32 %v1175, %v1371
        %v1583 = vadd.f32 %v1176, %v1486
        %v1584 = vadd.f32 %v1177, %v1374
        %v1585 = vadd.f32 %v1178, %v1489
        %v1586 = vadd.f32 %v1179, %v1376
        %v1587 = vadd.f32 %v1180, %v1491
        %v1588 = vadd.f32 %v1181, %v1379
        %v1589 = vadd.f32 %v1182, %v1494
        %v1590 = vadd.f32 %v1183, %v1381
        %v1591 = vadd.f32 %v1184, %v1496
        %v1592 = vadd.f32 %v1185, %v1384
        %v1593 = vadd.f32 %v1186, %v1499
        %v1594 = vadd.f32 %v1187, %v1386
        %v1595 = vadd.f32 %v1188, %v1501
        %v1596 = vadd.f32 %v1189, %v1389
        %v1597 = vadd.f32 %v1190, %v1504
        %v1598 = vadd.f32 %v1191, %v1391
        %v1599 = vadd.f32 %v1192, %v1506
        %v1600 = vadd.f32 %v1193, %v1394
        %v1601 = vadd.f32 %v1194, %v1509
        %v1602 = vadd.f32 %v1195, %v1396
        %v1603 = vadd.f32 %v1196, %v1511
        %v1604 = vadd.f32 %v1197, %v1399
        %v1605 = vadd.f32 %v1198, %v1514
        %v1606 = vadd.f32 %v1199, %v1401
        %v1607 = vadd.f32 %v1200, %v1516
        %v1608 = vadd.f32 %v1201, %v1404
        %v1609 = vadd.f32 %v1202, %v1519
        %v1610 = vadd.f32 %v1203, %v1406
        %v1611 = vadd.f32 %v1204, %v1521
        %v1612 = vadd.f32 %v1205, %v1409
        %v1613 = vadd.f32 %v1206, %v1524
        %v1614 = vadd.f32 %v1207, %v1411
        %v1615 = vadd.f32 %v1208, %v1526
        %v1616 = vadd.f32 %v1209, %v1414
        %v1617 = vadd.f32 %v1210, %v1529
        %v1618 = vadd.f32 %v1211, %v1416
        %v1619 = vadd.f32 %v1212, %v1531
        %v1620 = vadd.f32 %v1213, %v1419
        %v1621 = vadd.f32 %v1214, %v1534
        %v1622 = vadd.f32 %v1215, %v1421
        %v1623 = vadd.f32 %v1216, %v1536
        %v1624 = vadd.f32 %v1217, %v1424
        %v1625 = vadd.f32 %v1218, %v1539
        %v1626 = vadd.f32 %v1219, %v1426
        %v1627 = vadd.f32 %v1220, %v1541
        %v1628 = vadd.f32 %v1221, %v1429
        %v1629 = vadd.f32 %v1222, %v1544
        %v1630 = vadd.f32 %v1223, %v1431
        %v1631 = vadd.f32 %v1224, %v1546
        %v1632 = vadd.f32 %v1225, %v1434
        %v1633 = vadd.f32 %v1226, %v1549
        %v1634 = vadd.f32 %v1227, %v1436
        %v1635 = vadd.f32 %v1228, %v1551
        %v1636 = vadd.f32 %v1229, %v1439
        %v1637 = vadd.f32 %v1230, %v1554
        %v1638 = vadd.f32 %v1231, %v1441
        %v1639 = vadd.f32 %v1232, %v1556
        %v1640 = vadd.f32 %v1233, %v1444
        %v1641 = vadd.f32 %v1234, %v1559
        %v1642 = vadd.f32 %v1235, %v1446
        %v1643 = vadd.f32 %v1236, %v1561
        %v1644 = vadd.f32 %v1237, %v1449
        %v1645 = vadd.f32 %v1238, %v1564
        %v1646 = vadd.f32 %v1239, %v1451
        %v1647 = vadd.f32 %v1240, %v1566
        %p1648 = scmp.eq.s32.totalorder %s24, 0
        // Predicated region
        $region57: #{tpu_custom_call.1} parent=39 // pred_check
          %p1649 = pneg %p1648
        $region58: #{tpu_custom_call.1} parent=39 // pred_check_branch
          %1651 = sbr.rel (%p1649) target = $region60
        $region59: #{tpu_custom_call.1} parent=39 // pred_region
          %1652 = vst [vmem:[#allocation2] sm:$0xff] %v1568
          %1653 = vst [vmem:[#allocation2 + $0x8] sm:$0xff] %v1569
          %1654 = vst [vmem:[#allocation2 + $0x10] sm:$0xff] %v1570
          %1655 = vst [vmem:[#allocation2 + $0x18] sm:$0xff] %v1571
          %1656 = vst [vmem:[#allocation2 + $0x20] sm:$0xff] %v1572
          %1657 = vst [vmem:[#allocation2 + $0x28] sm:$0xff] %v1573
          %1658 = vst [vmem:[#allocation2 + $0x30] sm:$0xff] %v1574
          %1659 = vst [vmem:[#allocation2 + $0x38] sm:$0xff] %v1575
          %1660 = vst [vmem:[#allocation2 + $0x40] sm:$0xff] %v1576
          %1661 = vst [vmem:[#allocation2 + $0x48] sm:$0xff] %v1577
          %1662 = vst [vmem:[#allocation2 + $0x50] sm:$0xff] %v1578
          %1663 = vst [vmem:[#allocation2 + $0x58] sm:$0xff] %v1579
          %1664 = vst [vmem:[#allocation2 + $0x60] sm:$0xff] %v1580
          %1665 = vst [vmem:[#allocation2 + $0x68] sm:$0xff] %v1581
          %1666 = vst [vmem:[#allocation2 + $0x70] sm:$0xff] %v1582
          %1667 = vst [vmem:[#allocation2 + $0x78] sm:$0xff] %v1583
          %1668 = vst [vmem:[#allocation2 + $0x80] sm:$0xff] %v1584
          %1669 = vst [vmem:[#allocation2 + $0x88] sm:$0xff] %v1585
          %1670 = vst [vmem:[#allocation2 + $0x90] sm:$0xff] %v1586
          %1671 = vst [vmem:[#allocation2 + $0x98] sm:$0xff] %v1587
          %1672 = vst [vmem:[#allocation2 + $0xa0] sm:$0xff] %v1588
          %1673 = vst [vmem:[#allocation2 + $0xa8] sm:$0xff] %v1589
          %1674 = vst [vmem:[#allocation2 + $0xb0] sm:$0xff] %v1590
          %1675 = vst [vmem:[#allocation2 + $0xb8] sm:$0xff] %v1591
          %1676 = vst [vmem:[#allocation2 + $0xc0] sm:$0xff] %v1592
          %1677 = vst [vmem:[#allocation2 + $0xc8] sm:$0xff] %v1593
          %1678 = vst [vmem:[#allocation2 + $0xd0] sm:$0xff] %v1594
          %1679 = vst [vmem:[#allocation2 + $0xd8] sm:$0xff] %v1595
          %1680 = vst [vmem:[#allocation2 + $0xe0] sm:$0xff] %v1596
          %1681 = vst [vmem:[#allocation2 + $0xe8] sm:$0xff] %v1597
          %1682 = vst [vmem:[#allocation2 + $0xf0] sm:$0xff] %v1598
          %1683 = vst [vmem:[#allocation2 + $0xf8] sm:$0xff] %v1599
          %1684 = vst [vmem:[#allocation2 + $0x100] sm:$0xff] %v1600
          %1685 = vst [vmem:[#allocation2 + $0x108] sm:$0xff] %v1601
          %1686 = vst [vmem:[#allocation2 + $0x110] sm:$0xff] %v1602
          %1687 = vst [vmem:[#allocation2 + $0x118] sm:$0xff] %v1603
          %1688 = vst [vmem:[#allocation2 + $0x120] sm:$0xff] %v1604
          %1689 = vst [vmem:[#allocation2 + $0x128] sm:$0xff] %v1605
          %1690 = vst [vmem:[#allocation2 + $0x130] sm:$0xff] %v1606
          %1691 = vst [vmem:[#allocation2 + $0x138] sm:$0xff] %v1607
          %1692 = vst [vmem:[#allocation2 + $0x140] sm:$0xff] %v1608
          %1693 = vst [vmem:[#allocation2 + $0x148] sm:$0xff] %v1609
          %1694 = vst [vmem:[#allocation2 + $0x150] sm:$0xff] %v1610
          %1695 = vst [vmem:[#allocation2 + $0x158] sm:$0xff] %v1611
          %1696 = vst [vmem:[#allocation2 + $0x160] sm:$0xff] %v1612
          %1697 = vst [vmem:[#allocation2 + $0x168] sm:$0xff] %v1613
          %1698 = vst [vmem:[#allocation2 + $0x170] sm:$0xff] %v1614
          %1699 = vst [vmem:[#allocation2 + $0x178] sm:$0xff] %v1615
          %1700 = vst [vmem:[#allocation2 + $0x180] sm:$0xff] %v1616
          %1701 = vst [vmem:[#allocation2 + $0x188] sm:$0xff] %v1617
          %1702 = vst [vmem:[#allocation2 + $0x190] sm:$0xff] %v1618
          %1703 = vst [vmem:[#allocation2 + $0x198] sm:$0xff] %v1619
          %1704 = vst [vmem:[#allocation2 + $0x1a0] sm:$0xff] %v1620
          %1705 = vst [vmem:[#allocation2 + $0x1a8] sm:$0xff] %v1621
          %1706 = vst [vmem:[#allocation2 + $0x1b0] sm:$0xff] %v1622
          %1707 = vst [vmem:[#allocation2 + $0x1b8] sm:$0xff] %v1623
          %1708 = vst [vmem:[#allocation2 + $0x1c0] sm:$0xff] %v1624
          %1709 = vst [vmem:[#allocation2 + $0x1c8] sm:$0xff] %v1625
          %1710 = vst [vmem:[#allocation2 + $0x1d0] sm:$0xff] %v1626
          %1711 = vst [vmem:[#allocation2 + $0x1d8] sm:$0xff] %v1627
          %1712 = vst [vmem:[#allocation2 + $0x1e0] sm:$0xff] %v1628
          %1713 = vst [vmem:[#allocation2 + $0x1e8] sm:$0xff] %v1629
          %1714 = vst [vmem:[#allocation2 + $0x1f0] sm:$0xff] %v1630
          %1715 = vst [vmem:[#allocation2 + $0x1f8] sm:$0xff] %v1631
          %1716 = vst [vmem:[#allocation2 + $0x200] sm:$0xff] %v1632
          %1717 = vst [vmem:[#allocation2 + $0x208] sm:$0xff] %v1633
          %1718 = vst [vmem:[#allocation2 + $0x210] sm:$0xff] %v1634
          %1719 = vst [vmem:[#allocation2 + $0x218] sm:$0xff] %v1635
          %1720 = vst [vmem:[#allocation2 + $0x220] sm:$0xff] %v1636
          %1721 = vst [vmem:[#allocation2 + $0x228] sm:$0xff] %v1637
          %1722 = vst [vmem:[#allocation2 + $0x230] sm:$0xff] %v1638
          %1723 = vst [vmem:[#allocation2 + $0x238] sm:$0xff] %v1639
          %1724 = vst [vmem:[#allocation2 + $0x240] sm:$0xff] %v1640
          %1725 = vst [vmem:[#allocation2 + $0x248] sm:$0xff] %v1641
          %1726 = vst [vmem:[#allocation2 + $0x250] sm:$0xff] %v1642
          %1727 = vst [vmem:[#allocation2 + $0x258] sm:$0xff] %v1643
          %1728 = vst [vmem:[#allocation2 + $0x260] sm:$0xff] %v1644
          %1729 = vst [vmem:[#allocation2 + $0x268] sm:$0xff] %v1645
          %1730 = vst [vmem:[#allocation2 + $0x270] sm:$0xff] %v1646
          %1731 = vst [vmem:[#allocation2 + $0x278] sm:$0xff] %v1647
        $region60: #{tpu_custom_call.1} parent=39 // pred_fallthru
          _
        %p1732 = scmp.gt.s32.totalorder %s24, 0
        // Predicated region
        $region61: #{tpu_custom_call.1} parent=39 // pred_check
          %p1733 = pneg %p1732
        $region62: #{tpu_custom_call.1} parent=39 // pred_check_branch
          %1735 = sbr.rel (%p1733) target = $region64
        $region63: #{tpu_custom_call.1} parent=39 // pred_region
          %v1736 = vld [vmem:[#allocation2] sm:$0xff]
          %v1737 = vld [vmem:[#allocation2 + $0x8] sm:$0xff]
          %v1738 = vld [vmem:[#allocation2 + $0x10] sm:$0xff]
          %v1739 = vld [vmem:[#allocation2 + $0x18] sm:$0xff]
          %v1740 = vld [vmem:[#allocation2 + $0x20] sm:$0xff]
          %v1741 = vld [vmem:[#allocation2 + $0x28] sm:$0xff]
          %v1742 = vld [vmem:[#allocation2 + $0x30] sm:$0xff]
          %v1743 = vld [vmem:[#allocation2 + $0x38] sm:$0xff]
          %v1744 = vld [vmem:[#allocation2 + $0x40] sm:$0xff]
          %v1745 = vld [vmem:[#allocation2 + $0x48] sm:$0xff]
          %v1746 = vld [vmem:[#allocation2 + $0x50] sm:$0xff]
          %v1747 = vld [vmem:[#allocation2 + $0x58] sm:$0xff]
          %v1748 = vld [vmem:[#allocation2 + $0x60] sm:$0xff]
          %v1749 = vld [vmem:[#allocation2 + $0x68] sm:$0xff]
          %v1750 = vld [vmem:[#allocation2 + $0x70] sm:$0xff]
          %v1751 = vld [vmem:[#allocation2 + $0x78] sm:$0xff]
          %v1752 = vld [vmem:[#allocation2 + $0x80] sm:$0xff]
          %v1753 = vld [vmem:[#allocation2 + $0x88] sm:$0xff]
          %v1754 = vld [vmem:[#allocation2 + $0x90] sm:$0xff]
          %v1755 = vld [vmem:[#allocation2 + $0x98] sm:$0xff]
          %v1756 = vld [vmem:[#allocation2 + $0xa0] sm:$0xff]
          %v1757 = vld [vmem:[#allocation2 + $0xa8] sm:$0xff]
          %v1758 = vld [vmem:[#allocation2 + $0xb0] sm:$0xff]
          %v1759 = vld [vmem:[#allocation2 + $0xb8] sm:$0xff]
          %v1760 = vld [vmem:[#allocation2 + $0xc0] sm:$0xff]
          %v1761 = vld [vmem:[#allocation2 + $0xc8] sm:$0xff]
          %v1762 = vld [vmem:[#allocation2 + $0xd0] sm:$0xff]
          %v1763 = vld [vmem:[#allocation2 + $0xd8] sm:$0xff]
          %v1764 = vld [vmem:[#allocation2 + $0xe0] sm:$0xff]
          %v1765 = vld [vmem:[#allocation2 + $0xe8] sm:$0xff]
          %v1766 = vld [vmem:[#allocation2 + $0xf0] sm:$0xff]
          %v1767 = vld [vmem:[#allocation2 + $0xf8] sm:$0xff]
          %v1768 = vld [vmem:[#allocation2 + $0x100] sm:$0xff]
          %v1769 = vld [vmem:[#allocation2 + $0x108] sm:$0xff]
          %v1770 = vld [vmem:[#allocation2 + $0x110] sm:$0xff]
          %v1771 = vld [vmem:[#allocation2 + $0x118] sm:$0xff]
          %v1772 = vld [vmem:[#allocation2 + $0x120] sm:$0xff]
          %v1773 = vld [vmem:[#allocation2 + $0x128] sm:$0xff]
          %v1774 = vld [vmem:[#allocation2 + $0x130] sm:$0xff]
          %v1775 = vld [vmem:[#allocation2 + $0x138] sm:$0xff]
          %v1776 = vld [vmem:[#allocation2 + $0x140] sm:$0xff]
          %v1777 = vld [vmem:[#allocation2 + $0x148] sm:$0xff]
          %v1778 = vld [vmem:[#allocation2 + $0x150] sm:$0xff]
          %v1779 = vld [vmem:[#allocation2 + $0x158] sm:$0xff]
          %v1780 = vld [vmem:[#allocation2 + $0x160] sm:$0xff]
          %v1781 = vld [vmem:[#allocation2 + $0x168] sm:$0xff]
          %v1782 = vld [vmem:[#allocation2 + $0x170] sm:$0xff]
          %v1783 = vld [vmem:[#allocation2 + $0x178] sm:$0xff]
          %v1784 = vld [vmem:[#allocation2 + $0x180] sm:$0xff]
          %v1785 = vld [vmem:[#allocation2 + $0x188] sm:$0xff]
          %v1786 = vld [vmem:[#allocation2 + $0x190] sm:$0xff]
          %v1787 = vld [vmem:[#allocation2 + $0x198] sm:$0xff]
          %v1788 = vld [vmem:[#allocation2 + $0x1a0] sm:$0xff]
          %v1789 = vld [vmem:[#allocation2 + $0x1a8] sm:$0xff]
          %v1790 = vld [vmem:[#allocation2 + $0x1b0] sm:$0xff]
          %v1791 = vld [vmem:[#allocation2 + $0x1b8] sm:$0xff]
          %v1792 = vld [vmem:[#allocation2 + $0x1c0] sm:$0xff]
          %v1793 = vld [vmem:[#allocation2 + $0x1c8] sm:$0xff]
          %v1794 = vld [vmem:[#allocation2 + $0x1d0] sm:$0xff]
          %v1795 = vld [vmem:[#allocation2 + $0x1d8] sm:$0xff]
          %v1796 = vld [vmem:[#allocation2 + $0x1e0] sm:$0xff]
          %v1797 = vld [vmem:[#allocation2 + $0x1e8] sm:$0xff]
          %v1798 = vld [vmem:[#allocation2 + $0x1f0] sm:$0xff]
          %v1799 = vld [vmem:[#allocation2 + $0x1f8] sm:$0xff]
          %v1800 = vld [vmem:[#allocation2 + $0x200] sm:$0xff]
          %v1801 = vld [vmem:[#allocation2 + $0x208] sm:$0xff]
          %v1802 = vld [vmem:[#allocation2 + $0x210] sm:$0xff]
          %v1803 = vld [vmem:[#allocation2 + $0x218] sm:$0xff]
          %v1804 = vld [vmem:[#allocation2 + $0x220] sm:$0xff]
          %v1805 = vld [vmem:[#allocation2 + $0x228] sm:$0xff]
          %v1806 = vld [vmem:[#allocation2 + $0x230] sm:$0xff]
          %v1807 = vld [vmem:[#allocation2 + $0x238] sm:$0xff]
          %v1808 = vld [vmem:[#allocation2 + $0x240] sm:$0xff]
          %v1809 = vld [vmem:[#allocation2 + $0x248] sm:$0xff]
          %v1810 = vld [vmem:[#allocation2 + $0x250] sm:$0xff]
          %v1811 = vld [vmem:[#allocation2 + $0x258] sm:$0xff]
          %v1812 = vld [vmem:[#allocation2 + $0x260] sm:$0xff]
          %v1813 = vld [vmem:[#allocation2 + $0x268] sm:$0xff]
          %v1814 = vld [vmem:[#allocation2 + $0x270] sm:$0xff]
          %v1815 = vld [vmem:[#allocation2 + $0x278] sm:$0xff]
          %v1816 = vadd.f32 %v1736, %v1568
          %v1817 = vadd.f32 %v1737, %v1569
          %v1818 = vadd.f32 %v1738, %v1570
          %v1819 = vadd.f32 %v1739, %v1571
          %v1820 = vadd.f32 %v1740, %v1572
          %v1821 = vadd.f32 %v1741, %v1573
          %v1822 = vadd.f32 %v1742, %v1574
          %v1823 = vadd.f32 %v1743, %v1575
          %v1824 = vadd.f32 %v1744, %v1576
          %v1825 = vadd.f32 %v1745, %v1577
          %v1826 = vadd.f32 %v1746, %v1578
          %v1827 = vadd.f32 %v1747, %v1579
          %v1828 = vadd.f32 %v1748, %v1580
          %v1829 = vadd.f32 %v1749, %v1581
          %v1830 = vadd.f32 %v1750, %v1582
          %v1831 = vadd.f32 %v1751, %v1583
          %v1832 = vadd.f32 %v1752, %v1584
          %v1833 = vadd.f32 %v1753, %v1585
          %v1834 = vadd.f32 %v1754, %v1586
          %v1835 = vadd.f32 %v1755, %v1587
          %v1836 = vadd.f32 %v1756, %v1588
          %v1837 = vadd.f32 %v1757, %v1589
          %v1838 = vadd.f32 %v1758, %v1590
          %v1839 = vadd.f32 %v1759, %v1591
          %v1840 = vadd.f32 %v1760, %v1592
          %v1841 = vadd.f32 %v1761, %v1593
          %v1842 = vadd.f32 %v1762, %v1594
          %v1843 = vadd.f32 %v1763, %v1595
          %v1844 = vadd.f32 %v1764, %v1596
          %v1845 = vadd.f32 %v1765, %v1597
          %v1846 = vadd.f32 %v1766, %v1598
          %v1847 = vadd.f32 %v1767, %v1599
          %v1848 = vadd.f32 %v1768, %v1600
          %v1849 = vadd.f32 %v1769, %v1601
          %v1850 = vadd.f32 %v1770, %v1602
          %v1851 = vadd.f32 %v1771, %v1603
          %v1852 = vadd.f32 %v1772, %v1604
          %v1853 = vadd.f32 %v1773, %v1605
          %v1854 = vadd.f32 %v1774, %v1606
          %v1855 = vadd.f32 %v1775, %v1607
          %v1856 = vadd.f32 %v1776, %v1608
          %v1857 = vadd.f32 %v1777, %v1609
          %v1858 = vadd.f32 %v1778, %v1610
          %v1859 = vadd.f32 %v1779, %v1611
          %v1860 = vadd.f32 %v1780, %v1612
          %v1861 = vadd.f32 %v1781, %v1613
          %v1862 = vadd.f32 %v1782, %v1614
          %v1863 = vadd.f32 %v1783, %v1615
          %v1864 = vadd.f32 %v1784, %v1616
          %v1865 = vadd.f32 %v1785, %v1617
          %v1866 = vadd.f32 %v1786, %v1618
          %v1867 = vadd.f32 %v1787, %v1619
          %v1868 = vadd.f32 %v1788, %v1620
          %v1869 = vadd.f32 %v1789, %v1621
          %v1870 = vadd.f32 %v1790, %v1622
          %v1871 = vadd.f32 %v1791, %v1623
          %v1872 = vadd.f32 %v1792, %v1624
          %v1873 = vadd.f32 %v1793, %v1625
          %v1874 = vadd.f32 %v1794, %v1626
          %v1875 = vadd.f32 %v1795, %v1627
          %v1876 = vadd.f32 %v1796, %v1628
          %v1877 = vadd.f32 %v1797, %v1629
          %v1878 = vadd.f32 %v1798, %v1630
          %v1879 = vadd.f32 %v1799, %v1631
          %v1880 = vadd.f32 %v1800, %v1632
          %v1881 = vadd.f32 %v1801, %v1633
          %v1882 = vadd.f32 %v1802, %v1634
          %v1883 = vadd.f32 %v1803, %v1635
          %v1884 = vadd.f32 %v1804, %v1636
          %v1885 = vadd.f32 %v1805, %v1637
          %v1886 = vadd.f32 %v1806, %v1638
          %v1887 = vadd.f32 %v1807, %v1639
          %v1888 = vadd.f32 %v1808, %v1640
          %v1889 = vadd.f32 %v1809, %v1641
          %v1890 = vadd.f32 %v1810, %v1642
          %v1891 = vadd.f32 %v1811, %v1643
          %v1892 = vadd.f32 %v1812, %v1644
          %v1893 = vadd.f32 %v1813, %v1645
          %v1894 = vadd.f32 %v1814, %v1646
          %v1895 = vadd.f32 %v1815, %v1647
          %1896 = vst [vmem:[#allocation2] sm:$0xff] %v1816
          %1897 = vst [vmem:[#allocation2 + $0x8] sm:$0xff] %v1817
          %1898 = vst [vmem:[#allocation2 + $0x10] sm:$0xff] %v1818
          %1899 = vst [vmem:[#allocation2 + $0x18] sm:$0xff] %v1819
          %1900 = vst [vmem:[#allocation2 + $0x20] sm:$0xff] %v1820
          %1901 = vst [vmem:[#allocation2 + $0x28] sm:$0xff] %v1821
          %1902 = vst [vmem:[#allocation2 + $0x30] sm:$0xff] %v1822
          %1903 = vst [vmem:[#allocation2 + $0x38] sm:$0xff] %v1823
          %1904 = vst [vmem:[#allocation2 + $0x40] sm:$0xff] %v1824
          %1905 = vst [vmem:[#allocation2 + $0x48] sm:$0xff] %v1825
          %1906 = vst [vmem:[#allocation2 + $0x50] sm:$0xff] %v1826
          %1907 = vst [vmem:[#allocation2 + $0x58] sm:$0xff] %v1827
          %1908 = vst [vmem:[#allocation2 + $0x60] sm:$0xff] %v1828
          %1909 = vst [vmem:[#allocation2 + $0x68] sm:$0xff] %v1829
          %1910 = vst [vmem:[#allocation2 + $0x70] sm:$0xff] %v1830
          %1911 = vst [vmem:[#allocation2 + $0x78] sm:$0xff] %v1831
          %1912 = vst [vmem:[#allocation2 + $0x80] sm:$0xff] %v1832
          %1913 = vst [vmem:[#allocation2 + $0x88] sm:$0xff] %v1833
          %1914 = vst [vmem:[#allocation2 + $0x90] sm:$0xff] %v1834
          %1915 = vst [vmem:[#allocation2 + $0x98] sm:$0xff] %v1835
          %1916 = vst [vmem:[#allocation2 + $0xa0] sm:$0xff] %v1836
          %1917 = vst [vmem:[#allocation2 + $0xa8] sm:$0xff] %v1837
          %1918 = vst [vmem:[#allocation2 + $0xb0] sm:$0xff] %v1838
          %1919 = vst [vmem:[#allocation2 + $0xb8] sm:$0xff] %v1839
          %1920 = vst [vmem:[#allocation2 + $0xc0] sm:$0xff] %v1840
          %1921 = vst [vmem:[#allocation2 + $0xc8] sm:$0xff] %v1841
          %1922 = vst [vmem:[#allocation2 + $0xd0] sm:$0xff] %v1842
          %1923 = vst [vmem:[#allocation2 + $0xd8] sm:$0xff] %v1843
          %1924 = vst [vmem:[#allocation2 + $0xe0] sm:$0xff] %v1844
          %1925 = vst [vmem:[#allocation2 + $0xe8] sm:$0xff] %v1845
          %1926 = vst [vmem:[#allocation2 + $0xf0] sm:$0xff] %v1846
          %1927 = vst [vmem:[#allocation2 + $0xf8] sm:$0xff] %v1847
          %1928 = vst [vmem:[#allocation2 + $0x100] sm:$0xff] %v1848
          %1929 = vst [vmem:[#allocation2 + $0x108] sm:$0xff] %v1849
          %1930 = vst [vmem:[#allocation2 + $0x110] sm:$0xff] %v1850
          %1931 = vst [vmem:[#allocation2 + $0x118] sm:$0xff] %v1851
          %1932 = vst [vmem:[#allocation2 + $0x120] sm:$0xff] %v1852
          %1933 = vst [vmem:[#allocation2 + $0x128] sm:$0xff] %v1853
          %1934 = vst [vmem:[#allocation2 + $0x130] sm:$0xff] %v1854
          %1935 = vst [vmem:[#allocation2 + $0x138] sm:$0xff] %v1855
          %1936 = vst [vmem:[#allocation2 + $0x140] sm:$0xff] %v1856
          %1937 = vst [vmem:[#allocation2 + $0x148] sm:$0xff] %v1857
          %1938 = vst [vmem:[#allocation2 + $0x150] sm:$0xff] %v1858
          %1939 = vst [vmem:[#allocation2 + $0x158] sm:$0xff] %v1859
          %1940 = vst [vmem:[#allocation2 + $0x160] sm:$0xff] %v1860
          %1941 = vst [vmem:[#allocation2 + $0x168] sm:$0xff] %v1861
          %1942 = vst [vmem:[#allocation2 + $0x170] sm:$0xff] %v1862
          %1943 = vst [vmem:[#allocation2 + $0x178] sm:$0xff] %v1863
          %1944 = vst [vmem:[#allocation2 + $0x180] sm:$0xff] %v1864
          %1945 = vst [vmem:[#allocation2 + $0x188] sm:$0xff] %v1865
          %1946 = vst [vmem:[#allocation2 + $0x190] sm:$0xff] %v1866
          %1947 = vst [vmem:[#allocation2 + $0x198] sm:$0xff] %v1867
          %1948 = vst [vmem:[#allocation2 + $0x1a0] sm:$0xff] %v1868
          %1949 = vst [vmem:[#allocation2 + $0x1a8] sm:$0xff] %v1869
          %1950 = vst [vmem:[#allocation2 + $0x1b0] sm:$0xff] %v1870
          %1951 = vst [vmem:[#allocation2 + $0x1b8] sm:$0xff] %v1871
          %1952 = vst [vmem:[#allocation2 + $0x1c0] sm:$0xff] %v1872
          %1953 = vst [vmem:[#allocation2 + $0x1c8] sm:$0xff] %v1873
          %1954 = vst [vmem:[#allocation2 + $0x1d0] sm:$0xff] %v1874
          %1955 = vst [vmem:[#allocation2 + $0x1d8] sm:$0xff] %v1875
          %1956 = vst [vmem:[#allocation2 + $0x1e0] sm:$0xff] %v1876
          %1957 = vst [vmem:[#allocation2 + $0x1e8] sm:$0xff] %v1877
          %1958 = vst [vmem:[#allocation2 + $0x1f0] sm:$0xff] %v1878
          %1959 = vst [vmem:[#allocation2 + $0x1f8] sm:$0xff] %v1879
          %1960 = vst [vmem:[#allocation2 + $0x200] sm:$0xff] %v1880
          %1961 = vst [vmem:[#allocation2 + $0x208] sm:$0xff] %v1881
          %1962 = vst [vmem:[#allocation2 + $0x210] sm:$0xff] %v1882
          %1963 = vst [vmem:[#allocation2 + $0x218] sm:$0xff] %v1883
          %1964 = vst [vmem:[#allocation2 + $0x220] sm:$0xff] %v1884
          %1965 = vst [vmem:[#allocation2 + $0x228] sm:$0xff] %v1885
          %1966 = vst [vmem:[#allocation2 + $0x230] sm:$0xff] %v1886
          %1967 = vst [vmem:[#allocation2 + $0x238] sm:$0xff] %v1887
          %1968 = vst [vmem:[#allocation2 + $0x240] sm:$0xff] %v1888
          %1969 = vst [vmem:[#allocation2 + $0x248] sm:$0xff] %v1889
          %1970 = vst [vmem:[#allocation2 + $0x250] sm:$0xff] %v1890
          %1971 = vst [vmem:[#allocation2 + $0x258] sm:$0xff] %v1891
          %1972 = vst [vmem:[#allocation2 + $0x260] sm:$0xff] %v1892
          %1973 = vst [vmem:[#allocation2 + $0x268] sm:$0xff] %v1893
          %1974 = vst [vmem:[#allocation2 + $0x270] sm:$0xff] %v1894
          %1975 = vst [vmem:[#allocation2 + $0x278] sm:$0xff] %v1895
        $region64: #{tpu_custom_call.1} parent=39 // pred_fallthru
          _
        %p1976 = scmp.eq.s32.totalorder %s24, 2
        // Predicated region
        $region65: #{tpu_custom_call.1} parent=39 // pred_check
          %p1977 = pneg %p1976
        $region66: #{tpu_custom_call.1} parent=39 // pred_check_branch
          %1979 = sbr.rel (%p1977) target = $region68
        $region67: #{tpu_custom_call.1} parent=39 // pred_region
          %v1980 = vld [vmem:[#allocation2] sm:$0xff]
          %v1981 = vld [vmem:[#allocation2 + $0x8] sm:$0xff]
          %v1982 = vld [vmem:[#allocation2 + $0x10] sm:$0xff]
          %v1983 = vld [vmem:[#allocation2 + $0x18] sm:$0xff]
          %v1984 = vld [vmem:[#allocation2 + $0x20] sm:$0xff]
          %v1985 = vld [vmem:[#allocation2 + $0x28] sm:$0xff]
          %v1986 = vld [vmem:[#allocation2 + $0x30] sm:$0xff]
          %v1987 = vld [vmem:[#allocation2 + $0x38] sm:$0xff]
          %v1988 = vld [vmem:[#allocation2 + $0x40] sm:$0xff]
          %v1989 = vld [vmem:[#allocation2 + $0x48] sm:$0xff]
          %v1990 = vld [vmem:[#allocation2 + $0x50] sm:$0xff]
          %v1991 = vld [vmem:[#allocation2 + $0x58] sm:$0xff]
          %v1992 = vld [vmem:[#allocation2 + $0x60] sm:$0xff]
          %v1993 = vld [vmem:[#allocation2 + $0x68] sm:$0xff]
          %v1994 = vld [vmem:[#allocation2 + $0x70] sm:$0xff]
          %v1995 = vld [vmem:[#allocation2 + $0x78] sm:$0xff]
          %v1996 = vld [vmem:[#allocation2 + $0x80] sm:$0xff]
          %v1997 = vld [vmem:[#allocation2 + $0x88] sm:$0xff]
          %v1998 = vld [vmem:[#allocation2 + $0x90] sm:$0xff]
          %v1999 = vld [vmem:[#allocation2 + $0x98] sm:$0xff]
          %v2000 = vld [vmem:[#allocation2 + $0xa0] sm:$0xff]
          %v2001 = vld [vmem:[#allocation2 + $0xa8] sm:$0xff]
          %v2002 = vld [vmem:[#allocation2 + $0xb0] sm:$0xff]
          %v2003 = vld [vmem:[#allocation2 + $0xb8] sm:$0xff]
          %v2004 = vld [vmem:[#allocation2 + $0xc0] sm:$0xff]
          %v2005 = vld [vmem:[#allocation2 + $0xc8] sm:$0xff]
          %v2006 = vld [vmem:[#allocation2 + $0xd0] sm:$0xff]
          %v2007 = vld [vmem:[#allocation2 + $0xd8] sm:$0xff]
          %v2008 = vld [vmem:[#allocation2 + $0xe0] sm:$0xff]
          %v2009 = vld [vmem:[#allocation2 + $0xe8] sm:$0xff]
          %v2010 = vld [vmem:[#allocation2 + $0xf0] sm:$0xff]
          %v2011 = vld [vmem:[#allocation2 + $0xf8] sm:$0xff]
          %v2012 = vld [vmem:[#allocation2 + $0x100] sm:$0xff]
          %v2013 = vld [vmem:[#allocation2 + $0x108] sm:$0xff]
          %v2014 = vld [vmem:[#allocation2 + $0x110] sm:$0xff]
          %v2015 = vld [vmem:[#allocation2 + $0x118] sm:$0xff]
          %v2016 = vld [vmem:[#allocation2 + $0x120] sm:$0xff]
          %v2017 = vld [vmem:[#allocation2 + $0x128] sm:$0xff]
          %v2018 = vld [vmem:[#allocation2 + $0x130] sm:$0xff]
          %v2019 = vld [vmem:[#allocation2 + $0x138] sm:$0xff]
          %v2020 = vld [vmem:[#allocation2 + $0x140] sm:$0xff]
          %v2021 = vld [vmem:[#allocation2 + $0x148] sm:$0xff]
          %v2022 = vld [vmem:[#allocation2 + $0x150] sm:$0xff]
          %v2023 = vld [vmem:[#allocation2 + $0x158] sm:$0xff]
          %v2024 = vld [vmem:[#allocation2 + $0x160] sm:$0xff]
          %v2025 = vld [vmem:[#allocation2 + $0x168] sm:$0xff]
          %v2026 = vld [vmem:[#allocation2 + $0x170] sm:$0xff]
          %v2027 = vld [vmem:[#allocation2 + $0x178] sm:$0xff]
          %v2028 = vld [vmem:[#allocation2 + $0x180] sm:$0xff]
          %v2029 = vld [vmem:[#allocation2 + $0x188] sm:$0xff]
          %v2030 = vld [vmem:[#allocation2 + $0x190] sm:$0xff]
          %v2031 = vld [vmem:[#allocation2 + $0x198] sm:$0xff]
          %v2032 = vld [vmem:[#allocation2 + $0x1a0] sm:$0xff]
          %v2033 = vld [vmem:[#allocation2 + $0x1a8] sm:$0xff]
          %v2034 = vld [vmem:[#allocation2 + $0x1b0] sm:$0xff]
          %v2035 = vld [vmem:[#allocation2 + $0x1b8] sm:$0xff]
          %v2036 = vld [vmem:[#allocation2 + $0x1c0] sm:$0xff]
          %v2037 = vld [vmem:[#allocation2 + $0x1c8] sm:$0xff]
          %v2038 = vld [vmem:[#allocation2 + $0x1d0] sm:$0xff]
          %v2039 = vld [vmem:[#allocation2 + $0x1d8] sm:$0xff]
          %v2040 = vld [vmem:[#allocation2 + $0x1e0] sm:$0xff]
          %v2041 = vld [vmem:[#allocation2 + $0x1e8] sm:$0xff]
          %v2042 = vld [vmem:[#allocation2 + $0x1f0] sm:$0xff]
          %v2043 = vld [vmem:[#allocation2 + $0x1f8] sm:$0xff]
          %v2044 = vld [vmem:[#allocation2 + $0x200] sm:$0xff]
          %v2045 = vld [vmem:[#allocation2 + $0x208] sm:$0xff]
          %v2046 = vld [vmem:[#allocation2 + $0x210] sm:$0xff]
          %v2047 = vld [vmem:[#allocation2 + $0x218] sm:$0xff]
          %v2048 = vld [vmem:[#allocation2 + $0x220] sm:$0xff]
          %v2049 = vld [vmem:[#allocation2 + $0x228] sm:$0xff]
          %v2050 = vld [vmem:[#allocation2 + $0x230] sm:$0xff]
          %v2051 = vld [vmem:[#allocation2 + $0x238] sm:$0xff]
          %v2052 = vld [vmem:[#allocation2 + $0x240] sm:$0xff]
          %v2053 = vld [vmem:[#allocation2 + $0x248] sm:$0xff]
          %v2054 = vld [vmem:[#allocation2 + $0x250] sm:$0xff]
          %v2055 = vld [vmem:[#allocation2 + $0x258] sm:$0xff]
          %v2056 = vld [vmem:[#allocation2 + $0x260] sm:$0xff]
          %v2057 = vld [vmem:[#allocation2 + $0x268] sm:$0xff]
          %v2058 = vld [vmem:[#allocation2 + $0x270] sm:$0xff]
          %v2059 = vld [vmem:[#allocation2 + $0x278] sm:$0xff]
          %v2060 = vlaneseq
          %v2061 = vshrl.u32 %v2060, 7
          %v2062 = vadd.s32 %v2061, 8
          %v2063 = vadd.s32 %v2061, 16
          %v2064 = vadd.s32 %v2061, 24
          %v2065 = vadd.s32 %v2061, 32
          %v2066 = vadd.s32 %v2061, 40
          %v2067 = vadd.s32 %v2061, 48
          %v2068 = vadd.s32 %v2061, 56
          %v2069 = vadd.s32 %v2061, 64
          %v2070 = vadd.s32 %v2061, 72
          %v2071 = vadd.s32 %v2061, 80
          %v2072 = vadd.s32 %v2061, 88
          %v2073 = vadd.s32 %v2061, 96
          %v2074 = vadd.s32 %v2061, 104
          %v2075 = vadd.s32 %v2061, 112
          %v2076 = vadd.s32 %v2061, 120
          %v2077 = vadd.s32 %v2061, 128
          %v2078 = vadd.s32 %v2061, 136
          %v2079 = vadd.s32 %v2061, 144
          %v2080 = vadd.s32 %v2061, 152
          %v2081 = vadd.s32 %v2061, 160
          %v2082 = vadd.s32 %v2061, 168
          %v2083 = vadd.s32 %v2061, 176
          %v2084 = vadd.s32 %v2061, 184
          %v2085 = vadd.s32 %v2061, 192
          %v2086 = vadd.s32 %v2061, 200
          %v2087 = vadd.s32 %v2061, 208
          %v2088 = vadd.s32 %v2061, 216
          %v2089 = vadd.s32 %v2061, 224
          %v2090 = vadd.s32 %v2061, 232
          %v2091 = vadd.s32 %v2061, 240
          %v2092 = vadd.s32 %v2061, 248
          %v2093 = vadd.s32 %v2061, 256
          %v2094 = vadd.s32 %v2061, 264
          %v2095 = vadd.s32 %v2061, 272
          %v2096 = vadd.s32 %v2061, 280
          %v2097 = vadd.s32 %v2061, 288
          %v2098 = vadd.s32 %v2061, 296
          %v2099 = vadd.s32 %v2061, 304
          %v2100 = vadd.s32 %v2061, 312
          %v2101 = vmul.u32 %v2061, 65537
          %v2102 = vmul.u32 %v2062, 65537
          %v2103 = vmul.u32 %v2063, 65537
          %v2104 = vmul.u32 %v2064, 65537
          %v2105 = vmul.u32 %v2065, 65537
          %v2106 = vmul.u32 %v2066, 65537
          %v2107 = vmul.u32 %v2067, 65537
          %v2108 = vmul.u32 %v2068, 65537
          %v2109 = vmul.u32 %v2069, 65537
          %v2110 = vmul.u32 %v2070, 65537
          %v2111 = vmul.u32 %v2071, 65537
          %v2112 = vmul.u32 %v2072, 65537
          %v2113 = vmul.u32 %v2073, 65537
          %v2114 = vmul.u32 %v2074, 65537
          %v2115 = vmul.u32 %v2075, 65537
          %v2116 = vmul.u32 %v2076, 65537
          %v2117 = vmul.u32 %v2077, 65537
          %v2118 = vmul.u32 %v2078, 65537
          %v2119 = vmul.u32 %v2079, 65537
          %v2120 = vmul.u32 %v2080, 65537
          %v2121 = vmul.u32 %v2081, 65537
          %v2122 = vmul.u32 %v2082, 65537
          %v2123 = vmul.u32 %v2083, 65537
          %v2124 = vmul.u32 %v2084, 65537
          %v2125 = vmul.u32 %v2085, 65537
          %v2126 = vmul.u32 %v2086, 65537
          %v2127 = vmul.u32 %v2087, 65537
          %v2128 = vmul.u32 %v2088, 65537
          %v2129 = vmul.u32 %v2089, 65537
          %v2130 = vmul.u32 %v2090, 65537
          %v2131 = vmul.u32 %v2091, 65537
          %v2132 = vmul.u32 %v2092, 65537
          %v2133 = vmul.u32 %v2093, 65537
          %v2134 = vmul.u32 %v2094, 65537
          %v2135 = vmul.u32 %v2095, 65537
          %v2136 = vmul.u32 %v2096, 65537
          %v2137 = vmul.u32 %v2097, 65537
          %v2138 = vmul.u32 %v2098, 65537
          %v2139 = vmul.u32 %v2099, 65537
          %v2140 = vmul.u32 %v2100, 65537
          %v2141 = vshra.s32 %v2101, 20
          %v2142 = vshra.s32 %v2102, 20
          %v2143 = vshra.s32 %v2103, 20
          %v2144 = vshra.s32 %v2104, 20
          %v2145 = vshra.s32 %v2105, 20
          %v2146 = vshra.s32 %v2106, 20
          %v2147 = vshra.s32 %v2107, 20
          %v2148 = vshra.s32 %v2108, 20
          %v2149 = vshra.s32 %v2109, 20
          %v2150 = vshra.s32 %v2110, 20
          %v2151 = vshra.s32 %v2111, 20
          %v2152 = vshra.s32 %v2112, 20
          %v2153 = vshra.s32 %v2113, 20
          %v2154 = vshra.s32 %v2114, 20
          %v2155 = vshra.s32 %v2115, 20
          %v2156 = vshra.s32 %v2116, 20
          %v2157 = vshra.s32 %v2117, 20
          %v2158 = vshra.s32 %v2118, 20
          %v2159 = vshra.s32 %v2119, 20
          %v2160 = vshra.s32 %v2120, 20
          %v2161 = vshra.s32 %v2121, 20
          %v2162 = vshra.s32 %v2122, 20
          %v2163 = vshra.s32 %v2123, 20
          %v2164 = vshra.s32 %v2124, 20
          %v2165 = vshra.s32 %v2125, 20
          %v2166 = vshra.s32 %v2126, 20
          %v2167 = vshra.s32 %v2127, 20
          %v2168 = vshra.s32 %v2128, 20
          %v2169 = vshra.s32 %v2129, 20
          %v2170 = vshra.s32 %v2130, 20
          %v2171 = vshra.s32 %v2131, 20
          %v2172 = vshra.s32 %v2132, 20
          %v2173 = vshra.s32 %v2133, 20
          %v2174 = vshra.s32 %v2134, 20
          %v2175 = vshra.s32 %v2135, 20
          %v2176 = vshra.s32 %v2136, 20
          %v2177 = vshra.s32 %v2137, 20
          %v2178 = vshra.s32 %v2138, 20
          %v2179 = vshra.s32 %v2139, 20
          %v2180 = vshra.s32 %v2140, 20
          %v2181 = vmul.u32 %v2141, 16
          %v2182 = vmul.u32 %v2142, 16
          %v2183 = vmul.u32 %v2143, 16
          %v2184 = vmul.u32 %v2144, 16
          %v2185 = vmul.u32 %v2145, 16
          %v2186 = vmul.u32 %v2146, 16
          %v2187 = vmul.u32 %v2147, 16
          %v2188 = vmul.u32 %v2148, 16
          %v2189 = vmul.u32 %v2149, 16
          %v2190 = vmul.u32 %v2150, 16
          %v2191 = vmul.u32 %v2151, 16
          %v2192 = vmul.u32 %v2152, 16
          %v2193 = vmul.u32 %v2153, 16
          %v2194 = vmul.u32 %v2154, 16
          %v2195 = vmul.u32 %v2155, 16
          %v2196 = vmul.u32 %v2156, 16
          %v2197 = vmul.u32 %v2157, 16
          %v2198 = vmul.u32 %v2158, 16
          %v2199 = vmul.u32 %v2159, 16
          %v2200 = vmul.u32 %v2160, 16
          %v2201 = vmul.u32 %v2161, 16
          %v2202 = vmul.u32 %v2162, 16
          %v2203 = vmul.u32 %v2163, 16
          %v2204 = vmul.u32 %v2164, 16
          %v2205 = vmul.u32 %v2165, 16
          %v2206 = vmul.u32 %v2166, 16
          %v2207 = vmul.u32 %v2167, 16
          %v2208 = vmul.u32 %v2168, 16
          %v2209 = vmul.u32 %v2169, 16
          %v2210 = vmul.u32 %v2170, 16
          %v2211 = vmul.u32 %v2171, 16
          %v2212 = vmul.u32 %v2172, 16
          %v2213 = vmul.u32 %v2173, 16
          %v2214 = vmul.u32 %v2174, 16
          %v2215 = vmul.u32 %v2175, 16
          %v2216 = vmul.u32 %v2176, 16
          %v2217 = vmul.u32 %v2177, 16
          %v2218 = vmul.u32 %v2178, 16
          %v2219 = vmul.u32 %v2179, 16
          %v2220 = vmul.u32 %v2180, 16
          %v2221 = vsub.s32 %v2061, %v2181
          %v2222 = vsub.s32 %v2062, %v2182
          %v2223 = vsub.s32 %v2063, %v2183
          %v2224 = vsub.s32 %v2064, %v2184
          %v2225 = vsub.s32 %v2065, %v2185
          %v2226 = vsub.s32 %v2066, %v2186
          %v2227 = vsub.s32 %v2067, %v2187
          %v2228 = vsub.s32 %v2068, %v2188
          %v2229 = vsub.s32 %v2069, %v2189
          %v2230 = vsub.s32 %v2070, %v2190
          %v2231 = vsub.s32 %v2071, %v2191
          %v2232 = vsub.s32 %v2072, %v2192
          %v2233 = vsub.s32 %v2073, %v2193
          %v2234 = vsub.s32 %v2074, %v2194
          %v2235 = vsub.s32 %v2075, %v2195
          %v2236 = vsub.s32 %v2076, %v2196
          %v2237 = vsub.s32 %v2077, %v2197
          %v2238 = vsub.s32 %v2078, %v2198
          %v2239 = vsub.s32 %v2079, %v2199
          %v2240 = vsub.s32 %v2080, %v2200
          %v2241 = vsub.s32 %v2081, %v2201
          %v2242 = vsub.s32 %v2082, %v2202
          %v2243 = vsub.s32 %v2083, %v2203
          %v2244 = vsub.s32 %v2084, %v2204
          %v2245 = vsub.s32 %v2085, %v2205
          %v2246 = vsub.s32 %v2086, %v2206
          %v2247 = vsub.s32 %v2087, %v2207
          %v2248 = vsub.s32 %v2088, %v2208
          %v2249 = vsub.s32 %v2089, %v2209
          %v2250 = vsub.s32 %v2090, %v2210
          %v2251 = vsub.s32 %v2091, %v2211
          %v2252 = vsub.s32 %v2092, %v2212
          %v2253 = vsub.s32 %v2093, %v2213
          %v2254 = vsub.s32 %v2094, %v2214
          %v2255 = vsub.s32 %v2095, %v2215
          %v2256 = vsub.s32 %v2096, %v2216
          %v2257 = vsub.s32 %v2097, %v2217
          %v2258 = vsub.s32 %v2098, %v2218
          %v2259 = vsub.s32 %v2099, %v2219
          %v2260 = vsub.s32 %v2100, %v2220
          %vm2261 = vcmp.ge.s32.totalorder %v2221, 1
          %vm2262 = vcmp.ge.s32.totalorder %v2222, 1
          %vm2263 = vcmp.ge.s32.totalorder %v2223, 1
          %vm2264 = vcmp.ge.s32.totalorder %v2224, 1
          %vm2265 = vcmp.ge.s32.totalorder %v2225, 1
          %vm2266 = vcmp.ge.s32.totalorder %v2226, 1
          %vm2267 = vcmp.ge.s32.totalorder %v2227, 1
          %vm2268 = vcmp.ge.s32.totalorder %v2228, 1
          %vm2269 = vcmp.ge.s32.totalorder %v2229, 1
          %vm2270 = vcmp.ge.s32.totalorder %v2230, 1
          %vm2271 = vcmp.ge.s32.totalorder %v2231, 1
          %vm2272 = vcmp.ge.s32.totalorder %v2232, 1
          %vm2273 = vcmp.ge.s32.totalorder %v2233, 1
          %vm2274 = vcmp.ge.s32.totalorder %v2234, 1
          %vm2275 = vcmp.ge.s32.totalorder %v2235, 1
          %vm2276 = vcmp.ge.s32.totalorder %v2236, 1
          %vm2277 = vcmp.ge.s32.totalorder %v2237, 1
          %vm2278 = vcmp.ge.s32.totalorder %v2238, 1
          %vm2279 = vcmp.ge.s32.totalorder %v2239, 1
          %vm2280 = vcmp.ge.s32.totalorder %v2240, 1
          %vm2281 = vcmp.ge.s32.totalorder %v2241, 1
          %vm2282 = vcmp.ge.s32.totalorder %v2242, 1
          %vm2283 = vcmp.ge.s32.totalorder %v2243, 1
          %vm2284 = vcmp.ge.s32.totalorder %v2244, 1
          %vm2285 = vcmp.ge.s32.totalorder %v2245, 1
          %vm2286 = vcmp.ge.s32.totalorder %v2246, 1
          %vm2287 = vcmp.ge.s32.totalorder %v2247, 1
          %vm2288 = vcmp.ge.s32.totalorder %v2248, 1
          %vm2289 = vcmp.ge.s32.totalorder %v2249, 1
          %vm2290 = vcmp.ge.s32.totalorder %v2250, 1
          %vm2291 = vcmp.ge.s32.totalorder %v2251, 1
          %vm2292 = vcmp.ge.s32.totalorder %v2252, 1
          %vm2293 = vcmp.ge.s32.totalorder %v2253, 1
          %vm2294 = vcmp.ge.s32.totalorder %v2254, 1
          %vm2295 = vcmp.ge.s32.totalorder %v2255, 1
          %vm2296 = vcmp.ge.s32.totalorder %v2256, 1
          %vm2297 = vcmp.ge.s32.totalorder %v2257, 1
          %vm2298 = vcmp.ge.s32.totalorder %v2258, 1
          %vm2299 = vcmp.ge.s32.totalorder %v2259, 1
          %vm2300 = vcmp.ge.s32.totalorder %v2260, 1
          %vm2301 = vcmp.le.s32.totalorder %v2221, 8
          %vm2302 = vcmp.le.s32.totalorder %v2222, 8
          %vm2303 = vcmp.le.s32.totalorder %v2223, 8
          %vm2304 = vcmp.le.s32.totalorder %v2224, 8
          %vm2305 = vcmp.le.s32.totalorder %v2225, 8
          %vm2306 = vcmp.le.s32.totalorder %v2226, 8
          %vm2307 = vcmp.le.s32.totalorder %v2227, 8
          %vm2308 = vcmp.le.s32.totalorder %v2228, 8
          %vm2309 = vcmp.le.s32.totalorder %v2229, 8
          %vm2310 = vcmp.le.s32.totalorder %v2230, 8
          %vm2311 = vcmp.le.s32.totalorder %v2231, 8
          %vm2312 = vcmp.le.s32.totalorder %v2232, 8
          %vm2313 = vcmp.le.s32.totalorder %v2233, 8
          %vm2314 = vcmp.le.s32.totalorder %v2234, 8
          %vm2315 = vcmp.le.s32.totalorder %v2235, 8
          %vm2316 = vcmp.le.s32.totalorder %v2236, 8
          %vm2317 = vcmp.le.s32.totalorder %v2237, 8
          %vm2318 = vcmp.le.s32.totalorder %v2238, 8
          %vm2319 = vcmp.le.s32.totalorder %v2239, 8
          %vm2320 = vcmp.le.s32.totalorder %v2240, 8
          %vm2321 = vcmp.le.s32.totalorder %v2241, 8
          %vm2322 = vcmp.le.s32.totalorder %v2242, 8
          %vm2323 = vcmp.le.s32.totalorder %v2243, 8
          %vm2324 = vcmp.le.s32.totalorder %v2244, 8
          %vm2325 = vcmp.le.s32.totalorder %v2245, 8
          %vm2326 = vcmp.le.s32.totalorder %v2246, 8
          %vm2327 = vcmp.le.s32.totalorder %v2247, 8
          %vm2328 = vcmp.le.s32.totalorder %v2248, 8
          %vm2329 = vcmp.le.s32.totalorder %v2249, 8
          %vm2330 = vcmp.le.s32.totalorder %v2250, 8
          %vm2331 = vcmp.le.s32.totalorder %v2251, 8
          %vm2332 = vcmp.le.s32.totalorder %v2252, 8
          %vm2333 = vcmp.le.s32.totalorder %v2253, 8
          %vm2334 = vcmp.le.s32.totalorder %v2254, 8
          %vm2335 = vcmp.le.s32.totalorder %v2255, 8
          %vm2336 = vcmp.le.s32.totalorder %v2256, 8
          %vm2337 = vcmp.le.s32.totalorder %v2257, 8
          %vm2338 = vcmp.le.s32.totalorder %v2258, 8
          %vm2339 = vcmp.le.s32.totalorder %v2259, 8
          %vm2340 = vcmp.le.s32.totalorder %v2260, 8
          %vm2341 = vmand %vm2261, %vm2301
          %vm2342 = vmand %vm2262, %vm2302
          %vm2343 = vmand %vm2263, %vm2303
          %vm2344 = vmand %vm2264, %vm2304
          %vm2345 = vmand %vm2265, %vm2305
          %vm2346 = vmand %vm2266, %vm2306
          %vm2347 = vmand %vm2267, %vm2307
          %vm2348 = vmand %vm2268, %vm2308
          %vm2349 = vmand %vm2269, %vm2309
          %vm2350 = vmand %vm2270, %vm2310
          %vm2351 = vmand %vm2271, %vm2311
          %vm2352 = vmand %vm2272, %vm2312
          %vm2353 = vmand %vm2273, %vm2313
          %vm2354 = vmand %vm2274, %vm2314
          %vm2355 = vmand %vm2275, %vm2315
          %vm2356 = vmand %vm2276, %vm2316
          %vm2357 = vmand %vm2277, %vm2317
          %vm2358 = vmand %vm2278, %vm2318
          %vm2359 = vmand %vm2279, %vm2319
          %vm2360 = vmand %vm2280, %vm2320
          %vm2361 = vmand %vm2281, %vm2321
          %vm2362 = vmand %vm2282, %vm2322
          %vm2363 = vmand %vm2283, %vm2323
          %vm2364 = vmand %vm2284, %vm2324
          %vm2365 = vmand %vm2285, %vm2325
          %vm2366 = vmand %vm2286, %vm2326
          %vm2367 = vmand %vm2287, %vm2327
          %vm2368 = vmand %vm2288, %vm2328
          %vm2369 = vmand %vm2289, %vm2329
          %vm2370 = vmand %vm2290, %vm2330
          %vm2371 = vmand %vm2291, %vm2331
          %vm2372 = vmand %vm2292, %vm2332
          %vm2373 = vmand %vm2293, %vm2333
          %vm2374 = vmand %vm2294, %vm2334
          %vm2375 = vmand %vm2295, %vm2335
          %vm2376 = vmand %vm2296, %vm2336
          %vm2377 = vmand %vm2297, %vm2337
          %vm2378 = vmand %vm2298, %vm2338
          %vm2379 = vmand %vm2299, %vm2339
          %vm2380 = vmand %vm2300, %vm2340
          %vm2381 = vcmp.ge.s32.totalorder %v2141, 1
          %vm2382 = vcmp.ge.s32.totalorder %v2142, 1
          %vm2383 = vcmp.ge.s32.totalorder %v2143, 1
          %vm2384 = vcmp.ge.s32.totalorder %v2144, 1
          %vm2385 = vcmp.ge.s32.totalorder %v2145, 1
          %vm2386 = vcmp.ge.s32.totalorder %v2146, 1
          %vm2387 = vcmp.ge.s32.totalorder %v2147, 1
          %vm2388 = vcmp.ge.s32.totalorder %v2148, 1
          %vm2389 = vcmp.ge.s32.totalorder %v2149, 1
          %vm2390 = vcmp.ge.s32.totalorder %v2150, 1
          %vm2391 = vcmp.ge.s32.totalorder %v2151, 1
          %vm2392 = vcmp.ge.s32.totalorder %v2152, 1
          %vm2393 = vcmp.ge.s32.totalorder %v2153, 1
          %vm2394 = vcmp.ge.s32.totalorder %v2154, 1
          %vm2395 = vcmp.ge.s32.totalorder %v2155, 1
          %vm2396 = vcmp.ge.s32.totalorder %v2156, 1
          %vm2397 = vcmp.ge.s32.totalorder %v2157, 1
          %vm2398 = vcmp.ge.s32.totalorder %v2158, 1
          %vm2399 = vcmp.ge.s32.totalorder %v2159, 1
          %vm2400 = vcmp.ge.s32.totalorder %v2160, 1
          %vm2401 = vcmp.ge.s32.totalorder %v2161, 1
          %vm2402 = vcmp.ge.s32.totalorder %v2162, 1
          %vm2403 = vcmp.ge.s32.totalorder %v2163, 1
          %vm2404 = vcmp.ge.s32.totalorder %v2164, 1
          %vm2405 = vcmp.ge.s32.totalorder %v2165, 1
          %vm2406 = vcmp.ge.s32.totalorder %v2166, 1
          %vm2407 = vcmp.ge.s32.totalorder %v2167, 1
          %vm2408 = vcmp.ge.s32.totalorder %v2168, 1
          %vm2409 = vcmp.ge.s32.totalorder %v2169, 1
          %vm2410 = vcmp.ge.s32.totalorder %v2170, 1
          %vm2411 = vcmp.ge.s32.totalorder %v2171, 1
          %vm2412 = vcmp.ge.s32.totalorder %v2172, 1
          %vm2413 = vcmp.ge.s32.totalorder %v2173, 1
          %vm2414 = vcmp.ge.s32.totalorder %v2174, 1
          %vm2415 = vcmp.ge.s32.totalorder %v2175, 1
          %vm2416 = vcmp.ge.s32.totalorder %v2176, 1
          %vm2417 = vcmp.ge.s32.totalorder %v2177, 1
          %vm2418 = vcmp.ge.s32.totalorder %v2178, 1
          %vm2419 = vcmp.ge.s32.totalorder %v2179, 1
          %vm2420 = vcmp.ge.s32.totalorder %v2180, 1
          %vm2421 = vcmp.le.s32.totalorder %v2141, 8
          %vm2422 = vcmp.le.s32.totalorder %v2142, 8
          %vm2423 = vcmp.le.s32.totalorder %v2143, 8
          %vm2424 = vcmp.le.s32.totalorder %v2144, 8
          %vm2425 = vcmp.le.s32.totalorder %v2145, 8
          %vm2426 = vcmp.le.s32.totalorder %v2146, 8
          %vm2427 = vcmp.le.s32.totalorder %v2147, 8
          %vm2428 = vcmp.le.s32.totalorder %v2148, 8
          %vm2429 = vcmp.le.s32.totalorder %v2149, 8
          %vm2430 = vcmp.le.s32.totalorder %v2150, 8
          %vm2431 = vcmp.le.s32.totalorder %v2151, 8
          %vm2432 = vcmp.le.s32.totalorder %v2152, 8
          %vm2433 = vcmp.le.s32.totalorder %v2153, 8
          %vm2434 = vcmp.le.s32.totalorder %v2154, 8
          %vm2435 = vcmp.le.s32.totalorder %v2155, 8
          %vm2436 = vcmp.le.s32.totalorder %v2156, 8
          %vm2437 = vcmp.le.s32.totalorder %v2157, 8
          %vm2438 = vcmp.le.s32.totalorder %v2158, 8
          %vm2439 = vcmp.le.s32.totalorder %v2159, 8
          %vm2440 = vcmp.le.s32.totalorder %v2160, 8
          %vm2441 = vcmp.le.s32.totalorder %v2161, 8
          %vm2442 = vcmp.le.s32.totalorder %v2162, 8
          %vm2443 = vcmp.le.s32.totalorder %v2163, 8
          %vm2444 = vcmp.le.s32.totalorder %v2164, 8
          %vm2445 = vcmp.le.s32.totalorder %v2165, 8
          %vm2446 = vcmp.le.s32.totalorder %v2166, 8
          %vm2447 = vcmp.le.s32.totalorder %v2167, 8
          %vm2448 = vcmp.le.s32.totalorder %v2168, 8
          %vm2449 = vcmp.le.s32.totalorder %v2169, 8
          %vm2450 = vcmp.le.s32.totalorder %v2170, 8
          %vm2451 = vcmp.le.s32.totalorder %v2171, 8
          %vm2452 = vcmp.le.s32.totalorder %v2172, 8
          %vm2453 = vcmp.le.s32.totalorder %v2173, 8
          %vm2454 = vcmp.le.s32.totalorder %v2174, 8
          %vm2455 = vcmp.le.s32.totalorder %v2175, 8
          %vm2456 = vcmp.le.s32.totalorder %v2176, 8
          %vm2457 = vcmp.le.s32.totalorder %v2177, 8
          %vm2458 = vcmp.le.s32.totalorder %v2178, 8
          %vm2459 = vcmp.le.s32.totalorder %v2179, 8
          %vm2460 = vcmp.le.s32.totalorder %v2180, 8
          %vm2461 = vmand %vm2381, %vm2421
          %vm2462 = vmand %vm2382, %vm2422
          %vm2463 = vmand %vm2383, %vm2423
          %vm2464 = vmand %vm2384, %vm2424
          %vm2465 = vmand %vm2385, %vm2425
          %vm2466 = vmand %vm2386, %vm2426
          %vm2467 = vmand %vm2387, %vm2427
          %vm2468 = vmand %vm2388, %vm2428
          %vm2469 = vmand %vm2389, %vm2429
          %vm2470 = vmand %vm2390, %vm2430
          %vm2471 = vmand %vm2391, %vm2431
          %vm2472 = vmand %vm2392, %vm2432
          %vm2473 = vmand %vm2393, %vm2433
          %vm2474 = vmand %vm2394, %vm2434
          %vm2475 = vmand %vm2395, %vm2435
          %vm2476 = vmand %vm2396, %vm2436
          %vm2477 = vmand %vm2397, %vm2437
          %vm2478 = vmand %vm2398, %vm2438
          %vm2479 = vmand %vm2399, %vm2439
          %vm2480 = vmand %vm2400, %vm2440
          %vm2481 = vmand %vm2401, %vm2441
          %vm2482 = vmand %vm2402, %vm2442
          %vm2483 = vmand %vm2403, %vm2443
          %vm2484 = vmand %vm2404, %vm2444
          %vm2485 = vmand %vm2405, %vm2445
          %vm2486 = vmand %vm2406, %vm2446
          %vm2487 = vmand %vm2407, %vm2447
          %vm2488 = vmand %vm2408, %vm2448
          %vm2489 = vmand %vm2409, %vm2449
          %vm2490 = vmand %vm2410, %vm2450
          %vm2491 = vmand %vm2411, %vm2451
          %vm2492 = vmand %vm2412, %vm2452
          %vm2493 = vmand %vm2413, %vm2453
          %vm2494 = vmand %vm2414, %vm2454
          %vm2495 = vmand %vm2415, %vm2455
          %vm2496 = vmand %vm2416, %vm2456
          %vm2497 = vmand %vm2417, %vm2457
          %vm2498 = vmand %vm2418, %vm2458
          %vm2499 = vmand %vm2419, %vm2459
          %vm2500 = vmand %vm2420, %vm2460
          %vm2501 = vcmp.ge.s32.totalorder %v2141, 11
          %vm2502 = vcmp.ge.s32.totalorder %v2142, 11
          %vm2503 = vcmp.ge.s32.totalorder %v2143, 11
          %vm2504 = vcmp.ge.s32.totalorder %v2144, 11
          %vm2505 = vcmp.ge.s32.totalorder %v2145, 11
          %vm2506 = vcmp.ge.s32.totalorder %v2146, 11
          %vm2507 = vcmp.ge.s32.totalorder %v2147, 11
          %vm2508 = vcmp.ge.s32.totalorder %v2148, 11
          %vm2509 = vcmp.ge.s32.totalorder %v2149, 11
          %vm2510 = vcmp.ge.s32.totalorder %v2150, 11
          %vm2511 = vcmp.ge.s32.totalorder %v2151, 11
          %vm2512 = vcmp.ge.s32.totalorder %v2152, 11
          %vm2513 = vcmp.ge.s32.totalorder %v2153, 11
          %vm2514 = vcmp.ge.s32.totalorder %v2154, 11
          %vm2515 = vcmp.ge.s32.totalorder %v2155, 11
          %vm2516 = vcmp.ge.s32.totalorder %v2156, 11
          %vm2517 = vcmp.ge.s32.totalorder %v2157, 11
          %vm2518 = vcmp.ge.s32.totalorder %v2158, 11
          %vm2519 = vcmp.ge.s32.totalorder %v2159, 11
          %vm2520 = vcmp.ge.s32.totalorder %v2160, 11
          %vm2521 = vcmp.ge.s32.totalorder %v2161, 11
          %vm2522 = vcmp.ge.s32.totalorder %v2162, 11
          %vm2523 = vcmp.ge.s32.totalorder %v2163, 11
          %vm2524 = vcmp.ge.s32.totalorder %v2164, 11
          %vm2525 = vcmp.ge.s32.totalorder %v2165, 11
          %vm2526 = vcmp.ge.s32.totalorder %v2166, 11
          %vm2527 = vcmp.ge.s32.totalorder %v2167, 11
          %vm2528 = vcmp.ge.s32.totalorder %v2168, 11
          %vm2529 = vcmp.ge.s32.totalorder %v2169, 11
          %vm2530 = vcmp.ge.s32.totalorder %v2170, 11
          %vm2531 = vcmp.ge.s32.totalorder %v2171, 11
          %vm2532 = vcmp.ge.s32.totalorder %v2172, 11
          %vm2533 = vcmp.ge.s32.totalorder %v2173, 11
          %vm2534 = vcmp.ge.s32.totalorder %v2174, 11
          %vm2535 = vcmp.ge.s32.totalorder %v2175, 11
          %vm2536 = vcmp.ge.s32.totalorder %v2176, 11
          %vm2537 = vcmp.ge.s32.totalorder %v2177, 11
          %vm2538 = vcmp.ge.s32.totalorder %v2178, 11
          %vm2539 = vcmp.ge.s32.totalorder %v2179, 11
          %vm2540 = vcmp.ge.s32.totalorder %v2180, 11
          %vm2541 = vcmp.le.s32.totalorder %v2141, 18
          %vm2542 = vcmp.le.s32.totalorder %v2142, 18
          %vm2543 = vcmp.le.s32.totalorder %v2143, 18
          %vm2544 = vcmp.le.s32.totalorder %v2144, 18
          %vm2545 = vcmp.le.s32.totalorder %v2145, 18
          %vm2546 = vcmp.le.s32.totalorder %v2146, 18
          %vm2547 = vcmp.le.s32.totalorder %v2147, 18
          %vm2548 = vcmp.le.s32.totalorder %v2148, 18
          %vm2549 = vcmp.le.s32.totalorder %v2149, 18
          %vm2550 = vcmp.le.s32.totalorder %v2150, 18
          %vm2551 = vcmp.le.s32.totalorder %v2151, 18
          %vm2552 = vcmp.le.s32.totalorder %v2152, 18
          %vm2553 = vcmp.le.s32.totalorder %v2153, 18
          %vm2554 = vcmp.le.s32.totalorder %v2154, 18
          %vm2555 = vcmp.le.s32.totalorder %v2155, 18
          %vm2556 = vcmp.le.s32.totalorder %v2156, 18
          %vm2557 = vcmp.le.s32.totalorder %v2157, 18
          %vm2558 = vcmp.le.s32.totalorder %v2158, 18
          %vm2559 = vcmp.le.s32.totalorder %v2159, 18
          %vm2560 = vcmp.le.s32.totalorder %v2160, 18
          %vm2561 = vcmp.le.s32.totalorder %v2161, 18
          %vm2562 = vcmp.le.s32.totalorder %v2162, 18
          %vm2563 = vcmp.le.s32.totalorder %v2163, 18
          %vm2564 = vcmp.le.s32.totalorder %v2164, 18
          %vm2565 = vcmp.le.s32.totalorder %v2165, 18
          %vm2566 = vcmp.le.s32.totalorder %v2166, 18
          %vm2567 = vcmp.le.s32.totalorder %v2167, 18
          %vm2568 = vcmp.le.s32.totalorder %v2168, 18
          %vm2569 = vcmp.le.s32.totalorder %v2169, 18
          %vm2570 = vcmp.le.s32.totalorder %v2170, 18
          %vm2571 = vcmp.le.s32.totalorder %v2171, 18
          %vm2572 = vcmp.le.s32.totalorder %v2172, 18
          %vm2573 = vcmp.le.s32.totalorder %v2173, 18
          %vm2574 = vcmp.le.s32.totalorder %v2174, 18
          %vm2575 = vcmp.le.s32.totalorder %v2175, 18
          %vm2576 = vcmp.le.s32.totalorder %v2176, 18
          %vm2577 = vcmp.le.s32.totalorder %v2177, 18
          %vm2578 = vcmp.le.s32.totalorder %v2178, 18
          %vm2579 = vcmp.le.s32.totalorder %v2179, 18
          %vm2580 = vcmp.le.s32.totalorder %v2180, 18
          %vm2581 = vmand %vm2501, %vm2541
          %vm2582 = vmand %vm2502, %vm2542
          %vm2583 = vmand %vm2503, %vm2543
          %vm2584 = vmand %vm2504, %vm2544
          %vm2585 = vmand %vm2505, %vm2545
          %vm2586 = vmand %vm2506, %vm2546
          %vm2587 = vmand %vm2507, %vm2547
          %vm2588 = vmand %vm2508, %vm2548
          %vm2589 = vmand %vm2509, %vm2549
          %vm2590 = vmand %vm2510, %vm2550
          %vm2591 = vmand %vm2511, %vm2551
          %vm2592 = vmand %vm2512, %vm2552
          %vm2593 = vmand %vm2513, %vm2553
          %vm2594 = vmand %vm2514, %vm2554
          %vm2595 = vmand %vm2515, %vm2555
          %vm2596 = vmand %vm2516, %vm2556
          %vm2597 = vmand %vm2517, %vm2557
          %vm2598 = vmand %vm2518, %vm2558
          %vm2599 = vmand %vm2519, %vm2559
          %vm2600 = vmand %vm2520, %vm2560
          %vm2601 = vmand %vm2521, %vm2561
          %vm2602 = vmand %vm2522, %vm2562
          %vm2603 = vmand %vm2523, %vm2563
          %vm2604 = vmand %vm2524, %vm2564
          %vm2605 = vmand %vm2525, %vm2565
          %vm2606 = vmand %vm2526, %vm2566
          %vm2607 = vmand %vm2527, %vm2567
          %vm2608 = vmand %vm2528, %vm2568
          %vm2609 = vmand %vm2529, %vm2569
          %vm2610 = vmand %vm2530, %vm2570
          %vm2611 = vmand %vm2531, %vm2571
          %vm2612 = vmand %vm2532, %vm2572
          %vm2613 = vmand %vm2533, %vm2573
          %vm2614 = vmand %vm2534, %vm2574
          %vm2615 = vmand %vm2535, %vm2575
          %vm2616 = vmand %vm2536, %vm2576
          %vm2617 = vmand %vm2537, %vm2577
          %vm2618 = vmand %vm2538, %vm2578
          %vm2619 = vmand %vm2539, %vm2579
          %vm2620 = vmand %vm2540, %vm2580
          %vm2621 = vmor %vm2461, %vm2581
          %vm2622 = vmor %vm2462, %vm2582
          %vm2623 = vmor %vm2463, %vm2583
          %vm2624 = vmor %vm2464, %vm2584
          %vm2625 = vmor %vm2465, %vm2585
          %vm2626 = vmor %vm2466, %vm2586
          %vm2627 = vmor %vm2467, %vm2587
          %vm2628 = vmor %vm2468, %vm2588
          %vm2629 = vmor %vm2469, %vm2589
          %vm2630 = vmor %vm2470, %vm2590
          %vm2631 = vmor %vm2471, %vm2591
          %vm2632 = vmor %vm2472, %vm2592
          %vm2633 = vmor %vm2473, %vm2593
          %vm2634 = vmor %vm2474, %vm2594
          %vm2635 = vmor %vm2475, %vm2595
          %vm2636 = vmor %vm2476, %vm2596
          %vm2637 = vmor %vm2477, %vm2597
          %vm2638 = vmor %vm2478, %vm2598
          %vm2639 = vmor %vm2479, %vm2599
          %vm2640 = vmor %vm2480, %vm2600
          %vm2641 = vmor %vm2481, %vm2601
          %vm2642 = vmor %vm2482, %vm2602
          %vm2643 = vmor %vm2483, %vm2603
          %vm2644 = vmor %vm2484, %vm2604
          %vm2645 = vmor %vm2485, %vm2605
          %vm2646 = vmor %vm2486, %vm2606
          %vm2647 = vmor %vm2487, %vm2607
          %vm2648 = vmor %vm2488, %vm2608
          %vm2649 = vmor %vm2489, %vm2609
          %vm2650 = vmor %vm2490, %vm2610
          %vm2651 = vmor %vm2491, %vm2611
          %vm2652 = vmor %vm2492, %vm2612
          %vm2653 = vmor %vm2493, %vm2613
          %vm2654 = vmor %vm2494, %vm2614
          %vm2655 = vmor %vm2495, %vm2615
          %vm2656 = vmor %vm2496, %vm2616
          %vm2657 = vmor %vm2497, %vm2617
          %vm2658 = vmor %vm2498, %vm2618
          %vm2659 = vmor %vm2499, %vm2619
          %vm2660 = vmor %vm2500, %vm2620
          %vm2661 = vmand %vm2341, %vm2621
          %vm2662 = vmand %vm2342, %vm2622
          %vm2663 = vmand %vm2343, %vm2623
          %vm2664 = vmand %vm2344, %vm2624
          %vm2665 = vmand %vm2345, %vm2625
          %vm2666 = vmand %vm2346, %vm2626
          %vm2667 = vmand %vm2347, %vm2627
          %vm2668 = vmand %vm2348, %vm2628
          %vm2669 = vmand %vm2349, %vm2629
          %vm2670 = vmand %vm2350, %vm2630
          %vm2671 = vmand %vm2351, %vm2631
          %vm2672 = vmand %vm2352, %vm2632
          %vm2673 = vmand %vm2353, %vm2633
          %vm2674 = vmand %vm2354, %vm2634
          %vm2675 = vmand %vm2355, %vm2635
          %vm2676 = vmand %vm2356, %vm2636
          %vm2677 = vmand %vm2357, %vm2637
          %vm2678 = vmand %vm2358, %vm2638
          %vm2679 = vmand %vm2359, %vm2639
          %vm2680 = vmand %vm2360, %vm2640
          %vm2681 = vmand %vm2361, %vm2641
          %vm2682 = vmand %vm2362, %vm2642
          %vm2683 = vmand %vm2363, %vm2643
          %vm2684 = vmand %vm2364, %vm2644
          %vm2685 = vmand %vm2365, %vm2645
          %vm2686 = vmand %vm2366, %vm2646
          %vm2687 = vmand %vm2367, %vm2647
          %vm2688 = vmand %vm2368, %vm2648
          %vm2689 = vmand %vm2369, %vm2649
          %vm2690 = vmand %vm2370, %vm2650
          %vm2691 = vmand %vm2371, %vm2651
          %vm2692 = vmand %vm2372, %vm2652
          %vm2693 = vmand %vm2373, %vm2653
          %vm2694 = vmand %vm2374, %vm2654
          %vm2695 = vmand %vm2375, %vm2655
          %vm2696 = vmand %vm2376, %vm2656
          %vm2697 = vmand %vm2377, %vm2657
          %vm2698 = vmand %vm2378, %vm2658
          %vm2699 = vmand %vm2379, %vm2659
          %vm2700 = vmand %vm2380, %vm2660
          %v2701 = vsel %vm2661, 1, 0
          %v2702 = vsel %vm2662, 1, 0
          %v2703 = vsel %vm2663, 1, 0
          %v2704 = vsel %vm2664, 1, 0
          %v2705 = vsel %vm2665, 1, 0
          %v2706 = vsel %vm2666, 1, 0
          %v2707 = vsel %vm2667, 1, 0
          %v2708 = vsel %vm2668, 1, 0
          %v2709 = vsel %vm2669, 1, 0
          %v2710 = vsel %vm2670, 1, 0
          %v2711 = vsel %vm2671, 1, 0
          %v2712 = vsel %vm2672, 1, 0
          %v2713 = vsel %vm2673, 1, 0
          %v2714 = vsel %vm2674, 1, 0
          %v2715 = vsel %vm2675, 1, 0
          %v2716 = vsel %vm2676, 1, 0
          %v2717 = vsel %vm2677, 1, 0
          %v2718 = vsel %vm2678, 1, 0
          %v2719 = vsel %vm2679, 1, 0
          %v2720 = vsel %vm2680, 1, 0
          %v2721 = vsel %vm2681, 1, 0
          %v2722 = vsel %vm2682, 1, 0
          %v2723 = vsel %vm2683, 1, 0
          %v2724 = vsel %vm2684, 1, 0
          %v2725 = vsel %vm2685, 1, 0
          %v2726 = vsel %vm2686, 1, 0
          %v2727 = vsel %vm2687, 1, 0
          %v2728 = vsel %vm2688, 1, 0
          %v2729 = vsel %vm2689, 1, 0
          %v2730 = vsel %vm2690, 1, 0
          %v2731 = vsel %vm2691, 1, 0
          %v2732 = vsel %vm2692, 1, 0
          %v2733 = vsel %vm2693, 1, 0
          %v2734 = vsel %vm2694, 1, 0
          %v2735 = vsel %vm2695, 1, 0
          %v2736 = vsel %vm2696, 1, 0
          %v2737 = vsel %vm2697, 1, 0
          %v2738 = vsel %vm2698, 1, 0
          %v2739 = vsel %vm2699, 1, 0
          %v2740 = vsel %vm2700, 1, 0
          %v2741 = vcvt.s32.f32 %v2701
          %v2742 = vcvt.s32.f32 %v2702
          %v2743 = vcvt.s32.f32 %v2703
          %v2744 = vcvt.s32.f32 %v2704
          %v2745 = vcvt.s32.f32 %v2705
          %v2746 = vcvt.s32.f32 %v2706
          %v2747 = vcvt.s32.f32 %v2707
          %v2748 = vcvt.s32.f32 %v2708
          %v2749 = vcvt.s32.f32 %v2709
          %v2750 = vcvt.s32.f32 %v2710
          %v2751 = vcvt.s32.f32 %v2711
          %v2752 = vcvt.s32.f32 %v2712
          %v2753 = vcvt.s32.f32 %v2713
          %v2754 = vcvt.s32.f32 %v2714
          %v2755 = vcvt.s32.f32 %v2715
          %v2756 = vcvt.s32.f32 %v2716
          %v2757 = vcvt.s32.f32 %v2717
          %v2758 = vcvt.s32.f32 %v2718
          %v2759 = vcvt.s32.f32 %v2719
          %v2760 = vcvt.s32.f32 %v2720
          %v2761 = vcvt.s32.f32 %v2721
          %v2762 = vcvt.s32.f32 %v2722
          %v2763 = vcvt.s32.f32 %v2723
          %v2764 = vcvt.s32.f32 %v2724
          %v2765 = vcvt.s32.f32 %v2725
          %v2766 = vcvt.s32.f32 %v2726
          %v2767 = vcvt.s32.f32 %v2727
          %v2768 = vcvt.s32.f32 %v2728
          %v2769 = vcvt.s32.f32 %v2729
          %v2770 = vcvt.s32.f32 %v2730
          %v2771 = vcvt.s32.f32 %v2731
          %v2772 = vcvt.s32.f32 %v2732
          %v2773 = vcvt.s32.f32 %v2733
          %v2774 = vcvt.s32.f32 %v2734
          %v2775 = vcvt.s32.f32 %v2735
          %v2776 = vcvt.s32.f32 %v2736
          %v2777 = vcvt.s32.f32 %v2737
          %v2778 = vcvt.s32.f32 %v2738
          %v2779 = vcvt.s32.f32 %v2739
          %v2780 = vcvt.s32.f32 %v2740
          %v2781 = vmul.f32 %v1980, %v2741
          %v2782 = vmul.f32 %v1981, %v2741
          %v2783 = vmul.f32 %v1982, %v2742
          %v2784 = vmul.f32 %v1983, %v2742
          %v2785 = vmul.f32 %v1984, %v2743
          %v2786 = vmul.f32 %v1985, %v2743
          %v2787 = vmul.f32 %v1986, %v2744
          %v2788 = vmul.f32 %v1987, %v2744
          %v2789 = vmul.f32 %v1988, %v2745
          %v2790 = vmul.f32 %v1989, %v2745
          %v2791 = vmul.f32 %v1990, %v2746
          %v2792 = vmul.f32 %v1991, %v2746
          %v2793 = vmul.f32 %v1992, %v2747
          %v2794 = vmul.f32 %v1993, %v2747
          %v2795 = vmul.f32 %v1994, %v2748
          %v2796 = vmul.f32 %v1995, %v2748
          %v2797 = vmul.f32 %v1996, %v2749
          %v2798 = vmul.f32 %v1997, %v2749
          %v2799 = vmul.f32 %v1998, %v2750
          %v2800 = vmul.f32 %v1999, %v2750
          %v2801 = vmul.f32 %v2000, %v2751
          %v2802 = vmul.f32 %v2001, %v2751
          %v2803 = vmul.f32 %v2002, %v2752
          %v2804 = vmul.f32 %v2003, %v2752
          %v2805 = vmul.f32 %v2004, %v2753
          %v2806 = vmul.f32 %v2005, %v2753
          %v2807 = vmul.f32 %v2006, %v2754
          %v2808 = vmul.f32 %v2007, %v2754
          %v2809 = vmul.f32 %v2008, %v2755
          %v2810 = vmul.f32 %v2009, %v2755
          %v2811 = vmul.f32 %v2010, %v2756
          %v2812 = vmul.f32 %v2011, %v2756
          %v2813 = vmul.f32 %v2012, %v2757
          %v2814 = vmul.f32 %v2013, %v2757
          %v2815 = vmul.f32 %v2014, %v2758
          %v2816 = vmul.f32 %v2015, %v2758
          %v2817 = vmul.f32 %v2016, %v2759
          %v2818 = vmul.f32 %v2017, %v2759
          %v2819 = vmul.f32 %v2018, %v2760
          %v2820 = vmul.f32 %v2019, %v2760
          %v2821 = vmul.f32 %v2020, %v2761
          %v2822 = vmul.f32 %v2021, %v2761
          %v2823 = vmul.f32 %v2022, %v2762
          %v2824 = vmul.f32 %v2023, %v2762
          %v2825 = vmul.f32 %v2024, %v2763
          %v2826 = vmul.f32 %v2025, %v2763
          %v2827 = vmul.f32 %v2026, %v2764
          %v2828 = vmul.f32 %v2027, %v2764
          %v2829 = vmul.f32 %v2028, %v2765
          %v2830 = vmul.f32 %v2029, %v2765
          %v2831 = vmul.f32 %v2030, %v2766
          %v2832 = vmul.f32 %v2031, %v2766
          %v2833 = vmul.f32 %v2032, %v2767
          %v2834 = vmul.f32 %v2033, %v2767
          %v2835 = vmul.f32 %v2034, %v2768
          %v2836 = vmul.f32 %v2035, %v2768
          %v2837 = vmul.f32 %v2036, %v2769
          %v2838 = vmul.f32 %v2037, %v2769
          %v2839 = vmul.f32 %v2038, %v2770
          %v2840 = vmul.f32 %v2039, %v2770
          %v2841 = vmul.f32 %v2040, %v2771
          %v2842 = vmul.f32 %v2041, %v2771
          %v2843 = vmul.f32 %v2042, %v2772
          %v2844 = vmul.f32 %v2043, %v2772
          %v2845 = vmul.f32 %v2044, %v2773
          %v2846 = vmul.f32 %v2045, %v2773
          %v2847 = vmul.f32 %v2046, %v2774
          %v2848 = vmul.f32 %v2047, %v2774
          %v2849 = vmul.f32 %v2048, %v2775
          %v2850 = vmul.f32 %v2049, %v2775
          %v2851 = vmul.f32 %v2050, %v2776
          %v2852 = vmul.f32 %v2051, %v2776
          %v2853 = vmul.f32 %v2052, %v2777
          %v2854 = vmul.f32 %v2053, %v2777
          %v2855 = vmul.f32 %v2054, %v2778
          %v2856 = vmul.f32 %v2055, %v2778
          %v2857 = vmul.f32 %v2056, %v2779
          %v2858 = vmul.f32 %v2057, %v2779
          %v2859 = vmul.f32 %v2058, %v2780
          %v2860 = vmul.f32 %v2059, %v2780
          %v2861 = vadd.f32 %v2781, %v2783
          %v2862 = vadd.f32 %v2861, %v2785
          %v2863 = vadd.f32 %v2862, %v2787
          %v2864 = vadd.f32 %v2863, %v2789
          %v2865 = vadd.f32 %v2864, %v2791
          %v2866 = vadd.f32 %v2865, %v2793
          %v2867 = vadd.f32 %v2866, %v2795
          %v2868 = vadd.f32 %v2867, %v2797
          %v2869 = vadd.f32 %v2868, %v2799
          %v2870 = vadd.f32 %v2869, %v2801
          %v2871 = vadd.f32 %v2870, %v2803
          %v2872 = vadd.f32 %v2871, %v2805
          %v2873 = vadd.f32 %v2872, %v2807
          %v2874 = vadd.f32 %v2873, %v2809
          %v2875 = vadd.f32 %v2874, %v2811
          %v2876 = vadd.f32 %v2875, %v2813
          %v2877 = vadd.f32 %v2876, %v2815
          %v2878 = vadd.f32 %v2877, %v2817
          %v2879 = vadd.f32 %v2878, %v2819
          %v2880 = vadd.f32 %v2879, %v2821
          %v2881 = vadd.f32 %v2880, %v2823
          %v2882 = vadd.f32 %v2881, %v2825
          %v2883 = vadd.f32 %v2882, %v2827
          %v2884 = vadd.f32 %v2883, %v2829
          %v2885 = vadd.f32 %v2884, %v2831
          %v2886 = vadd.f32 %v2885, %v2833
          %v2887 = vadd.f32 %v2886, %v2835
          %v2888 = vadd.f32 %v2887, %v2837
          %v2889 = vadd.f32 %v2888, %v2839
          %v2890 = vadd.f32 %v2889, %v2841
          %v2891 = vadd.f32 %v2890, %v2843
          %v2892 = vadd.f32 %v2891, %v2845
          %v2893 = vadd.f32 %v2892, %v2847
          %v2894 = vadd.f32 %v2893, %v2849
          %v2895 = vadd.f32 %v2894, %v2851
          %v2896 = vadd.f32 %v2895, %v2853
          %v2897 = vadd.f32 %v2896, %v2855
          %v2898 = vadd.f32 %v2897, %v2857
          %v2899 = vadd.f32 %v2898, %v2859
          %v2900 = vrot.slane %v2899, 4
          %v2901 = vadd.f32 %v2899, %v2900
          %v2902 = vrot.slane %v2901, 2
          %v2903 = vadd.f32 %v2901, %v2902
          %v2904 = vrot.slane %v2903, 1
          %v2905 = vadd.f32 %v2903, %v2904
          %v2906 = vadd.f32 %v2782, %v2784
          %v2907 = vadd.f32 %v2906, %v2786
          %v2908 = vadd.f32 %v2907, %v2788
          %v2909 = vadd.f32 %v2908, %v2790
          %v2910 = vadd.f32 %v2909, %v2792
          %v2911 = vadd.f32 %v2910, %v2794
          %v2912 = vadd.f32 %v2911, %v2796
          %v2913 = vadd.f32 %v2912, %v2798
          %v2914 = vadd.f32 %v2913, %v2800
          %v2915 = vadd.f32 %v2914, %v2802
          %v2916 = vadd.f32 %v2915, %v2804
          %v2917 = vadd.f32 %v2916, %v2806
          %v2918 = vadd.f32 %v2917, %v2808
          %v2919 = vadd.f32 %v2918, %v2810
          %v2920 = vadd.f32 %v2919, %v2812
          %v2921 = vadd.f32 %v2920, %v2814
          %v2922 = vadd.f32 %v2921, %v2816
          %v2923 = vadd.f32 %v2922, %v2818
          %v2924 = vadd.f32 %v2923, %v2820
          %v2925 = vadd.f32 %v2924, %v2822
          %v2926 = vadd.f32 %v2925, %v2824
          %v2927 = vadd.f32 %v2926, %v2826
          %v2928 = vadd.f32 %v2927, %v2828
          %v2929 = vadd.f32 %v2928, %v2830
          %v2930 = vadd.f32 %v2929, %v2832
          %v2931 = vadd.f32 %v2930, %v2834
          %v2932 = vadd.f32 %v2931, %v2836
          %v2933 = vadd.f32 %v2932, %v2838
          %v2934 = vadd.f32 %v2933, %v2840
          %v2935 = vadd.f32 %v2934, %v2842
          %v2936 = vadd.f32 %v2935, %v2844
          %v2937 = vadd.f32 %v2936, %v2846
          %v2938 = vadd.f32 %v2937, %v2848
          %v2939 = vadd.f32 %v2938, %v2850
          %v2940 = vadd.f32 %v2939, %v2852
          %v2941 = vadd.f32 %v2940, %v2854
          %v2942 = vadd.f32 %v2941, %v2856
          %v2943 = vadd.f32 %v2942, %v2858
          %v2944 = vadd.f32 %v2943, %v2860
          %v2945 = vrot.slane %v2944, 4
          %v2946 = vadd.f32 %v2944, %v2945
          %v2947 = vrot.slane %v2946, 2
          %v2948 = vadd.f32 %v2946, %v2947
          %v2949 = vrot.slane %v2948, 1
          %v2950 = vadd.f32 %v2948, %v2949
          %v2951 = vmul.f32 %v2905, 0.0078125
          %v2952 = vmul.f32 %v2950, 0.0078125
          %v2953 = vsub.f32 %v1980, %v2951
          %v2954 = vsub.f32 %v1981, %v2952
          %v2955 = vsub.f32 %v1982, %v2951
          %v2956 = vsub.f32 %v1983, %v2952
          %v2957 = vsub.f32 %v1984, %v2951
          %v2958 = vsub.f32 %v1985, %v2952
          %v2959 = vsub.f32 %v1986, %v2951
          %v2960 = vsub.f32 %v1987, %v2952
          %v2961 = vsub.f32 %v1988, %v2951
          %v2962 = vsub.f32 %v1989, %v2952
          %v2963 = vsub.f32 %v1990, %v2951
          %v2964 = vsub.f32 %v1991, %v2952
          %v2965 = vsub.f32 %v1992, %v2951
          %v2966 = vsub.f32 %v1993, %v2952
          %v2967 = vsub.f32 %v1994, %v2951
          %v2968 = vsub.f32 %v1995, %v2952
          %v2969 = vsub.f32 %v1996, %v2951
          %v2970 = vsub.f32 %v1997, %v2952
          %v2971 = vsub.f32 %v1998, %v2951
          %v2972 = vsub.f32 %v1999, %v2952
          %v2973 = vsub.f32 %v2000, %v2951
          %v2974 = vsub.f32 %v2001, %v2952
          %v2975 = vsub.f32 %v2002, %v2951
          %v2976 = vsub.f32 %v2003, %v2952
          %v2977 = vsub.f32 %v2004, %v2951
          %v2978 = vsub.f32 %v2005, %v2952
          %v2979 = vsub.f32 %v2006, %v2951
          %v2980 = vsub.f32 %v2007, %v2952
          %v2981 = vsub.f32 %v2008, %v2951
          %v2982 = vsub.f32 %v2009, %v2952
          %v2983 = vsub.f32 %v2010, %v2951
          %v2984 = vsub.f32 %v2011, %v2952
          %v2985 = vsub.f32 %v2012, %v2951
          %v2986 = vsub.f32 %v2013, %v2952
          %v2987 = vsub.f32 %v2014, %v2951
          %v2988 = vsub.f32 %v2015, %v2952
          %v2989 = vsub.f32 %v2016, %v2951
          %v2990 = vsub.f32 %v2017, %v2952
          %v2991 = vsub.f32 %v2018, %v2951
          %v2992 = vsub.f32 %v2019, %v2952
          %v2993 = vsub.f32 %v2020, %v2951
          %v2994 = vsub.f32 %v2021, %v2952
          %v2995 = vsub.f32 %v2022, %v2951
          %v2996 = vsub.f32 %v2023, %v2952
          %v2997 = vsub.f32 %v2024, %v2951
          %v2998 = vsub.f32 %v2025, %v2952
          %v2999 = vsub.f32 %v2026, %v2951
          %v3000 = vsub.f32 %v2027, %v2952
          %v3001 = vsub.f32 %v2028, %v2951
          %v3002 = vsub.f32 %v2029, %v2952
          %v3003 = vsub.f32 %v2030, %v2951
          %v3004 = vsub.f32 %v2031, %v2952
          %v3005 = vsub.f32 %v2032, %v2951
          %v3006 = vsub.f32 %v2033, %v2952
          %v3007 = vsub.f32 %v2034, %v2951
          %v3008 = vsub.f32 %v2035, %v2952
          %v3009 = vsub.f32 %v2036, %v2951
          %v3010 = vsub.f32 %v2037, %v2952
          %v3011 = vsub.f32 %v2038, %v2951
          %v3012 = vsub.f32 %v2039, %v2952
          %v3013 = vsub.f32 %v2040, %v2951
          %v3014 = vsub.f32 %v2041, %v2952
          %v3015 = vsub.f32 %v2042, %v2951
          %v3016 = vsub.f32 %v2043, %v2952
          %v3017 = vsub.f32 %v2044, %v2951
          %v3018 = vsub.f32 %v2045, %v2952
          %v3019 = vsub.f32 %v2046, %v2951
          %v3020 = vsub.f32 %v2047, %v2952
          %v3021 = vsub.f32 %v2048, %v2951
          %v3022 = vsub.f32 %v2049, %v2952
          %v3023 = vsub.f32 %v2050, %v2951
          %v3024 = vsub.f32 %v2051, %v2952
          %v3025 = vsub.f32 %v2052, %v2951
          %v3026 = vsub.f32 %v2053, %v2952
          %v3027 = vsub.f32 %v2054, %v2951
          %v3028 = vsub.f32 %v2055, %v2952
          %v3029 = vsub.f32 %v2056, %v2951
          %v3030 = vsub.f32 %v2057, %v2952
          %v3031 = vsub.f32 %v2058, %v2951
          %v3032 = vsub.f32 %v2059, %v2952
          %v3033 = vmul.f32 %v2953, %v2741
          %v3034 = vmul.f32 %v2954, %v2741
          %v3035 = vmul.f32 %v2955, %v2742
          %v3036 = vmul.f32 %v2956, %v2742
          %v3037 = vmul.f32 %v2957, %v2743
          %v3038 = vmul.f32 %v2958, %v2743
          %v3039 = vmul.f32 %v2959, %v2744
          %v3040 = vmul.f32 %v2960, %v2744
          %v3041 = vmul.f32 %v2961, %v2745
          %v3042 = vmul.f32 %v2962, %v2745
          %v3043 = vmul.f32 %v2963, %v2746
          %v3044 = vmul.f32 %v2964, %v2746
          %v3045 = vmul.f32 %v2965, %v2747
          %v3046 = vmul.f32 %v2966, %v2747
          %v3047 = vmul.f32 %v2967, %v2748
          %v3048 = vmul.f32 %v2968, %v2748
          %v3049 = vmul.f32 %v2969, %v2749
          %v3050 = vmul.f32 %v2970, %v2749
          %v3051 = vmul.f32 %v2971, %v2750
          %v3052 = vmul.f32 %v2972, %v2750
          %v3053 = vmul.f32 %v2973, %v2751
          %v3054 = vmul.f32 %v2974, %v2751
          %v3055 = vmul.f32 %v2975, %v2752
          %v3056 = vmul.f32 %v2976, %v2752
          %v3057 = vmul.f32 %v2977, %v2753
          %v3058 = vmul.f32 %v2978, %v2753
          %v3059 = vmul.f32 %v2979, %v2754
          %v3060 = vmul.f32 %v2980, %v2754
          %v3061 = vmul.f32 %v2981, %v2755
          %v3062 = vmul.f32 %v2982, %v2755
          %v3063 = vmul.f32 %v2983, %v2756
          %v3064 = vmul.f32 %v2984, %v2756
          %v3065 = vmul.f32 %v2985, %v2757
          %v3066 = vmul.f32 %v2986, %v2757
          %v3067 = vmul.f32 %v2987, %v2758
          %v3068 = vmul.f32 %v2988, %v2758
          %v3069 = vmul.f32 %v2989, %v2759
          %v3070 = vmul.f32 %v2990, %v2759
          %v3071 = vmul.f32 %v2991, %v2760
          %v3072 = vmul.f32 %v2992, %v2760
          %v3073 = vmul.f32 %v2993, %v2761
          %v3074 = vmul.f32 %v2994, %v2761
          %v3075 = vmul.f32 %v2995, %v2762
          %v3076 = vmul.f32 %v2996, %v2762
          %v3077 = vmul.f32 %v2997, %v2763
          %v3078 = vmul.f32 %v2998, %v2763
          %v3079 = vmul.f32 %v2999, %v2764
          %v3080 = vmul.f32 %v3000, %v2764
          %v3081 = vmul.f32 %v3001, %v2765
          %v3082 = vmul.f32 %v3002, %v2765
          %v3083 = vmul.f32 %v3003, %v2766
          %v3084 = vmul.f32 %v3004, %v2766
          %v3085 = vmul.f32 %v3005, %v2767
          %v3086 = vmul.f32 %v3006, %v2767
          %v3087 = vmul.f32 %v3007, %v2768
          %v3088 = vmul.f32 %v3008, %v2768
          %v3089 = vmul.f32 %v3009, %v2769
          %v3090 = vmul.f32 %v3010, %v2769
          %v3091 = vmul.f32 %v3011, %v2770
          %v3092 = vmul.f32 %v3012, %v2770
          %v3093 = vmul.f32 %v3013, %v2771
          %v3094 = vmul.f32 %v3014, %v2771
          %v3095 = vmul.f32 %v3015, %v2772
          %v3096 = vmul.f32 %v3016, %v2772
          %v3097 = vmul.f32 %v3017, %v2773
          %v3098 = vmul.f32 %v3018, %v2773
          %v3099 = vmul.f32 %v3019, %v2774
          %v3100 = vmul.f32 %v3020, %v2774
          %v3101 = vmul.f32 %v3021, %v2775
          %v3102 = vmul.f32 %v3022, %v2775
          %v3103 = vmul.f32 %v3023, %v2776
          %v3104 = vmul.f32 %v3024, %v2776
          %v3105 = vmul.f32 %v3025, %v2777
          %v3106 = vmul.f32 %v3026, %v2777
          %v3107 = vmul.f32 %v3027, %v2778
          %v3108 = vmul.f32 %v3028, %v2778
          %v3109 = vmul.f32 %v3029, %v2779
          %v3110 = vmul.f32 %v3030, %v2779
          %v3111 = vmul.f32 %v3031, %v2780
          %v3112 = vmul.f32 %v3032, %v2780
          %v3113 = vmul.f32 %v3033, %v3033
          %v3114 = vmul.f32 %v3034, %v3034
          %v3115 = vmul.f32 %v3035, %v3035
          %v3116 = vmul.f32 %v3036, %v3036
          %v3117 = vmul.f32 %v3037, %v3037
          %v3118 = vmul.f32 %v3038, %v3038
          %v3119 = vmul.f32 %v3039, %v3039
          %v3120 = vmul.f32 %v3040, %v3040
          %v3121 = vmul.f32 %v3041, %v3041
          %v3122 = vmul.f32 %v3042, %v3042
          %v3123 = vmul.f32 %v3043, %v3043
          %v3124 = vmul.f32 %v3044, %v3044
          %v3125 = vmul.f32 %v3045, %v3045
          %v3126 = vmul.f32 %v3046, %v3046
          %v3127 = vmul.f32 %v3047, %v3047
          %v3128 = vmul.f32 %v3048, %v3048
          %v3129 = vmul.f32 %v3049, %v3049
          %v3130 = vmul.f32 %v3050, %v3050
          %v3131 = vmul.f32 %v3051, %v3051
          %v3132 = vmul.f32 %v3052, %v3052
          %v3133 = vmul.f32 %v3053, %v3053
          %v3134 = vmul.f32 %v3054, %v3054
          %v3135 = vmul.f32 %v3055, %v3055
          %v3136 = vmul.f32 %v3056, %v3056
          %v3137 = vmul.f32 %v3057, %v3057
          %v3138 = vmul.f32 %v3058, %v3058
          %v3139 = vmul.f32 %v3059, %v3059
          %v3140 = vmul.f32 %v3060, %v3060
          %v3141 = vmul.f32 %v3061, %v3061
          %v3142 = vmul.f32 %v3062, %v3062
          %v3143 = vmul.f32 %v3063, %v3063
          %v3144 = vmul.f32 %v3064, %v3064
          %v3145 = vmul.f32 %v3065, %v3065
          %v3146 = vmul.f32 %v3066, %v3066
          %v3147 = vmul.f32 %v3067, %v3067
          %v3148 = vmul.f32 %v3068, %v3068
          %v3149 = vmul.f32 %v3069, %v3069
          %v3150 = vmul.f32 %v3070, %v3070
          %v3151 = vmul.f32 %v3071, %v3071
          %v3152 = vmul.f32 %v3072, %v3072
          %v3153 = vmul.f32 %v3073, %v3073
          %v3154 = vmul.f32 %v3074, %v3074
          %v3155 = vmul.f32 %v3075, %v3075
          %v3156 = vmul.f32 %v3076, %v3076
          %v3157 = vmul.f32 %v3077, %v3077
          %v3158 = vmul.f32 %v3078, %v3078
          %v3159 = vmul.f32 %v3079, %v3079
          %v3160 = vmul.f32 %v3080, %v3080
          %v3161 = vmul.f32 %v3081, %v3081
          %v3162 = vmul.f32 %v3082, %v3082
          %v3163 = vmul.f32 %v3083, %v3083
          %v3164 = vmul.f32 %v3084, %v3084
          %v3165 = vmul.f32 %v3085, %v3085
          %v3166 = vmul.f32 %v3086, %v3086
          %v3167 = vmul.f32 %v3087, %v3087
          %v3168 = vmul.f32 %v3088, %v3088
          %v3169 = vmul.f32 %v3089, %v3089
          %v3170 = vmul.f32 %v3090, %v3090
          %v3171 = vmul.f32 %v3091, %v3091
          %v3172 = vmul.f32 %v3092, %v3092
          %v3173 = vmul.f32 %v3093, %v3093
          %v3174 = vmul.f32 %v3094, %v3094
          %v3175 = vmul.f32 %v3095, %v3095
          %v3176 = vmul.f32 %v3096, %v3096
          %v3177 = vmul.f32 %v3097, %v3097
          %v3178 = vmul.f32 %v3098, %v3098
          %v3179 = vmul.f32 %v3099, %v3099
          %v3180 = vmul.f32 %v3100, %v3100
          %v3181 = vmul.f32 %v3101, %v3101
          %v3182 = vmul.f32 %v3102, %v3102
          %v3183 = vmul.f32 %v3103, %v3103
          %v3184 = vmul.f32 %v3104, %v3104
          %v3185 = vmul.f32 %v3105, %v3105
          %v3186 = vmul.f32 %v3106, %v3106
          %v3187 = vmul.f32 %v3107, %v3107
          %v3188 = vmul.f32 %v3108, %v3108
          %v3189 = vmul.f32 %v3109, %v3109
          %v3190 = vmul.f32 %v3110, %v3110
          %v3191 = vmul.f32 %v3111, %v3111
          %v3192 = vmul.f32 %v3112, %v3112
          %v3193 = vadd.f32 %v3113, %v3115
          %v3194 = vadd.f32 %v3193, %v3117
          %v3195 = vadd.f32 %v3194, %v3119
          %v3196 = vadd.f32 %v3195, %v3121
          %v3197 = vadd.f32 %v3196, %v3123
          %v3198 = vadd.f32 %v3197, %v3125
          %v3199 = vadd.f32 %v3198, %v3127
          %v3200 = vadd.f32 %v3199, %v3129
          %v3201 = vadd.f32 %v3200, %v3131
          %v3202 = vadd.f32 %v3201, %v3133
          %v3203 = vadd.f32 %v3202, %v3135
          %v3204 = vadd.f32 %v3203, %v3137
          %v3205 = vadd.f32 %v3204, %v3139
          %v3206 = vadd.f32 %v3205, %v3141
          %v3207 = vadd.f32 %v3206, %v3143
          %v3208 = vadd.f32 %v3207, %v3145
          %v3209 = vadd.f32 %v3208, %v3147
          %v3210 = vadd.f32 %v3209, %v3149
          %v3211 = vadd.f32 %v3210, %v3151
          %v3212 = vadd.f32 %v3211, %v3153
          %v3213 = vadd.f32 %v3212, %v3155
          %v3214 = vadd.f32 %v3213, %v3157
          %v3215 = vadd.f32 %v3214, %v3159
          %v3216 = vadd.f32 %v3215, %v3161
          %v3217 = vadd.f32 %v3216, %v3163
          %v3218 = vadd.f32 %v3217, %v3165
          %v3219 = vadd.f32 %v3218, %v3167
          %v3220 = vadd.f32 %v3219, %v3169
          %v3221 = vadd.f32 %v3220, %v3171
          %v3222 = vadd.f32 %v3221, %v3173
          %v3223 = vadd.f32 %v3222, %v3175
          %v3224 = vadd.f32 %v3223, %v3177
          %v3225 = vadd.f32 %v3224, %v3179
          %v3226 = vadd.f32 %v3225, %v3181
          %v3227 = vadd.f32 %v3226, %v3183
          %v3228 = vadd.f32 %v3227, %v3185
          %v3229 = vadd.f32 %v3228, %v3187
          %v3230 = vadd.f32 %v3229, %v3189
          %v3231 = vadd.f32 %v3230, %v3191
          %v3232 = vrot.slane %v3231, 4
          %v3233 = vadd.f32 %v3231, %v3232
          %v3234 = vrot.slane %v3233, 2
          %v3235 = vadd.f32 %v3233, %v3234
          %v3236 = vrot.slane %v3235, 1
          %v3237 = vadd.f32 %v3235, %v3236
          %v3238 = vadd.f32 %v3114, %v3116
          %v3239 = vadd.f32 %v3238, %v3118
          %v3240 = vadd.f32 %v3239, %v3120
          %v3241 = vadd.f32 %v3240, %v3122
          %v3242 = vadd.f32 %v3241, %v3124
          %v3243 = vadd.f32 %v3242, %v3126
          %v3244 = vadd.f32 %v3243, %v3128
          %v3245 = vadd.f32 %v3244, %v3130
          %v3246 = vadd.f32 %v3245, %v3132
          %v3247 = vadd.f32 %v3246, %v3134
          %v3248 = vadd.f32 %v3247, %v3136
          %v3249 = vadd.f32 %v3248, %v3138
          %v3250 = vadd.f32 %v3249, %v3140
          %v3251 = vadd.f32 %v3250, %v3142
          %v3252 = vadd.f32 %v3251, %v3144
          %v3253 = vadd.f32 %v3252, %v3146
          %v3254 = vadd.f32 %v3253, %v3148
          %v3255 = vadd.f32 %v3254, %v3150
          %v3256 = vadd.f32 %v3255, %v3152
          %v3257 = vadd.f32 %v3256, %v3154
          %v3258 = vadd.f32 %v3257, %v3156
          %v3259 = vadd.f32 %v3258, %v3158
          %v3260 = vadd.f32 %v3259, %v3160
          %v3261 = vadd.f32 %v3260, %v3162
          %v3262 = vadd.f32 %v3261, %v3164
          %v3263 = vadd.f32 %v3262, %v3166
          %v3264 = vadd.f32 %v3263, %v3168
          %v3265 = vadd.f32 %v3264, %v3170
          %v3266 = vadd.f32 %v3265, %v3172
          %v3267 = vadd.f32 %v3266, %v3174
          %v3268 = vadd.f32 %v3267, %v3176
          %v3269 = vadd.f32 %v3268, %v3178
          %v3270 = vadd.f32 %v3269, %v3180
          %v3271 = vadd.f32 %v3270, %v3182
          %v3272 = vadd.f32 %v3271, %v3184
          %v3273 = vadd.f32 %v3272, %v3186
          %v3274 = vadd.f32 %v3273, %v3188
          %v3275 = vadd.f32 %v3274, %v3190
          %v3276 = vadd.f32 %v3275, %v3192
          %v3277 = vrot.slane %v3276, 4
          %v3278 = vadd.f32 %v3276, %v3277
          %v3279 = vrot.slane %v3278, 2
          %v3280 = vadd.f32 %v3278, %v3279
          %v3281 = vrot.slane %v3280, 1
          %v3282 = vadd.f32 %v3280, %v3281
          %v3283 = vmul.f32 %v3237, 0.0078125
          %v3284 = vmul.f32 %v3282, 0.0078125
          %v3285 = vld [vmem:[#allocation8] sm:$0x3]
          %v3286 = vadd.f32 %v3283, 1e-05
          %v3287 = vadd.f32 %v3284, 1e-05
          %v3288 = vrsqrt.pop %v3286
          %v3289 = vmul.f32 %v3288, %v3286
          %v3290 = vmul.f32 %v3289, %v3288
          %v3291 = vmul.f32 0.5, %v3290
          %v3292 = vsub.f32 1.5, %v3291
          %v3293 = vmul.f32 %v3288, %v3292
          %vm3294 = vweird.f32 %v3286
          %vm3295 = vweird.f32 %v3288
          %vm3296 = vmor %vm3294, %vm3295
          %v3297 = vsel %vm3296, %v3288, %v3293
          %v3298 = vrsqrt.pop %v3287
          %v3299 = vmul.f32 %v3298, %v3287
          %v3300 = vmul.f32 %v3299, %v3298
          %v3301 = vmul.f32 0.5, %v3300
          %v3302 = vsub.f32 1.5, %v3301
          %v3303 = vmul.f32 %v3298, %v3302
          %vm3304 = vweird.f32 %v3287
          %vm3305 = vweird.f32 %v3298
          %vm3306 = vmor %vm3304, %vm3305
          %v3307 = vsel %vm3306, %v3298, %v3303
          %v3310 = vrot.slane %v3307, 7
          %vm3311 = vcmask 1040384
          %v3312 = vsel %vm3311, %v3297, %v3310
          %v3314 = vmul.f32 %v3285, %v3312
          %v3316 = vperm.slane %v3314, 0
          %v3317 = vperm.slane %v3314, 1
          %v3320 = vmul.f32 %v1980, %v3316
          %v3321 = vmul.f32 %v1981, %v3317
          %v3322 = vmul.f32 %v1982, %v3316
          %v3323 = vmul.f32 %v1983, %v3317
          %v3324 = vmul.f32 %v1984, %v3316
          %v3325 = vmul.f32 %v1985, %v3317
          %v3326 = vmul.f32 %v1986, %v3316
          %v3327 = vmul.f32 %v1987, %v3317
          %v3328 = vmul.f32 %v1988, %v3316
          %v3329 = vmul.f32 %v1989, %v3317
          %v3330 = vmul.f32 %v1990, %v3316
          %v3331 = vmul.f32 %v1991, %v3317
          %v3332 = vmul.f32 %v1992, %v3316
          %v3333 = vmul.f32 %v1993, %v3317
          %v3334 = vmul.f32 %v1994, %v3316
          %v3335 = vmul.f32 %v1995, %v3317
          %v3336 = vmul.f32 %v1996, %v3316
          %v3337 = vmul.f32 %v1997, %v3317
          %v3338 = vmul.f32 %v1998, %v3316
          %v3339 = vmul.f32 %v1999, %v3317
          %v3340 = vmul.f32 %v2000, %v3316
          %v3341 = vmul.f32 %v2001, %v3317
          %v3342 = vmul.f32 %v2002, %v3316
          %v3343 = vmul.f32 %v2003, %v3317
          %v3344 = vmul.f32 %v2004, %v3316
          %v3345 = vmul.f32 %v2005, %v3317
          %v3346 = vmul.f32 %v2006, %v3316
          %v3347 = vmul.f32 %v2007, %v3317
          %v3348 = vmul.f32 %v2008, %v3316
          %v3349 = vmul.f32 %v2009, %v3317
          %v3350 = vmul.f32 %v2010, %v3316
          %v3351 = vmul.f32 %v2011, %v3317
          %v3352 = vmul.f32 %v2012, %v3316
          %v3353 = vmul.f32 %v2013, %v3317
          %v3354 = vmul.f32 %v2014, %v3316
          %v3355 = vmul.f32 %v2015, %v3317
          %v3356 = vmul.f32 %v2016, %v3316
          %v3357 = vmul.f32 %v2017, %v3317
          %v3358 = vmul.f32 %v2018, %v3316
          %v3359 = vmul.f32 %v2019, %v3317
          %v3360 = vmul.f32 %v2020, %v3316
          %v3361 = vmul.f32 %v2021, %v3317
          %v3362 = vmul.f32 %v2022, %v3316
          %v3363 = vmul.f32 %v2023, %v3317
          %v3364 = vmul.f32 %v2024, %v3316
          %v3365 = vmul.f32 %v2025, %v3317
          %v3366 = vmul.f32 %v2026, %v3316
          %v3367 = vmul.f32 %v2027, %v3317
          %v3368 = vmul.f32 %v2028, %v3316
          %v3369 = vmul.f32 %v2029, %v3317
          %v3370 = vmul.f32 %v2030, %v3316
          %v3371 = vmul.f32 %v2031, %v3317
          %v3372 = vmul.f32 %v2032, %v3316
          %v3373 = vmul.f32 %v2033, %v3317
          %v3374 = vmul.f32 %v2034, %v3316
          %v3375 = vmul.f32 %v2035, %v3317
          %v3376 = vmul.f32 %v2036, %v3316
          %v3377 = vmul.f32 %v2037, %v3317
          %v3378 = vmul.f32 %v2038, %v3316
          %v3379 = vmul.f32 %v2039, %v3317
          %v3380 = vmul.f32 %v2040, %v3316
          %v3381 = vmul.f32 %v2041, %v3317
          %v3382 = vmul.f32 %v2042, %v3316
          %v3383 = vmul.f32 %v2043, %v3317
          %v3384 = vmul.f32 %v2044, %v3316
          %v3385 = vmul.f32 %v2045, %v3317
          %v3386 = vmul.f32 %v2046, %v3316
          %v3387 = vmul.f32 %v2047, %v3317
          %v3388 = vmul.f32 %v2048, %v3316
          %v3389 = vmul.f32 %v2049, %v3317
          %v3390 = vmul.f32 %v2050, %v3316
          %v3391 = vmul.f32 %v2051, %v3317
          %v3392 = vmul.f32 %v2052, %v3316
          %v3393 = vmul.f32 %v2053, %v3317
          %v3394 = vmul.f32 %v2054, %v3316
          %v3395 = vmul.f32 %v2055, %v3317
          %v3396 = vmul.f32 %v2056, %v3316
          %v3397 = vmul.f32 %v2057, %v3317
          %v3398 = vmul.f32 %v2058, %v3316
          %v3399 = vmul.f32 %v2059, %v3317
          %v3400 = vld [vmem:[%s3] sm:$0x3]
          %v3401 = vmul.f32 %v2951, %v3316
          %v3402 = vmul.f32 %v2952, %v3317
          %v3405 = vrot.slane %v3402, 7
          %v3406 = vsel %vm3311, %v3401, %v3405
          %v3408 = vsub.f32 %v3400, %v3406
          %v3410 = vperm.slane %v3408, 0
          %v3411 = vperm.slane %v3408, 1
          %v3414 = vadd.f32 %v3320, %v3410
          %v3415 = vadd.f32 %v3321, %v3411
          %v3416 = vadd.f32 %v3322, %v3410
          %v3417 = vadd.f32 %v3323, %v3411
          %v3418 = vadd.f32 %v3324, %v3410
          %v3419 = vadd.f32 %v3325, %v3411
          %v3420 = vadd.f32 %v3326, %v3410
          %v3421 = vadd.f32 %v3327, %v3411
          %v3422 = vadd.f32 %v3328, %v3410
          %v3423 = vadd.f32 %v3329, %v3411
          %v3424 = vadd.f32 %v3330, %v3410
          %v3425 = vadd.f32 %v3331, %v3411
          %v3426 = vadd.f32 %v3332, %v3410
          %v3427 = vadd.f32 %v3333, %v3411
          %v3428 = vadd.f32 %v3334, %v3410
          %v3429 = vadd.f32 %v3335, %v3411
          %v3430 = vadd.f32 %v3336, %v3410
          %v3431 = vadd.f32 %v3337, %v3411
          %v3432 = vadd.f32 %v3338, %v3410
          %v3433 = vadd.f32 %v3339, %v3411
          %v3434 = vadd.f32 %v3340, %v3410
          %v3435 = vadd.f32 %v3341, %v3411
          %v3436 = vadd.f32 %v3342, %v3410
          %v3437 = vadd.f32 %v3343, %v3411
          %v3438 = vadd.f32 %v3344, %v3410
          %v3439 = vadd.f32 %v3345, %v3411
          %v3440 = vadd.f32 %v3346, %v3410
          %v3441 = vadd.f32 %v3347, %v3411
          %v3442 = vadd.f32 %v3348, %v3410
          %v3443 = vadd.f32 %v3349, %v3411
          %v3444 = vadd.f32 %v3350, %v3410
          %v3445 = vadd.f32 %v3351, %v3411
          %v3446 = vadd.f32 %v3352, %v3410
          %v3447 = vadd.f32 %v3353, %v3411
          %v3448 = vadd.f32 %v3354, %v3410
          %v3449 = vadd.f32 %v3355, %v3411
          %v3450 = vadd.f32 %v3356, %v3410
          %v3451 = vadd.f32 %v3357, %v3411
          %v3452 = vadd.f32 %v3358, %v3410
          %v3453 = vadd.f32 %v3359, %v3411
          %v3454 = vadd.f32 %v3360, %v3410
          %v3455 = vadd.f32 %v3361, %v3411
          %v3456 = vadd.f32 %v3362, %v3410
          %v3457 = vadd.f32 %v3363, %v3411
          %v3458 = vadd.f32 %v3364, %v3410
          %v3459 = vadd.f32 %v3365, %v3411
          %v3460 = vadd.f32 %v3366, %v3410
          %v3461 = vadd.f32 %v3367, %v3411
          %v3462 = vadd.f32 %v3368, %v3410
          %v3463 = vadd.f32 %v3369, %v3411
          %v3464 = vadd.f32 %v3370, %v3410
          %v3465 = vadd.f32 %v3371, %v3411
          %v3466 = vadd.f32 %v3372, %v3410
          %v3467 = vadd.f32 %v3373, %v3411
          %v3468 = vadd.f32 %v3374, %v3410
          %v3469 = vadd.f32 %v3375, %v3411
          %v3470 = vadd.f32 %v3376, %v3410
          %v3471 = vadd.f32 %v3377, %v3411
          %v3472 = vadd.f32 %v3378, %v3410
          %v3473 = vadd.f32 %v3379, %v3411
          %v3474 = vadd.f32 %v3380, %v3410
          %v3475 = vadd.f32 %v3381, %v3411
          %v3476 = vadd.f32 %v3382, %v3410
          %v3477 = vadd.f32 %v3383, %v3411
          %v3478 = vadd.f32 %v3384, %v3410
          %v3479 = vadd.f32 %v3385, %v3411
          %v3480 = vadd.f32 %v3386, %v3410
          %v3481 = vadd.f32 %v3387, %v3411
          %v3482 = vadd.f32 %v3388, %v3410
          %v3483 = vadd.f32 %v3389, %v3411
          %v3484 = vadd.f32 %v3390, %v3410
          %v3485 = vadd.f32 %v3391, %v3411
          %v3486 = vadd.f32 %v3392, %v3410
          %v3487 = vadd.f32 %v3393, %v3411
          %v3488 = vadd.f32 %v3394, %v3410
          %v3489 = vadd.f32 %v3395, %v3411
          %v3490 = vadd.f32 %v3396, %v3410
          %v3491 = vadd.f32 %v3397, %v3411
          %v3492 = vadd.f32 %v3398, %v3410
          %v3493 = vadd.f32 %v3399, %v3411
          %v3494 = vld [vmem:[#allocation9] sm:$0xff]
          %v3495 = vld [vmem:[#allocation9 + $0x8] sm:$0xff]
          %v3496 = vld [vmem:[#allocation9 + $0x10] sm:$0xff]
          %v3497 = vld [vmem:[#allocation9 + $0x18] sm:$0xff]
          %v3498 = vld [vmem:[#allocation9 + $0x20] sm:$0xff]
          %v3499 = vld [vmem:[#allocation9 + $0x28] sm:$0xff]
          %v3500 = vld [vmem:[#allocation9 + $0x30] sm:$0xff]
          %v3501 = vld [vmem:[#allocation9 + $0x38] sm:$0xff]
          %v3502 = vld [vmem:[#allocation9 + $0x40] sm:$0xff]
          %v3503 = vld [vmem:[#allocation9 + $0x48] sm:$0xff]
          %v3504 = vld [vmem:[#allocation9 + $0x50] sm:$0xff]
          %v3505 = vld [vmem:[#allocation9 + $0x58] sm:$0xff]
          %v3506 = vld [vmem:[#allocation9 + $0x60] sm:$0xff]
          %v3507 = vld [vmem:[#allocation9 + $0x68] sm:$0xff]
          %v3508 = vld [vmem:[#allocation9 + $0x70] sm:$0xff]
          %v3509 = vld [vmem:[#allocation9 + $0x78] sm:$0xff]
          %v3510 = vld [vmem:[#allocation9 + $0x80] sm:$0xff]
          %v3511 = vld [vmem:[#allocation9 + $0x88] sm:$0xff]
          %v3512 = vld [vmem:[#allocation9 + $0x90] sm:$0xff]
          %v3513 = vld [vmem:[#allocation9 + $0x98] sm:$0xff]
          %v3514 = vld [vmem:[#allocation9 + $0xa0] sm:$0xff]
          %v3515 = vld [vmem:[#allocation9 + $0xa8] sm:$0xff]
          %v3516 = vld [vmem:[#allocation9 + $0xb0] sm:$0xff]
          %v3517 = vld [vmem:[#allocation9 + $0xb8] sm:$0xff]
          %v3518 = vld [vmem:[#allocation9 + $0xc0] sm:$0xff]
          %v3519 = vld [vmem:[#allocation9 + $0xc8] sm:$0xff]
          %v3520 = vld [vmem:[#allocation9 + $0xd0] sm:$0xff]
          %v3521 = vld [vmem:[#allocation9 + $0xd8] sm:$0xff]
          %v3522 = vld [vmem:[#allocation9 + $0xe0] sm:$0xff]
          %v3523 = vld [vmem:[#allocation9 + $0xe8] sm:$0xff]
          %v3524 = vld [vmem:[#allocation9 + $0xf0] sm:$0xff]
          %v3525 = vld [vmem:[#allocation9 + $0xf8] sm:$0xff]
          %v3526 = vld [vmem:[#allocation9 + $0x100] sm:$0xff]
          %v3527 = vld [vmem:[#allocation9 + $0x108] sm:$0xff]
          %v3528 = vld [vmem:[#allocation9 + $0x110] sm:$0xff]
          %v3529 = vld [vmem:[#allocation9 + $0x118] sm:$0xff]
          %v3530 = vld [vmem:[#allocation9 + $0x120] sm:$0xff]
          %v3531 = vld [vmem:[#allocation9 + $0x128] sm:$0xff]
          %v3532 = vld [vmem:[#allocation9 + $0x130] sm:$0xff]
          %v3533 = vld [vmem:[#allocation9 + $0x138] sm:$0xff]
          %v3534 = vunpack.c.l.bf16 %v3494
          %v3535 = vunpack.c.h.bf16 %v3494
          %v3536 = vunpack.c.l.bf16 %v3495
          %v3537 = vunpack.c.h.bf16 %v3495
          %v3538 = vunpack.c.l.bf16 %v3496
          %v3539 = vunpack.c.h.bf16 %v3496
          %v3540 = vunpack.c.l.bf16 %v3497
          %v3541 = vunpack.c.h.bf16 %v3497
          %v3542 = vunpack.c.l.bf16 %v3498
          %v3543 = vunpack.c.h.bf16 %v3498
          %v3544 = vunpack.c.l.bf16 %v3499
          %v3545 = vunpack.c.h.bf16 %v3499
          %v3546 = vunpack.c.l.bf16 %v3500
          %v3547 = vunpack.c.h.bf16 %v3500
          %v3548 = vunpack.c.l.bf16 %v3501
          %v3549 = vunpack.c.h.bf16 %v3501
          %v3550 = vunpack.c.l.bf16 %v3502
          %v3551 = vunpack.c.h.bf16 %v3502
          %v3552 = vunpack.c.l.bf16 %v3503
          %v3553 = vunpack.c.h.bf16 %v3503
          %v3554 = vunpack.c.l.bf16 %v3504
          %v3555 = vunpack.c.h.bf16 %v3504
          %v3556 = vunpack.c.l.bf16 %v3505
          %v3557 = vunpack.c.h.bf16 %v3505
          %v3558 = vunpack.c.l.bf16 %v3506
          %v3559 = vunpack.c.h.bf16 %v3506
          %v3560 = vunpack.c.l.bf16 %v3507
          %v3561 = vunpack.c.h.bf16 %v3507
          %v3562 = vunpack.c.l.bf16 %v3508
          %v3563 = vunpack.c.h.bf16 %v3508
          %v3564 = vunpack.c.l.bf16 %v3509
          %v3565 = vunpack.c.h.bf16 %v3509
          %v3566 = vunpack.c.l.bf16 %v3510
          %v3567 = vunpack.c.h.bf16 %v3510
          %v3568 = vunpack.c.l.bf16 %v3511
          %v3569 = vunpack.c.h.bf16 %v3511
          %v3570 = vunpack.c.l.bf16 %v3512
          %v3571 = vunpack.c.h.bf16 %v3512
          %v3572 = vunpack.c.l.bf16 %v3513
          %v3573 = vunpack.c.h.bf16 %v3513
          %v3574 = vunpack.c.l.bf16 %v3514
          %v3575 = vunpack.c.h.bf16 %v3514
          %v3576 = vunpack.c.l.bf16 %v3515
          %v3577 = vunpack.c.h.bf16 %v3515
          %v3578 = vunpack.c.l.bf16 %v3516
          %v3579 = vunpack.c.h.bf16 %v3516
          %v3580 = vunpack.c.l.bf16 %v3517
          %v3581 = vunpack.c.h.bf16 %v3517
          %v3582 = vunpack.c.l.bf16 %v3518
          %v3583 = vunpack.c.h.bf16 %v3518
          %v3584 = vunpack.c.l.bf16 %v3519
          %v3585 = vunpack.c.h.bf16 %v3519
          %v3586 = vunpack.c.l.bf16 %v3520
          %v3587 = vunpack.c.h.bf16 %v3520
          %v3588 = vunpack.c.l.bf16 %v3521
          %v3589 = vunpack.c.h.bf16 %v3521
          %v3590 = vunpack.c.l.bf16 %v3522
          %v3591 = vunpack.c.h.bf16 %v3522
          %v3592 = vunpack.c.l.bf16 %v3523
          %v3593 = vunpack.c.h.bf16 %v3523
          %v3594 = vunpack.c.l.bf16 %v3524
          %v3595 = vunpack.c.h.bf16 %v3524
          %v3596 = vunpack.c.l.bf16 %v3525
          %v3597 = vunpack.c.h.bf16 %v3525
          %v3598 = vunpack.c.l.bf16 %v3526
          %v3599 = vunpack.c.h.bf16 %v3526
          %v3600 = vunpack.c.l.bf16 %v3527
          %v3601 = vunpack.c.h.bf16 %v3527
          %v3602 = vunpack.c.l.bf16 %v3528
          %v3603 = vunpack.c.h.bf16 %v3528
          %v3604 = vunpack.c.l.bf16 %v3529
          %v3605 = vunpack.c.h.bf16 %v3529
          %v3606 = vunpack.c.l.bf16 %v3530
          %v3607 = vunpack.c.h.bf16 %v3530
          %v3608 = vunpack.c.l.bf16 %v3531
          %v3609 = vunpack.c.h.bf16 %v3531
          %v3610 = vunpack.c.l.bf16 %v3532
          %v3611 = vunpack.c.h.bf16 %v3532
          %v3612 = vunpack.c.l.bf16 %v3533
          %v3613 = vunpack.c.h.bf16 %v3533
          %v3614 = vadd.f32 %v3414, %v3534
          %v3615 = vadd.f32 %v3415, %v3535
          %v3616 = vadd.f32 %v3416, %v3536
          %v3617 = vadd.f32 %v3417, %v3537
          %v3618 = vadd.f32 %v3418, %v3538
          %v3619 = vadd.f32 %v3419, %v3539
          %v3620 = vadd.f32 %v3420, %v3540
          %v3621 = vadd.f32 %v3421, %v3541
          %v3622 = vadd.f32 %v3422, %v3542
          %v3623 = vadd.f32 %v3423, %v3543
          %v3624 = vadd.f32 %v3424, %v3544
          %v3625 = vadd.f32 %v3425, %v3545
          %v3626 = vadd.f32 %v3426, %v3546
          %v3627 = vadd.f32 %v3427, %v3547
          %v3628 = vadd.f32 %v3428, %v3548
          %v3629 = vadd.f32 %v3429, %v3549
          %v3630 = vadd.f32 %v3430, %v3550
          %v3631 = vadd.f32 %v3431, %v3551
          %v3632 = vadd.f32 %v3432, %v3552
          %v3633 = vadd.f32 %v3433, %v3553
          %v3634 = vadd.f32 %v3434, %v3554
          %v3635 = vadd.f32 %v3435, %v3555
          %v3636 = vadd.f32 %v3436, %v3556
          %v3637 = vadd.f32 %v3437, %v3557
          %v3638 = vadd.f32 %v3438, %v3558
          %v3639 = vadd.f32 %v3439, %v3559
          %v3640 = vadd.f32 %v3440, %v3560
          %v3641 = vadd.f32 %v3441, %v3561
          %v3642 = vadd.f32 %v3442, %v3562
          %v3643 = vadd.f32 %v3443, %v3563
          %v3644 = vadd.f32 %v3444, %v3564
          %v3645 = vadd.f32 %v3445, %v3565
          %v3646 = vadd.f32 %v3446, %v3566
          %v3647 = vadd.f32 %v3447, %v3567
          %v3648 = vadd.f32 %v3448, %v3568
          %v3649 = vadd.f32 %v3449, %v3569
          %v3650 = vadd.f32 %v3450, %v3570
          %v3651 = vadd.f32 %v3451, %v3571
          %v3652 = vadd.f32 %v3452, %v3572
          %v3653 = vadd.f32 %v3453, %v3573
          %v3654 = vadd.f32 %v3454, %v3574
          %v3655 = vadd.f32 %v3455, %v3575
          %v3656 = vadd.f32 %v3456, %v3576
          %v3657 = vadd.f32 %v3457, %v3577
          %v3658 = vadd.f32 %v3458, %v3578
          %v3659 = vadd.f32 %v3459, %v3579
          %v3660 = vadd.f32 %v3460, %v3580
          %v3661 = vadd.f32 %v3461, %v3581
          %v3662 = vadd.f32 %v3462, %v3582
          %v3663 = vadd.f32 %v3463, %v3583
          %v3664 = vadd.f32 %v3464, %v3584
          %v3665 = vadd.f32 %v3465, %v3585
          %v3666 = vadd.f32 %v3466, %v3586
          %v3667 = vadd.f32 %v3467, %v3587
          %v3668 = vadd.f32 %v3468, %v3588
          %v3669 = vadd.f32 %v3469, %v3589
          %v3670 = vadd.f32 %v3470, %v3590
          %v3671 = vadd.f32 %v3471, %v3591
          %v3672 = vadd.f32 %v3472, %v3592
          %v3673 = vadd.f32 %v3473, %v3593
          %v3674 = vadd.f32 %v3474, %v3594
          %v3675 = vadd.f32 %v3475, %v3595
          %v3676 = vadd.f32 %v3476, %v3596
          %v3677 = vadd.f32 %v3477, %v3597
          %v3678 = vadd.f32 %v3478, %v3598
          %v3679 = vadd.f32 %v3479, %v3599
          %v3680 = vadd.f32 %v3480, %v3600
          %v3681 = vadd.f32 %v3481, %v3601
          %v3682 = vadd.f32 %v3482, %v3602
          %v3683 = vadd.f32 %v3483, %v3603
          %v3684 = vadd.f32 %v3484, %v3604
          %v3685 = vadd.f32 %v3485, %v3605
          %v3686 = vadd.f32 %v3486, %v3606
          %v3687 = vadd.f32 %v3487, %v3607
          %v3688 = vadd.f32 %v3488, %v3608
          %v3689 = vadd.f32 %v3489, %v3609
          %v3690 = vadd.f32 %v3490, %v3610
          %v3691 = vadd.f32 %v3491, %v3611
          %v3692 = vadd.f32 %v3492, %v3612
          %v3693 = vadd.f32 %v3493, %v3613
          %v3694 = vmax.f32 %v3614, 0.0
          %v3695 = vmax.f32 %v3615, 0.0
          %v3696 = vmax.f32 %v3616, 0.0
          %v3697 = vmax.f32 %v3617, 0.0
          %v3698 = vmax.f32 %v3618, 0.0
          %v3699 = vmax.f32 %v3619, 0.0
          %v3700 = vmax.f32 %v3620, 0.0
          %v3701 = vmax.f32 %v3621, 0.0
          %v3702 = vmax.f32 %v3622, 0.0
          %v3703 = vmax.f32 %v3623, 0.0
          %v3704 = vmax.f32 %v3624, 0.0
          %v3705 = vmax.f32 %v3625, 0.0
          %v3706 = vmax.f32 %v3626, 0.0
          %v3707 = vmax.f32 %v3627, 0.0
          %v3708 = vmax.f32 %v3628, 0.0
          %v3709 = vmax.f32 %v3629, 0.0
          %v3710 = vmax.f32 %v3630, 0.0
          %v3711 = vmax.f32 %v3631, 0.0
          %v3712 = vmax.f32 %v3632, 0.0
          %v3713 = vmax.f32 %v3633, 0.0
          %v3714 = vmax.f32 %v3634, 0.0
          %v3715 = vmax.f32 %v3635, 0.0
          %v3716 = vmax.f32 %v3636, 0.0
          %v3717 = vmax.f32 %v3637, 0.0
          %v3718 = vmax.f32 %v3638, 0.0
          %v3719 = vmax.f32 %v3639, 0.0
          %v3720 = vmax.f32 %v3640, 0.0
          %v3721 = vmax.f32 %v3641, 0.0
          %v3722 = vmax.f32 %v3642, 0.0
          %v3723 = vmax.f32 %v3643, 0.0
          %v3724 = vmax.f32 %v3644, 0.0
          %v3725 = vmax.f32 %v3645, 0.0
          %v3726 = vmax.f32 %v3646, 0.0
          %v3727 = vmax.f32 %v3647, 0.0
          %v3728 = vmax.f32 %v3648, 0.0
          %v3729 = vmax.f32 %v3649, 0.0
          %v3730 = vmax.f32 %v3650, 0.0
          %v3731 = vmax.f32 %v3651, 0.0
          %v3732 = vmax.f32 %v3652, 0.0
          %v3733 = vmax.f32 %v3653, 0.0
          %v3734 = vmax.f32 %v3654, 0.0
          %v3735 = vmax.f32 %v3655, 0.0
          %v3736 = vmax.f32 %v3656, 0.0
          %v3737 = vmax.f32 %v3657, 0.0
          %v3738 = vmax.f32 %v3658, 0.0
          %v3739 = vmax.f32 %v3659, 0.0
          %v3740 = vmax.f32 %v3660, 0.0
          %v3741 = vmax.f32 %v3661, 0.0
          %v3742 = vmax.f32 %v3662, 0.0
          %v3743 = vmax.f32 %v3663, 0.0
          %v3744 = vmax.f32 %v3664, 0.0
          %v3745 = vmax.f32 %v3665, 0.0
          %v3746 = vmax.f32 %v3666, 0.0
          %v3747 = vmax.f32 %v3667, 0.0
          %v3748 = vmax.f32 %v3668, 0.0
          %v3749 = vmax.f32 %v3669, 0.0
          %v3750 = vmax.f32 %v3670, 0.0
          %v3751 = vmax.f32 %v3671, 0.0
          %v3752 = vmax.f32 %v3672, 0.0
          %v3753 = vmax.f32 %v3673, 0.0
          %v3754 = vmax.f32 %v3674, 0.0
          %v3755 = vmax.f32 %v3675, 0.0
          %v3756 = vmax.f32 %v3676, 0.0
          %v3757 = vmax.f32 %v3677, 0.0
          %v3758 = vmax.f32 %v3678, 0.0
          %v3759 = vmax.f32 %v3679, 0.0
          %v3760 = vmax.f32 %v3680, 0.0
          %v3761 = vmax.f32 %v3681, 0.0
          %v3762 = vmax.f32 %v3682, 0.0
          %v3763 = vmax.f32 %v3683, 0.0
          %v3764 = vmax.f32 %v3684, 0.0
          %v3765 = vmax.f32 %v3685, 0.0
          %v3766 = vmax.f32 %v3686, 0.0
          %v3767 = vmax.f32 %v3687, 0.0
          %v3768 = vmax.f32 %v3688, 0.0
          %v3769 = vmax.f32 %v3689, 0.0
          %v3770 = vmax.f32 %v3690, 0.0
          %v3771 = vmax.f32 %v3691, 0.0
          %v3772 = vmax.f32 %v3692, 0.0
          %v3773 = vmax.f32 %v3693, 0.0
          %v3774 = vmul.f32 %v3694, %v2741
          %v3775 = vmul.f32 %v3695, %v2741
          %v3776 = vmul.f32 %v3696, %v2742
          %v3777 = vmul.f32 %v3697, %v2742
          %v3778 = vmul.f32 %v3698, %v2743
          %v3779 = vmul.f32 %v3699, %v2743
          %v3780 = vmul.f32 %v3700, %v2744
          %v3781 = vmul.f32 %v3701, %v2744
          %v3782 = vmul.f32 %v3702, %v2745
          %v3783 = vmul.f32 %v3703, %v2745
          %v3784 = vmul.f32 %v3704, %v2746
          %v3785 = vmul.f32 %v3705, %v2746
          %v3786 = vmul.f32 %v3706, %v2747
          %v3787 = vmul.f32 %v3707, %v2747
          %v3788 = vmul.f32 %v3708, %v2748
          %v3789 = vmul.f32 %v3709, %v2748
          %v3790 = vmul.f32 %v3710, %v2749
          %v3791 = vmul.f32 %v3711, %v2749
          %v3792 = vmul.f32 %v3712, %v2750
          %v3793 = vmul.f32 %v3713, %v2750
          %v3794 = vmul.f32 %v3714, %v2751
          %v3795 = vmul.f32 %v3715, %v2751
          %v3796 = vmul.f32 %v3716, %v2752
          %v3797 = vmul.f32 %v3717, %v2752
          %v3798 = vmul.f32 %v3718, %v2753
          %v3799 = vmul.f32 %v3719, %v2753
          %v3800 = vmul.f32 %v3720, %v2754
          %v3801 = vmul.f32 %v3721, %v2754
          %v3802 = vmul.f32 %v3722, %v2755
          %v3803 = vmul.f32 %v3723, %v2755
          %v3804 = vmul.f32 %v3724, %v2756
          %v3805 = vmul.f32 %v3725, %v2756
          %v3806 = vmul.f32 %v3726, %v2757
          %v3807 = vmul.f32 %v3727, %v2757
          %v3808 = vmul.f32 %v3728, %v2758
          %v3809 = vmul.f32 %v3729, %v2758
          %v3810 = vmul.f32 %v3730, %v2759
          %v3811 = vmul.f32 %v3731, %v2759
          %v3812 = vmul.f32 %v3732, %v2760
          %v3813 = vmul.f32 %v3733, %v2760
          %v3814 = vmul.f32 %v3734, %v2761
          %v3815 = vmul.f32 %v3735, %v2761
          %v3816 = vmul.f32 %v3736, %v2762
          %v3817 = vmul.f32 %v3737, %v2762
          %v3818 = vmul.f32 %v3738, %v2763
          %v3819 = vmul.f32 %v3739, %v2763
          %v3820 = vmul.f32 %v3740, %v2764
          %v3821 = vmul.f32 %v3741, %v2764
          %v3822 = vmul.f32 %v3742, %v2765
          %v3823 = vmul.f32 %v3743, %v2765
          %v3824 = vmul.f32 %v3744, %v2766
          %v3825 = vmul.f32 %v3745, %v2766
          %v3826 = vmul.f32 %v3746, %v2767
          %v3827 = vmul.f32 %v3747, %v2767
          %v3828 = vmul.f32 %v3748, %v2768
          %v3829 = vmul.f32 %v3749, %v2768
          %v3830 = vmul.f32 %v3750, %v2769
          %v3831 = vmul.f32 %v3751, %v2769
          %v3832 = vmul.f32 %v3752, %v2770
          %v3833 = vmul.f32 %v3753, %v2770
          %v3834 = vmul.f32 %v3754, %v2771
          %v3835 = vmul.f32 %v3755, %v2771
          %v3836 = vmul.f32 %v3756, %v2772
          %v3837 = vmul.f32 %v3757, %v2772
          %v3838 = vmul.f32 %v3758, %v2773
          %v3839 = vmul.f32 %v3759, %v2773
          %v3840 = vmul.f32 %v3760, %v2774
          %v3841 = vmul.f32 %v3761, %v2774
          %v3842 = vmul.f32 %v3762, %v2775
          %v3843 = vmul.f32 %v3763, %v2775
          %v3844 = vmul.f32 %v3764, %v2776
          %v3845 = vmul.f32 %v3765, %v2776
          %v3846 = vmul.f32 %v3766, %v2777
          %v3847 = vmul.f32 %v3767, %v2777
          %v3848 = vmul.f32 %v3768, %v2778
          %v3849 = vmul.f32 %v3769, %v2778
          %v3850 = vmul.f32 %v3770, %v2779
          %v3851 = vmul.f32 %v3771, %v2779
          %v3852 = vmul.f32 %v3772, %v2780
          %v3853 = vmul.f32 %v3773, %v2780
          %v3854 = vpack.c.bf16 %v3775, %v3774
          %v3855 = vpack.c.bf16 %v3777, %v3776
          %v3856 = vpack.c.bf16 %v3779, %v3778
          %v3857 = vpack.c.bf16 %v3781, %v3780
          %v3858 = vpack.c.bf16 %v3783, %v3782
          %v3859 = vpack.c.bf16 %v3785, %v3784
          %v3860 = vpack.c.bf16 %v3787, %v3786
          %v3861 = vpack.c.bf16 %v3789, %v3788
          %v3862 = vpack.c.bf16 %v3791, %v3790
          %v3863 = vpack.c.bf16 %v3793, %v3792
          %v3864 = vpack.c.bf16 %v3795, %v3794
          %v3865 = vpack.c.bf16 %v3797, %v3796
          %v3866 = vpack.c.bf16 %v3799, %v3798
          %v3867 = vpack.c.bf16 %v3801, %v3800
          %v3868 = vpack.c.bf16 %v3803, %v3802
          %v3869 = vpack.c.bf16 %v3805, %v3804
          %v3870 = vpack.c.bf16 %v3807, %v3806
          %v3871 = vpack.c.bf16 %v3809, %v3808
          %v3872 = vpack.c.bf16 %v3811, %v3810
          %v3873 = vpack.c.bf16 %v3813, %v3812
          %v3874 = vpack.c.bf16 %v3815, %v3814
          %v3875 = vpack.c.bf16 %v3817, %v3816
          %v3876 = vpack.c.bf16 %v3819, %v3818
          %v3877 = vpack.c.bf16 %v3821, %v3820
          %v3878 = vpack.c.bf16 %v3823, %v3822
          %v3879 = vpack.c.bf16 %v3825, %v3824
          %v3880 = vpack.c.bf16 %v3827, %v3826
          %v3881 = vpack.c.bf16 %v3829, %v3828
          %v3882 = vpack.c.bf16 %v3831, %v3830
          %v3883 = vpack.c.bf16 %v3833, %v3832
          %v3884 = vpack.c.bf16 %v3835, %v3834
          %v3885 = vpack.c.bf16 %v3837, %v3836
          %v3886 = vpack.c.bf16 %v3839, %v3838
          %v3887 = vpack.c.bf16 %v3841, %v3840
          %v3888 = vpack.c.bf16 %v3843, %v3842
          %v3889 = vpack.c.bf16 %v3845, %v3844
          %v3890 = vpack.c.bf16 %v3847, %v3846
          %v3891 = vpack.c.bf16 %v3849, %v3848
          %v3892 = vpack.c.bf16 %v3851, %v3850
          %v3893 = vpack.c.bf16 %v3853, %v3852
          %3894 = vst [vmem:[#allocation11] sm:$0xff] %v3854
          %3895 = vst [vmem:[#allocation11 + $0x8] sm:$0xff] %v3855
          %3896 = vst [vmem:[#allocation11 + $0x10] sm:$0xff] %v3856
          %3897 = vst [vmem:[#allocation11 + $0x18] sm:$0xff] %v3857
          %3898 = vst [vmem:[#allocation11 + $0x20] sm:$0xff] %v3858
          %3899 = vst [vmem:[#allocation11 + $0x28] sm:$0xff] %v3859
          %3900 = vst [vmem:[#allocation11 + $0x30] sm:$0xff] %v3860
          %3901 = vst [vmem:[#allocation11 + $0x38] sm:$0xff] %v3861
          %3902 = vst [vmem:[#allocation11 + $0x40] sm:$0xff] %v3862
          %3903 = vst [vmem:[#allocation11 + $0x48] sm:$0xff] %v3863
          %3904 = vst [vmem:[#allocation11 + $0x50] sm:$0xff] %v3864
          %3905 = vst [vmem:[#allocation11 + $0x58] sm:$0xff] %v3865
          %3906 = vst [vmem:[#allocation11 + $0x60] sm:$0xff] %v3866
          %3907 = vst [vmem:[#allocation11 + $0x68] sm:$0xff] %v3867
          %3908 = vst [vmem:[#allocation11 + $0x70] sm:$0xff] %v3868
          %3909 = vst [vmem:[#allocation11 + $0x78] sm:$0xff] %v3869
          %3910 = vst [vmem:[#allocation11 + $0x80] sm:$0xff] %v3870
          %3911 = vst [vmem:[#allocation11 + $0x88] sm:$0xff] %v3871
          %3912 = vst [vmem:[#allocation11 + $0x90] sm:$0xff] %v3872
          %3913 = vst [vmem:[#allocation11 + $0x98] sm:$0xff] %v3873
          %3914 = vst [vmem:[#allocation11 + $0xa0] sm:$0xff] %v3874
          %3915 = vst [vmem:[#allocation11 + $0xa8] sm:$0xff] %v3875
          %3916 = vst [vmem:[#allocation11 + $0xb0] sm:$0xff] %v3876
          %3917 = vst [vmem:[#allocation11 + $0xb8] sm:$0xff] %v3877
          %3918 = vst [vmem:[#allocation11 + $0xc0] sm:$0xff] %v3878
          %3919 = vst [vmem:[#allocation11 + $0xc8] sm:$0xff] %v3879
          %3920 = vst [vmem:[#allocation11 + $0xd0] sm:$0xff] %v3880
          %3921 = vst [vmem:[#allocation11 + $0xd8] sm:$0xff] %v3881
          %3922 = vst [vmem:[#allocation11 + $0xe0] sm:$0xff] %v3882
          %3923 = vst [vmem:[#allocation11 + $0xe8] sm:$0xff] %v3883
          %3924 = vst [vmem:[#allocation11 + $0xf0] sm:$0xff] %v3884
          %3925 = vst [vmem:[#allocation11 + $0xf8] sm:$0xff] %v3885
          %3926 = vst [vmem:[#allocation11 + $0x100] sm:$0xff] %v3886
          %3927 = vst [vmem:[#allocation11 + $0x108] sm:$0xff] %v3887
          %3928 = vst [vmem:[#allocation11 + $0x110] sm:$0xff] %v3888
          %3929 = vst [vmem:[#allocation11 + $0x118] sm:$0xff] %v3889
          %3930 = vst [vmem:[#allocation11 + $0x120] sm:$0xff] %v3890
          %3931 = vst [vmem:[#allocation11 + $0x128] sm:$0xff] %v3891
          %3932 = vst [vmem:[#allocation11 + $0x130] sm:$0xff] %v3892
          %3933 = vst [vmem:[#allocation11 + $0x138] sm:$0xff] %v3893
        $region68: #{tpu_custom_call.1} parent=39 // pred_fallthru
          _
        // Predicated region
        $region69: #{tpu_custom_call.1} parent=39 // pred_check
          %p3934 = pneg %p152
        $region70: #{tpu_custom_call.1} parent=39 // pred_check_branch
          %3936 = sbr.rel (%p3934) target = $region72
        $region71: #{tpu_custom_call.1} parent=39 // pred_region
          %3938 = vsyncadd [#allocation5], 0
          %s3939 = sshll.u32 [#allocation11], 4
          %s3940 = int_to_ptr.vmem [resolvable:$true] %s3939
          %s3941 = sshll.u32 %s5, 4
          %s3942 = int_to_ptr.hbm [resolvable:$true] %s3941
          %3947 = dma.vmem_to_hbm [thread:$0]  %s3940, 5120, %s3942, [#allocation5], 128, 128, 8
        $region72: #{tpu_custom_call.1} parent=39 // pred_fallthru
          _
        // Predicated region
        $region73: #{tpu_custom_call.1} parent=39 // pred_check
          %p3948 = pneg %p152
        $region74: #{tpu_custom_call.1} parent=39 // pred_check_branch
          %3950 = sbr.rel (%p3948) target = $region76
        $region75: #{tpu_custom_call.1} parent=39 // pred_region
          %3952 = dma.done [#allocation5], 5120
        $region76: #{tpu_custom_call.1} parent=39 // pred_fallthru
          _
      $region40: #{tpu_custom_call.1} parent=5 // pred_fallthru
        _
      %p3953 = scmp.le.s32.totalorder 2, %s19
      // Predicated region
      $region77: #{tpu_custom_call.1} parent=5 // pred_check
        %p3954 = pneg %p3953
      $region78: #{tpu_custom_call.1} parent=5 // pred_check_branch
        %3956 = sbr.rel (%p3954) target = $region80
      $region79: #{tpu_custom_call.1} parent=5 // pred_region
        %s3957 = ssub.s32 %s19, 2
      $region80: #{tpu_custom_call.1} parent=5 // pred_fallthru
        _
    $region6: #{tpu_custom_call.1} parent=1 // loop_footer
      %s23 = sadd.s32 1, %s19
    $region7: #{tpu_custom_call.1} parent=1 // loop_footer_branch
      %18 = sbr.rel target = $region3
    $region8: #{tpu_custom_call.1} parent=1 // loop_exit
      _
    %3958 = vsyncpa [#allocation4], 1
    %s3959 = scalar_lea.sflag [#allocation4], 1
    %3960 = vsyncpa %s3959, 1
    %3961 = vsyncpa [#allocation7], 1
    %s3962 = scalar_lea.sflag [#allocation7], 1
    %3963 = vsyncpa %s3962, 1
    %3964 = vsyncpa [#allocation10], 1
    %3965 = vsyncpa [#allocation5], 1
    %s3966 = scalar_lea.sflag [#allocation5], 1
    %3967 = vsyncpa %s3966, 1

</llo_original>
